<compile_context>
chip_gen: v6e
topology: v6e:2x2x1
jax: 0.10.0
libtpu: 0.0.40
codegen_flags: <defaults>
</compile_context>

<pallas_src>
import jax
import jax.numpy as jnp
from jax.experimental import pallas as pl
from jax.experimental.pallas import tpu as pltpu


def mrconv_kernel(x_ref, idx_ref, w_ref, b_ref, o_ref):
    # x_ref  : (B, N, C_in)      bf16 node features (all batches resident)
    # idx_ref: (K, 2, B, N)      int32; [k, 0] = neighbor idx, [k, 1] = center idx
    # w_ref  : (2*C_in, C_out)   bf16, de-interleaved [w_x ; w_d]
    # b_ref  : (1, C_out)        f32 bias
    # o_ref  : (B, N, C_out)     f32 output
    x = x_ref[...]                                    # (B, N, C_in) bf16
    B, N, C_in = x.shape
    K = idx_ref.shape[0]

    # Lane-id iota, hoisted out of the K loop (JAX does not CSE broadcasts).
    node_ids = jax.lax.broadcasted_iota(jnp.int32, (B, N, N), 2)

    # Running max over neighbor slots.  Per-slot selector is (B, N, N), so the
    # live gather working set is O(N^2), not O(K*N^2).
    # (Indices are assumed in [0, N); out-of-range rows would select 0.)
    acc = jnp.full((B, N, C_in), -jnp.inf, dtype=jnp.float32)
    for kk in range(K):
        idx_j = idx_ref[kk, 0][:, :, None]            # (B, N, 1)
        idx_i = idx_ref[kk, 1][:, :, None]            # (B, N, 1)
        # Signed one-hot selector in bf16 ({-1,0,+1} exact); compare/convert in
        # f32 on the VPU (v5e has no bf16 VPU), pack once to bf16 for the MXU.
        sel = ((idx_j == node_ids).astype(jnp.float32)
               - (idx_i == node_ids).astype(jnp.float32)).astype(jnp.bfloat16)
        # "gather + subtract" as one bf16 MXU matmul with f32 accumulation:
        #   diff[b, m, :] = x[b, idx_j[b,m], :] - x[b, idx_i[b,m], :]
        diff = jnp.einsum('bmn,bnc->bmc', sel, x,
                          preferred_element_type=jnp.float32)   # (B, N, C_in) f32
        acc = jnp.maximum(acc, diff)                  # VPU running max in f32

    # Fused 1x1 conv: lane-concat [x | max-relative], one matmul with
    # contraction depth 2*C_in and M = B*N rows, then f32 bias + ReLU.
    x2d = x.reshape(B * N, C_in)                      # bf16
    d2d = acc.astype(jnp.bfloat16).reshape(B * N, C_in)
    z = jnp.concatenate([x2d, d2d], axis=-1)          # (B*N, 2*C_in) bf16
    out = jnp.dot(z, w_ref[...], preferred_element_type=jnp.float32)
    out = jnp.maximum(out + b_ref[...], 0.0)          # (B*N, C_out) f32
    o_ref[...] = out.reshape(B, N, -1).astype(o_ref.dtype)


@jax.jit
def mrconv2d_forward(x_nlc, edge_index, w, b):
    """MRConv2d forward, channels-last.

    x_nlc:      (B, N, C_in) float32
    edge_index: (2, B, N, K) int32   ([0]=neighbor, [1]=center)
    w:          (2*C_in, C_out) float32, rows in PyTorch's interleaved
                [x_0, d_0, x_1, d_1, ...] input-channel order
    b:          (1, C_out) float32
    returns:    (B, N, C_out) float32
    """
    B, N, C_in = x_nlc.shape
    K = edge_index.shape[-1]
    C_out = w.shape[-1]

    # bf16 MXU operands (halves DMA bytes and MXU passes on v5e/v6e/v7x).
    x_bf = x_nlc.astype(jnp.bfloat16)
    # De-interleave [x_0, d_0, x_1, d_1, ...] rows into stacked [w_x ; w_d].
    w_bf = jnp.concatenate([w[0::2], w[1::2]], axis=0).astype(jnp.bfloat16)
    # Pack both index planes into one array: (K, 2, B, N).
    idx = jnp.transpose(edge_index, (3, 0, 1, 2)).astype(jnp.int32)

    return pl.pallas_call(
        mrconv_kernel,
        out_shape=jax.ShapeDtypeStruct((B, N, C_out), jnp.float32),
        grid_spec=pltpu.PrefetchScalarGridSpec(
            num_scalar_prefetch=0,
            grid=(1,),    # batch folded; K handled by the in-kernel loop
            in_specs=[
                pl.BlockSpec((B, N, C_in), lambda i: (0, 0, 0)),
                pl.BlockSpec((K, 2, B, N), lambda i: (0, 0, 0, 0)),
                pl.BlockSpec((2 * C_in, C_out), lambda i: (0, 0)),
                pl.BlockSpec((1, C_out), lambda i: (0, 0)),
            ],
            out_specs=pl.BlockSpec((B, N, C_out), lambda i: (0, 0, 0)),
        ),
        compiler_params=pltpu.CompilerParams(
            dimension_semantics=("arbitrary",)),
    )(x_bf, idx, w_bf, b)


def reference_forward(x_nlc, edge_index, w, b):
    """Pure-JAX reference matching PyTorch MRConv2d (channels-last).

    Emulates the single bf16 rounding the kernel applies to its MXU operands
    (x, d, w) so the check is tight; the math is the module's forward.
    """
    xq = x_nlc.astype(jnp.bfloat16).astype(jnp.float32)
    wq = w.astype(jnp.bfloat16).astype(jnp.float32)
    gather = jax.vmap(lambda xb, ib: xb[ib])          # (N,C)[(N,K)] -> (N,K,C)
    x_j = gather(xq, edge_index[0])
    x_i = gather(xq, edge_index[1])
    d = jnp.max(x_j - x_i, axis=2)                    # (B, N, C)
    d = d.astype(jnp.bfloat16).astype(jnp.float32)
    B, N, C = x_nlc.shape
    # Interleave channels exactly like cat(..., dim=2).reshape(B, 2C, N, 1).
    z = jnp.stack([xq, d], axis=-1).reshape(B, N, 2 * C)
    out = jnp.einsum('bnc,cd->bnd', z, wq,
                     precision=jax.lax.Precision.HIGHEST) + b
    return jnp.maximum(out, 0.0)


if __name__ == "__main__":
    # Small shapes consistent with the module's forward:
    #   PyTorch x: (B, C_in, N, 1), edge_index: (2, B, N, K)
    B, C_in, C_out, N, K = 2, 16, 32, 64, 8

    key = jax.random.PRNGKey(0)
    kx, ki, kw, kb = jax.random.split(key, 4)

    x_nchw = jax.random.normal(kx, (B, C_in, N, 1), dtype=jnp.float32)
    edge_index = jax.random.randint(ki, (2, B, N, K), 0, N, dtype=jnp.int32)
    # Conv2d(2*C_in, C_out, 1) weight as (2*C_in, C_out); row order follows
    # PyTorch's interleaved [x_0, d_0, x_1, d_1, ...] input channels.
    w = jax.random.normal(kw, (2 * C_in, C_out), dtype=jnp.float32) * 0.1
    b = jax.random.normal(kb, (1, C_out), dtype=jnp.float32) * 0.1

    # layout: PyTorch NCHW (B, C, N, 1) -> kernel layout (B, N, C).
    x_nlc = jnp.transpose(x_nchw[..., 0], (0, 2, 1))

    out = mrconv2d_forward(x_nlc, edge_index, w, b)
    out = jax.block_until_ready(out)                  # (B, N, C_out)

    ref = reference_forward(x_nlc, edge_index, w, b)
    assert out.shape == (B, N, C_out)
    assert jnp.allclose(out, ref, atol=1e-3, rtol=1e-3), "mismatch vs reference"

    # PyTorch-convention output: out.transpose(0, 2, 1)[..., None]  # (B,C_out,N,1)
    print("KERNEL_OK")
</pallas_src>

<mosaic_0001>
module attributes {stable_mosaic.version = 11 : i64} {
  func.func @mrconv_kernel(%arg0: i32, %arg1: memref<2x64x16xbf16, #tpu.memory_space<vmem>>, %arg2: memref<8x2x2x64xi32, #tpu.memory_space<vmem>>, %arg3: memref<32x32xbf16, #tpu.memory_space<vmem>>, %arg4: memref<1x32xf32, #tpu.memory_space<vmem>>, %arg5: memref<2x64x32xf32, #tpu.memory_space<vmem>>) attributes {dimension_semantics = [#tpu.dimension_semantics<arbitrary>], iteration_bounds = array<i64: 1>, scalar_prefetch = 0 : i64, scratch_operands = 0 : i64, tpu.core_type = #tpu.core_type<tc>, window_params = [{pipeline_mode = #tpu.pipeline_mode<synchronous>, transform_indices = @transform_0, window_bounds = array<i64: 2, 64, 16>}, {pipeline_mode = #tpu.pipeline_mode<synchronous>, transform_indices = @transform_1, window_bounds = array<i64: 8, 2, 2, 64>}, {pipeline_mode = #tpu.pipeline_mode<synchronous>, transform_indices = @transform_2, window_bounds = array<i64: 32, 32>}, {pipeline_mode = #tpu.pipeline_mode<synchronous>, transform_indices = @transform_3, window_bounds = array<i64: 1, 32>}, {pipeline_mode = #tpu.pipeline_mode<synchronous>, transform_indices = @transform_4, window_bounds = array<i64: 2, 64, 32>}]} {
    %c0 = arith.constant 0 : index
    %c0_0 = arith.constant 0 : index
    %c0_1 = arith.constant 0 : index
    %0 = vector.load %arg1[%c0, %c0_0, %c0_1] : memref<2x64x16xbf16, #tpu.memory_space<vmem>>, vector<2x64x16xbf16>
    %1 = tpu.iota {dimensions = array<i32: 2>} : vector<2x64x64xi32>
    %cst = arith.constant 0xFF800000 : f32
    %2 = vector.broadcast %cst : f32 to vector<2x64x16xf32>
    %c0_2 = arith.constant 0 : index
    %c0_3 = arith.constant 0 : index
    %c0_4 = arith.constant 0 : index
    %c0_5 = arith.constant 0 : index
    %3 = vector.load %arg2[%c0_2, %c0_3, %c0_4, %c0_5] : memref<8x2x2x64xi32, #tpu.memory_space<vmem>>, vector<1x1x2x64xi32>
    %4 = vector.shape_cast %3 : vector<1x1x2x64xi32> to vector<2x64xi32>
    %5 = vector.shape_cast %4 : vector<2x64xi32> to vector<2x64x1xi32>
    %c0_6 = arith.constant 0 : index
    %c1 = arith.constant 1 : index
    %c0_7 = arith.constant 0 : index
    %c0_8 = arith.constant 0 : index
    %6 = vector.load %arg2[%c0_6, %c1, %c0_7, %c0_8] : memref<8x2x2x64xi32, #tpu.memory_space<vmem>>, vector<1x1x2x64xi32>
    %7 = vector.shape_cast %6 : vector<1x1x2x64xi32> to vector<2x64xi32>
    %8 = vector.shape_cast %7 : vector<2x64xi32> to vector<2x64x1xi32>
    %9 = vector.broadcast %5 : vector<2x64x1xi32> to vector<2x64x64xi32>
    %10 = arith.cmpi eq, %9, %1 : vector<2x64x64xi32>
    %11 = arith.extui %10 : vector<2x64x64xi1> to vector<2x64x64xi32>
    %12 = arith.sitofp %11 : vector<2x64x64xi32> to vector<2x64x64xf32>
    %13 = vector.broadcast %8 : vector<2x64x1xi32> to vector<2x64x64xi32>
    %14 = arith.cmpi eq, %13, %1 : vector<2x64x64xi32>
    %15 = arith.extui %14 : vector<2x64x64xi1> to vector<2x64x64xi32>
    %16 = arith.sitofp %15 : vector<2x64x64xi32> to vector<2x64x64xf32>
    %17 = arith.subf %12, %16 : vector<2x64x64xf32>
    %18 = arith.truncf %17 : vector<2x64x64xf32> to vector<2x64x64xbf16>
    "tpu.trace_start"() <{level = 10 : i32, message = "bmn,bnc->bmc"}> : () -> ()
    %cst_9 = arith.constant dense<0.000000e+00> : vector<2x64x16xf32>
    %19 = tpu.matmul %18, %0, %cst_9 {dimension_numbers = #tpu.dot_dimension_numbers<[2], [1], [1], [2], [0, 0, 0, 1, 1, 2], [0], [0]>} : vector<2x64x64xbf16>, vector<2x64x16xbf16>, vector<2x64x16xf32> -> vector<2x64x16xf32>
    "tpu.trace_stop"() : () -> ()
    %20 = arith.maximumf %2, %19 : vector<2x64x16xf32>
    %c1_10 = arith.constant 1 : index
    %c0_11 = arith.constant 0 : index
    %c0_12 = arith.constant 0 : index
    %c0_13 = arith.constant 0 : index
    %21 = vector.load %arg2[%c1_10, %c0_11, %c0_12, %c0_13] : memref<8x2x2x64xi32, #tpu.memory_space<vmem>>, vector<1x1x2x64xi32>
    %22 = vector.shape_cast %21 : vector<1x1x2x64xi32> to vector<2x64xi32>
    %23 = vector.shape_cast %22 : vector<2x64xi32> to vector<2x64x1xi32>
    %c1_14 = arith.constant 1 : index
    %c1_15 = arith.constant 1 : index
    %c0_16 = arith.constant 0 : index
    %c0_17 = arith.constant 0 : index
    %24 = vector.load %arg2[%c1_14, %c1_15, %c0_16, %c0_17] : memref<8x2x2x64xi32, #tpu.memory_space<vmem>>, vector<1x1x2x64xi32>
    %25 = vector.shape_cast %24 : vector<1x1x2x64xi32> to vector<2x64xi32>
    %26 = vector.shape_cast %25 : vector<2x64xi32> to vector<2x64x1xi32>
    %27 = vector.broadcast %23 : vector<2x64x1xi32> to vector<2x64x64xi32>
    %28 = arith.cmpi eq, %27, %1 : vector<2x64x64xi32>
    %29 = arith.extui %28 : vector<2x64x64xi1> to vector<2x64x64xi32>
    %30 = arith.sitofp %29 : vector<2x64x64xi32> to vector<2x64x64xf32>
    %31 = vector.broadcast %26 : vector<2x64x1xi32> to vector<2x64x64xi32>
    %32 = arith.cmpi eq, %31, %1 : vector<2x64x64xi32>
    %33 = arith.extui %32 : vector<2x64x64xi1> to vector<2x64x64xi32>
    %34 = arith.sitofp %33 : vector<2x64x64xi32> to vector<2x64x64xf32>
    %35 = arith.subf %30, %34 : vector<2x64x64xf32>
    %36 = arith.truncf %35 : vector<2x64x64xf32> to vector<2x64x64xbf16>
    "tpu.trace_start"() <{level = 10 : i32, message = "bmn,bnc->bmc"}> : () -> ()
    %cst_18 = arith.constant dense<0.000000e+00> : vector<2x64x16xf32>
    %37 = tpu.matmul %36, %0, %cst_18 {dimension_numbers = #tpu.dot_dimension_numbers<[2], [1], [1], [2], [0, 0, 0, 1, 1, 2], [0], [0]>} : vector<2x64x64xbf16>, vector<2x64x16xbf16>, vector<2x64x16xf32> -> vector<2x64x16xf32>
    "tpu.trace_stop"() : () -> ()
    %38 = arith.maximumf %20, %37 : vector<2x64x16xf32>
    %c2 = arith.constant 2 : index
    %c0_19 = arith.constant 0 : index
    %c0_20 = arith.constant 0 : index
    %c0_21 = arith.constant 0 : index
    %39 = vector.load %arg2[%c2, %c0_19, %c0_20, %c0_21] : memref<8x2x2x64xi32, #tpu.memory_space<vmem>>, vector<1x1x2x64xi32>
    %40 = vector.shape_cast %39 : vector<1x1x2x64xi32> to vector<2x64xi32>
    %41 = vector.shape_cast %40 : vector<2x64xi32> to vector<2x64x1xi32>
    %c2_22 = arith.constant 2 : index
    %c1_23 = arith.constant 1 : index
    %c0_24 = arith.constant 0 : index
    %c0_25 = arith.constant 0 : index
    %42 = vector.load %arg2[%c2_22, %c1_23, %c0_24, %c0_25] : memref<8x2x2x64xi32, #tpu.memory_space<vmem>>, vector<1x1x2x64xi32>
    %43 = vector.shape_cast %42 : vector<1x1x2x64xi32> to vector<2x64xi32>
    %44 = vector.shape_cast %43 : vector<2x64xi32> to vector<2x64x1xi32>
    %45 = vector.broadcast %41 : vector<2x64x1xi32> to vector<2x64x64xi32>
    %46 = arith.cmpi eq, %45, %1 : vector<2x64x64xi32>
    %47 = arith.extui %46 : vector<2x64x64xi1> to vector<2x64x64xi32>
    %48 = arith.sitofp %47 : vector<2x64x64xi32> to vector<2x64x64xf32>
    %49 = vector.broadcast %44 : vector<2x64x1xi32> to vector<2x64x64xi32>
    %50 = arith.cmpi eq, %49, %1 : vector<2x64x64xi32>
    %51 = arith.extui %50 : vector<2x64x64xi1> to vector<2x64x64xi32>
    %52 = arith.sitofp %51 : vector<2x64x64xi32> to vector<2x64x64xf32>
    %53 = arith.subf %48, %52 : vector<2x64x64xf32>
    %54 = arith.truncf %53 : vector<2x64x64xf32> to vector<2x64x64xbf16>
    "tpu.trace_start"() <{level = 10 : i32, message = "bmn,bnc->bmc"}> : () -> ()
    %cst_26 = arith.constant dense<0.000000e+00> : vector<2x64x16xf32>
    %55 = tpu.matmul %54, %0, %cst_26 {dimension_numbers = #tpu.dot_dimension_numbers<[2], [1], [1], [2], [0, 0, 0, 1, 1, 2], [0], [0]>} : vector<2x64x64xbf16>, vector<2x64x16xbf16>, vector<2x64x16xf32> -> vector<2x64x16xf32>
    "tpu.trace_stop"() : () -> ()
    %56 = arith.maximumf %38, %55 : vector<2x64x16xf32>
    %c3 = arith.constant 3 : index
    %c0_27 = arith.constant 0 : index
    %c0_28 = arith.constant 0 : index
    %c0_29 = arith.constant 0 : index
    %57 = vector.load %arg2[%c3, %c0_27, %c0_28, %c0_29] : memref<8x2x2x64xi32, #tpu.memory_space<vmem>>, vector<1x1x2x64xi32>
    %58 = vector.shape_cast %57 : vector<1x1x2x64xi32> to vector<2x64xi32>
    %59 = vector.shape_cast %58 : vector<2x64xi32> to vector<2x64x1xi32>
    %c3_30 = arith.constant 3 : index
    %c1_31 = arith.constant 1 : index
    %c0_32 = arith.constant 0 : index
    %c0_33 = arith.constant 0 : index
    %60 = vector.load %arg2[%c3_30, %c1_31, %c0_32, %c0_33] : memref<8x2x2x64xi32, #tpu.memory_space<vmem>>, vector<1x1x2x64xi32>
    %61 = vector.shape_cast %60 : vector<1x1x2x64xi32> to vector<2x64xi32>
    %62 = vector.shape_cast %61 : vector<2x64xi32> to vector<2x64x1xi32>
    %63 = vector.broadcast %59 : vector<2x64x1xi32> to vector<2x64x64xi32>
    %64 = arith.cmpi eq, %63, %1 : vector<2x64x64xi32>
    %65 = arith.extui %64 : vector<2x64x64xi1> to vector<2x64x64xi32>
    %66 = arith.sitofp %65 : vector<2x64x64xi32> to vector<2x64x64xf32>
    %67 = vector.broadcast %62 : vector<2x64x1xi32> to vector<2x64x64xi32>
    %68 = arith.cmpi eq, %67, %1 : vector<2x64x64xi32>
    %69 = arith.extui %68 : vector<2x64x64xi1> to vector<2x64x64xi32>
    %70 = arith.sitofp %69 : vector<2x64x64xi32> to vector<2x64x64xf32>
    %71 = arith.subf %66, %70 : vector<2x64x64xf32>
    %72 = arith.truncf %71 : vector<2x64x64xf32> to vector<2x64x64xbf16>
    "tpu.trace_start"() <{level = 10 : i32, message = "bmn,bnc->bmc"}> : () -> ()
    %cst_34 = arith.constant dense<0.000000e+00> : vector<2x64x16xf32>
    %73 = tpu.matmul %72, %0, %cst_34 {dimension_numbers = #tpu.dot_dimension_numbers<[2], [1], [1], [2], [0, 0, 0, 1, 1, 2], [0], [0]>} : vector<2x64x64xbf16>, vector<2x64x16xbf16>, vector<2x64x16xf32> -> vector<2x64x16xf32>
    "tpu.trace_stop"() : () -> ()
    %74 = arith.maximumf %56, %73 : vector<2x64x16xf32>
    %c4 = arith.constant 4 : index
    %c0_35 = arith.constant 0 : index
    %c0_36 = arith.constant 0 : index
    %c0_37 = arith.constant 0 : index
    %75 = vector.load %arg2[%c4, %c0_35, %c0_36, %c0_37] : memref<8x2x2x64xi32, #tpu.memory_space<vmem>>, vector<1x1x2x64xi32>
    %76 = vector.shape_cast %75 : vector<1x1x2x64xi32> to vector<2x64xi32>
    %77 = vector.shape_cast %76 : vector<2x64xi32> to vector<2x64x1xi32>
    %c4_38 = arith.constant 4 : index
    %c1_39 = arith.constant 1 : index
    %c0_40 = arith.constant 0 : index
    %c0_41 = arith.constant 0 : index
    %78 = vector.load %arg2[%c4_38, %c1_39, %c0_40, %c0_41] : memref<8x2x2x64xi32, #tpu.memory_space<vmem>>, vector<1x1x2x64xi32>
    %79 = vector.shape_cast %78 : vector<1x1x2x64xi32> to vector<2x64xi32>
    %80 = vector.shape_cast %79 : vector<2x64xi32> to vector<2x64x1xi32>
    %81 = vector.broadcast %77 : vector<2x64x1xi32> to vector<2x64x64xi32>
    %82 = arith.cmpi eq, %81, %1 : vector<2x64x64xi32>
    %83 = arith.extui %82 : vector<2x64x64xi1> to vector<2x64x64xi32>
    %84 = arith.sitofp %83 : vector<2x64x64xi32> to vector<2x64x64xf32>
    %85 = vector.broadcast %80 : vector<2x64x1xi32> to vector<2x64x64xi32>
    %86 = arith.cmpi eq, %85, %1 : vector<2x64x64xi32>
    %87 = arith.extui %86 : vector<2x64x64xi1> to vector<2x64x64xi32>
    %88 = arith.sitofp %87 : vector<2x64x64xi32> to vector<2x64x64xf32>
    %89 = arith.subf %84, %88 : vector<2x64x64xf32>
    %90 = arith.truncf %89 : vector<2x64x64xf32> to vector<2x64x64xbf16>
    "tpu.trace_start"() <{level = 10 : i32, message = "bmn,bnc->bmc"}> : () -> ()
    %cst_42 = arith.constant dense<0.000000e+00> : vector<2x64x16xf32>
    %91 = tpu.matmul %90, %0, %cst_42 {dimension_numbers = #tpu.dot_dimension_numbers<[2], [1], [1], [2], [0, 0, 0, 1, 1, 2], [0], [0]>} : vector<2x64x64xbf16>, vector<2x64x16xbf16>, vector<2x64x16xf32> -> vector<2x64x16xf32>
    "tpu.trace_stop"() : () -> ()
    %92 = arith.maximumf %74, %91 : vector<2x64x16xf32>
    %c5 = arith.constant 5 : index
    %c0_43 = arith.constant 0 : index
    %c0_44 = arith.constant 0 : index
    %c0_45 = arith.constant 0 : index
    %93 = vector.load %arg2[%c5, %c0_43, %c0_44, %c0_45] : memref<8x2x2x64xi32, #tpu.memory_space<vmem>>, vector<1x1x2x64xi32>
    %94 = vector.shape_cast %93 : vector<1x1x2x64xi32> to vector<2x64xi32>
    %95 = vector.shape_cast %94 : vector<2x64xi32> to vector<2x64x1xi32>
    %c5_46 = arith.constant 5 : index
    %c1_47 = arith.constant 1 : index
    %c0_48 = arith.constant 0 : index
    %c0_49 = arith.constant 0 : index
    %96 = vector.load %arg2[%c5_46, %c1_47, %c0_48, %c0_49] : memref<8x2x2x64xi32, #tpu.memory_space<vmem>>, vector<1x1x2x64xi32>
    %97 = vector.shape_cast %96 : vector<1x1x2x64xi32> to vector<2x64xi32>
    %98 = vector.shape_cast %97 : vector<2x64xi32> to vector<2x64x1xi32>
    %99 = vector.broadcast %95 : vector<2x64x1xi32> to vector<2x64x64xi32>
    %100 = arith.cmpi eq, %99, %1 : vector<2x64x64xi32>
    %101 = arith.extui %100 : vector<2x64x64xi1> to vector<2x64x64xi32>
    %102 = arith.sitofp %101 : vector<2x64x64xi32> to vector<2x64x64xf32>
    %103 = vector.broadcast %98 : vector<2x64x1xi32> to vector<2x64x64xi32>
    %104 = arith.cmpi eq, %103, %1 : vector<2x64x64xi32>
    %105 = arith.extui %104 : vector<2x64x64xi1> to vector<2x64x64xi32>
    %106 = arith.sitofp %105 : vector<2x64x64xi32> to vector<2x64x64xf32>
    %107 = arith.subf %102, %106 : vector<2x64x64xf32>
    %108 = arith.truncf %107 : vector<2x64x64xf32> to vector<2x64x64xbf16>
    "tpu.trace_start"() <{level = 10 : i32, message = "bmn,bnc->bmc"}> : () -> ()
    %cst_50 = arith.constant dense<0.000000e+00> : vector<2x64x16xf32>
    %109 = tpu.matmul %108, %0, %cst_50 {dimension_numbers = #tpu.dot_dimension_numbers<[2], [1], [1], [2], [0, 0, 0, 1, 1, 2], [0], [0]>} : vector<2x64x64xbf16>, vector<2x64x16xbf16>, vector<2x64x16xf32> -> vector<2x64x16xf32>
    "tpu.trace_stop"() : () -> ()
    %110 = arith.maximumf %92, %109 : vector<2x64x16xf32>
    %c6 = arith.constant 6 : index
    %c0_51 = arith.constant 0 : index
    %c0_52 = arith.constant 0 : index
    %c0_53 = arith.constant 0 : index
    %111 = vector.load %arg2[%c6, %c0_51, %c0_52, %c0_53] : memref<8x2x2x64xi32, #tpu.memory_space<vmem>>, vector<1x1x2x64xi32>
    %112 = vector.shape_cast %111 : vector<1x1x2x64xi32> to vector<2x64xi32>
    %113 = vector.shape_cast %112 : vector<2x64xi32> to vector<2x64x1xi32>
    %c6_54 = arith.constant 6 : index
    %c1_55 = arith.constant 1 : index
    %c0_56 = arith.constant 0 : index
    %c0_57 = arith.constant 0 : index
    %114 = vector.load %arg2[%c6_54, %c1_55, %c0_56, %c0_57] : memref<8x2x2x64xi32, #tpu.memory_space<vmem>>, vector<1x1x2x64xi32>
    %115 = vector.shape_cast %114 : vector<1x1x2x64xi32> to vector<2x64xi32>
    %116 = vector.shape_cast %115 : vector<2x64xi32> to vector<2x64x1xi32>
    %117 = vector.broadcast %113 : vector<2x64x1xi32> to vector<2x64x64xi32>
    %118 = arith.cmpi eq, %117, %1 : vector<2x64x64xi32>
    %119 = arith.extui %118 : vector<2x64x64xi1> to vector<2x64x64xi32>
    %120 = arith.sitofp %119 : vector<2x64x64xi32> to vector<2x64x64xf32>
    %121 = vector.broadcast %116 : vector<2x64x1xi32> to vector<2x64x64xi32>
    %122 = arith.cmpi eq, %121, %1 : vector<2x64x64xi32>
    %123 = arith.extui %122 : vector<2x64x64xi1> to vector<2x64x64xi32>
    %124 = arith.sitofp %123 : vector<2x64x64xi32> to vector<2x64x64xf32>
    %125 = arith.subf %120, %124 : vector<2x64x64xf32>
    %126 = arith.truncf %125 : vector<2x64x64xf32> to vector<2x64x64xbf16>
    "tpu.trace_start"() <{level = 10 : i32, message = "bmn,bnc->bmc"}> : () -> ()
    %cst_58 = arith.constant dense<0.000000e+00> : vector<2x64x16xf32>
    %127 = tpu.matmul %126, %0, %cst_58 {dimension_numbers = #tpu.dot_dimension_numbers<[2], [1], [1], [2], [0, 0, 0, 1, 1, 2], [0], [0]>} : vector<2x64x64xbf16>, vector<2x64x16xbf16>, vector<2x64x16xf32> -> vector<2x64x16xf32>
    "tpu.trace_stop"() : () -> ()
    %128 = arith.maximumf %110, %127 : vector<2x64x16xf32>
    %c7 = arith.constant 7 : index
    %c0_59 = arith.constant 0 : index
    %c0_60 = arith.constant 0 : index
    %c0_61 = arith.constant 0 : index
    %129 = vector.load %arg2[%c7, %c0_59, %c0_60, %c0_61] : memref<8x2x2x64xi32, #tpu.memory_space<vmem>>, vector<1x1x2x64xi32>
    %130 = vector.shape_cast %129 : vector<1x1x2x64xi32> to vector<2x64xi32>
    %131 = vector.shape_cast %130 : vector<2x64xi32> to vector<2x64x1xi32>
    %c7_62 = arith.constant 7 : index
    %c1_63 = arith.constant 1 : index
    %c0_64 = arith.constant 0 : index
    %c0_65 = arith.constant 0 : index
    %132 = vector.load %arg2[%c7_62, %c1_63, %c0_64, %c0_65] : memref<8x2x2x64xi32, #tpu.memory_space<vmem>>, vector<1x1x2x64xi32>
    %133 = vector.shape_cast %132 : vector<1x1x2x64xi32> to vector<2x64xi32>
    %134 = vector.shape_cast %133 : vector<2x64xi32> to vector<2x64x1xi32>
    %135 = vector.broadcast %131 : vector<2x64x1xi32> to vector<2x64x64xi32>
    %136 = arith.cmpi eq, %135, %1 : vector<2x64x64xi32>
    %137 = arith.extui %136 : vector<2x64x64xi1> to vector<2x64x64xi32>
    %138 = arith.sitofp %137 : vector<2x64x64xi32> to vector<2x64x64xf32>
    %139 = vector.broadcast %134 : vector<2x64x1xi32> to vector<2x64x64xi32>
    %140 = arith.cmpi eq, %139, %1 : vector<2x64x64xi32>
    %141 = arith.extui %140 : vector<2x64x64xi1> to vector<2x64x64xi32>
    %142 = arith.sitofp %141 : vector<2x64x64xi32> to vector<2x64x64xf32>
    %143 = arith.subf %138, %142 : vector<2x64x64xf32>
    %144 = arith.truncf %143 : vector<2x64x64xf32> to vector<2x64x64xbf16>
    "tpu.trace_start"() <{level = 10 : i32, message = "bmn,bnc->bmc"}> : () -> ()
    %cst_66 = arith.constant dense<0.000000e+00> : vector<2x64x16xf32>
    %145 = tpu.matmul %144, %0, %cst_66 {dimension_numbers = #tpu.dot_dimension_numbers<[2], [1], [1], [2], [0, 0, 0, 1, 1, 2], [0], [0]>} : vector<2x64x64xbf16>, vector<2x64x16xbf16>, vector<2x64x16xf32> -> vector<2x64x16xf32>
    "tpu.trace_stop"() : () -> ()
    %146 = arith.maximumf %128, %145 : vector<2x64x16xf32>
    %147 = vector.shape_cast %0 : vector<2x64x16xbf16> to vector<128x16xbf16>
    %148 = arith.truncf %146 : vector<2x64x16xf32> to vector<2x64x16xbf16>
    %149 = vector.shape_cast %148 : vector<2x64x16xbf16> to vector<128x16xbf16>
    %150 = tpu.concatenate %147, %149 in 1 : vector<128x16xbf16>, vector<128x16xbf16> -> vector<128x32xbf16>
    %c0_67 = arith.constant 0 : index
    %c0_68 = arith.constant 0 : index
    %151 = vector.load %arg3[%c0_67, %c0_68] : memref<32x32xbf16, #tpu.memory_space<vmem>>, vector<32x32xbf16>
    %cst_69 = arith.constant dense<0.000000e+00> : vector<128x32xf32>
    %152 = tpu.matmul %150, %151, %cst_69 {dimension_numbers = #tpu.dot_dimension_numbers<[1], [0], [0], [1], [0, 0, 1, 1], [], []>} : vector<128x32xbf16>, vector<32x32xbf16>, vector<128x32xf32> -> vector<128x32xf32>
    %c0_70 = arith.constant 0 : index
    %c0_71 = arith.constant 0 : index
    %153 = vector.load %arg4[%c0_70, %c0_71] : memref<1x32xf32, #tpu.memory_space<vmem>>, vector<1x32xf32>
    %154 = vector.broadcast %153 : vector<1x32xf32> to vector<128x32xf32>
    %155 = arith.addf %152, %154 : vector<128x32xf32>
    %cst_72 = arith.constant 0.000000e+00 : f32
    %156 = vector.broadcast %cst_72 : f32 to vector<128x32xf32>
    %157 = arith.maximumf %155, %156 : vector<128x32xf32>
    %158 = vector.shape_cast %157 : vector<128x32xf32> to vector<2x64x32xf32>
    %c0_73 = arith.constant 0 : index
    %c0_74 = arith.constant 0 : index
    %c0_75 = arith.constant 0 : index
    %159 = vector.load %arg5[%c0_73, %c0_74, %c0_75] : memref<2x64x32xf32, #tpu.memory_space<vmem>>, vector<2x64x32xf32>
    tpu.vector_store %arg5[%c0_73, %c0_74, %c0_75], %158 {strides = array<i32>} : memref<2x64x32xf32, #tpu.memory_space<vmem>>, vector<2x64x32xf32>,
    return
  }
  func.func @transform_0(%arg0: i32) -> (i32, i32, i32) {
    %c0_i32 = arith.constant 0 : i32
    %c0_i32_0 = arith.constant 0 : i32
    %c0_i32_1 = arith.constant 0 : i32
    %c0_i32_2 = arith.constant 0 : i32
    return %c0_i32, %c0_i32_0, %c0_i32_1 : i32, i32, i32
  }
  func.func @transform_1(%arg0: i32) -> (i32, i32, i32, i32) {
    %c0_i32 = arith.constant 0 : i32
    %c0_i32_0 = arith.constant 0 : i32
    %c0_i32_1 = arith.constant 0 : i32
    %c0_i32_2 = arith.constant 0 : i32
    %c0_i32_3 = arith.constant 0 : i32
    return %c0_i32, %c0_i32_0, %c0_i32_1, %c0_i32_2 : i32, i32, i32, i32
  }
  func.func @transform_2(%arg0: i32) -> (i32, i32) {
    %c0_i32 = arith.constant 0 : i32
    %c0_i32_0 = arith.constant 0 : i32
    %c0_i32_1 = arith.constant 0 : i32
    return %c0_i32, %c0_i32_0 : i32, i32
  }
  func.func @transform_3(%arg0: i32) -> (i32, i32) {
    %c0_i32 = arith.constant 0 : i32
    %c0_i32_0 = arith.constant 0 : i32
    %c0_i32_1 = arith.constant 0 : i32
    return %c0_i32, %c0_i32_0 : i32, i32
  }
  func.func @transform_4(%arg0: i32) -> (i32, i32, i32) {
    %c0_i32 = arith.constant 0 : i32
    %c0_i32_0 = arith.constant 0 : i32
    %c0_i32_1 = arith.constant 0 : i32
    %c0_i32_2 = arith.constant 0 : i32
    return %c0_i32, %c0_i32_0, %c0_i32_1 : i32, i32, i32
  }
}

</mosaic_0001>

<llo_original>
// kernel: mrconv2d_forward.1
$region0: #{mrconv2d_forward.1}
  #allocation0 [shape = 'u32[]', space=smem, size = 0x4, offset = 0x4, fixed_abs, tag = 'smem constant byte address 0x4 - core index']
  #allocation1 [shape = 'u32[144,128]{1,0:T(1,128)}', space=vmem, size = 0x12000, scoped, tag = 'internal scratch']
  %s0 = inlined_call_operand.vmem [shape: bf16[2,64,16], index: 0, kind: input, shape index: {}]
  %s1 = inlined_call_operand.vmem [shape: s32[8,2,2,64], index: 1, kind: input, shape index: {}]
  %s2 = inlined_call_operand.vmem [shape: bf16[32,32], index: 2, kind: input, shape index: {}]
  %s3 = inlined_call_operand.vmem [shape: f32[1,32], index: 3, kind: input, shape index: {}]
  %s4 = inlined_call_operand.vmem [shape: f32[2,64,32], index: 4, kind: output, shape index: {}]
  %s5 = sld [smem:[#allocation0]]
  $region26: #{mrconv2d_forward.1} parent=0
    _
  %s7 = ssub.s32 1, %s5
  %s8 = scalar_select 0, %s7, %s5
  // Predicated region
  $region2: #{mrconv2d_forward.1} parent=0 // pred_check
    _
  $region3: #{mrconv2d_forward.1} parent=0 // pred_check_branch
    %10 = sbr.rel (0) target = $region5
  $region4: #{mrconv2d_forward.1} parent=0 // pred_region
    _
  $region5: #{mrconv2d_forward.1} parent=0 // pred_fallthru
    _
  // Predicated region
  $region6: #{mrconv2d_forward.1} parent=0 // pred_check
    _
  $region7: #{mrconv2d_forward.1} parent=0 // pred_check_branch
    %12 = sbr.rel (0) target = $region9
  $region8: #{mrconv2d_forward.1} parent=0 // pred_region
    _
  $region9: #{mrconv2d_forward.1} parent=0 // pred_fallthru
    _
  // Predicated region
  $region10: #{mrconv2d_forward.1} parent=0 // pred_check
    _
  $region11: #{mrconv2d_forward.1} parent=0 // pred_check_branch
    %14 = sbr.rel (0) target = $region13
  $region12: #{mrconv2d_forward.1} parent=0 // pred_region
    _
  $region13: #{mrconv2d_forward.1} parent=0 // pred_fallthru
    _
  // Predicated region
  $region14: #{mrconv2d_forward.1} parent=0 // pred_check
    _
  $region15: #{mrconv2d_forward.1} parent=0 // pred_check_branch
    %16 = sbr.rel (0) target = $region17
  $region16: #{mrconv2d_forward.1} parent=0 // pred_region
    _
  $region17: #{mrconv2d_forward.1} parent=0 // pred_fallthru
    _
  %v18 = vld [vmem:[%s0] sm:$0xf]
  %v19 = vld [vmem:[%s0 + $0x4] sm:$0xf]
  %v20 = vld [vmem:[%s0 + $0x8] sm:$0xf]
  %v21 = vld [vmem:[%s0 + $0xc] sm:$0xf]
  %v22 = vld [vmem:[%s0 + $0x10] sm:$0xf]
  %v23 = vld [vmem:[%s0 + $0x14] sm:$0xf]
  %v24 = vld [vmem:[%s0 + $0x18] sm:$0xf]
  %v25 = vld [vmem:[%s0 + $0x1c] sm:$0xf]
  %v26 = vld [vmem:[%s0 + $0x20] sm:$0xf]
  %v27 = vld [vmem:[%s0 + $0x24] sm:$0xf]
  %v28 = vld [vmem:[%s0 + $0x28] sm:$0xf]
  %v29 = vld [vmem:[%s0 + $0x2c] sm:$0xf]
  %v30 = vld [vmem:[%s0 + $0x30] sm:$0xf]
  %v31 = vld [vmem:[%s0 + $0x34] sm:$0xf]
  %v32 = vld [vmem:[%s0 + $0x38] sm:$0xf]
  %v33 = vld [vmem:[%s0 + $0x3c] sm:$0xf]
  %v34 = vlaneseq
  %v35 = vand.u32 %v34, 127
  %v36 = vld [vmem:[%s1] sm:$0x3]
  %v37 = vlaneseq
  %v38 = vshrl.u32 %v37, 7
  %v39 = vsub.s32 0, %v38
  %v40 = vrot.slane %v36, %v39
  %42 = vbcast.lane.b32.xlu0 %v40, 256
  %v43 = vpop.permute.xlu0 %42
  %s45 = sor.u32 256, 8
  %46 = vbcast.lane.b32.xlu0 %v40, %s45
  %v47 = vpop.permute.xlu0 %46
  %s49 = sor.u32 256, 16
  %50 = vbcast.lane.b32.xlu0 %v40, %s49
  %v51 = vpop.permute.xlu0 %50
  %s53 = sor.u32 256, 24
  %54 = vbcast.lane.b32.xlu0 %v40, %s53
  %v55 = vpop.permute.xlu0 %54
  %s57 = sor.u32 256, 32
  %58 = vbcast.lane.b32.xlu0 %v40, %s57
  %v59 = vpop.permute.xlu0 %58
  %s61 = sor.u32 256, 40
  %62 = vbcast.lane.b32.xlu0 %v40, %s61
  %v63 = vpop.permute.xlu0 %62
  %s65 = sor.u32 256, 48
  %66 = vbcast.lane.b32.xlu0 %v40, %s65
  %v67 = vpop.permute.xlu0 %66
  %s69 = sor.u32 256, 56
  %70 = vbcast.lane.b32.xlu0 %v40, %s69
  %v71 = vpop.permute.xlu0 %70
  %v72 = vlaneseq
  %v73 = vshrl.u32 %v72, 7
  %v74 = vsub.s32 1, %v73
  %v75 = vrot.slane %v36, %v74
  %77 = vbcast.lane.b32.xlu0 %v75, 256
  %v78 = vpop.permute.xlu0 %77
  %s80 = sor.u32 256, 8
  %81 = vbcast.lane.b32.xlu0 %v75, %s80
  %v82 = vpop.permute.xlu0 %81
  %s84 = sor.u32 256, 16
  %85 = vbcast.lane.b32.xlu0 %v75, %s84
  %v86 = vpop.permute.xlu0 %85
  %s88 = sor.u32 256, 24
  %89 = vbcast.lane.b32.xlu0 %v75, %s88
  %v90 = vpop.permute.xlu0 %89
  %s92 = sor.u32 256, 32
  %93 = vbcast.lane.b32.xlu0 %v75, %s92
  %v94 = vpop.permute.xlu0 %93
  %s96 = sor.u32 256, 40
  %97 = vbcast.lane.b32.xlu0 %v75, %s96
  %v98 = vpop.permute.xlu0 %97
  %s100 = sor.u32 256, 48
  %101 = vbcast.lane.b32.xlu0 %v75, %s100
  %v102 = vpop.permute.xlu0 %101
  %s104 = sor.u32 256, 56
  %105 = vbcast.lane.b32.xlu0 %v75, %s104
  %v106 = vpop.permute.xlu0 %105
  %s107 = scalar_lea.vmem %s1, 2
  %v108 = vld [vmem:[%s107] sm:$0x3]
  %v109 = vlaneseq
  %v110 = vshrl.u32 %v109, 7
  %v111 = vsub.s32 0, %v110
  %v112 = vrot.slane %v108, %v111
  %114 = vbcast.lane.b32.xlu0 %v112, 256
  %v115 = vpop.permute.xlu0 %114
  %s117 = sor.u32 256, 8
  %118 = vbcast.lane.b32.xlu0 %v112, %s117
  %v119 = vpop.permute.xlu0 %118
  %s121 = sor.u32 256, 16
  %122 = vbcast.lane.b32.xlu0 %v112, %s121
  %v123 = vpop.permute.xlu0 %122
  %s125 = sor.u32 256, 24
  %126 = vbcast.lane.b32.xlu0 %v112, %s125
  %v127 = vpop.permute.xlu0 %126
  %s129 = sor.u32 256, 32
  %130 = vbcast.lane.b32.xlu0 %v112, %s129
  %v131 = vpop.permute.xlu0 %130
  %s133 = sor.u32 256, 40
  %134 = vbcast.lane.b32.xlu0 %v112, %s133
  %v135 = vpop.permute.xlu0 %134
  %s137 = sor.u32 256, 48
  %138 = vbcast.lane.b32.xlu0 %v112, %s137
  %v139 = vpop.permute.xlu0 %138
  %s141 = sor.u32 256, 56
  %142 = vbcast.lane.b32.xlu0 %v112, %s141
  %v143 = vpop.permute.xlu0 %142
  %v144 = vlaneseq
  %v145 = vshrl.u32 %v144, 7
  %v146 = vsub.s32 1, %v145
  %v147 = vrot.slane %v108, %v146
  %149 = vbcast.lane.b32.xlu0 %v147, 256
  %v150 = vpop.permute.xlu0 %149
  %s152 = sor.u32 256, 8
  %153 = vbcast.lane.b32.xlu0 %v147, %s152
  %v154 = vpop.permute.xlu0 %153
  %s156 = sor.u32 256, 16
  %157 = vbcast.lane.b32.xlu0 %v147, %s156
  %v158 = vpop.permute.xlu0 %157
  %s160 = sor.u32 256, 24
  %161 = vbcast.lane.b32.xlu0 %v147, %s160
  %v162 = vpop.permute.xlu0 %161
  %s164 = sor.u32 256, 32
  %165 = vbcast.lane.b32.xlu0 %v147, %s164
  %v166 = vpop.permute.xlu0 %165
  %s168 = sor.u32 256, 40
  %169 = vbcast.lane.b32.xlu0 %v147, %s168
  %v170 = vpop.permute.xlu0 %169
  %s172 = sor.u32 256, 48
  %173 = vbcast.lane.b32.xlu0 %v147, %s172
  %v174 = vpop.permute.xlu0 %173
  %s176 = sor.u32 256, 56
  %177 = vbcast.lane.b32.xlu0 %v147, %s176
  %v178 = vpop.permute.xlu0 %177
  %vm179 = vcmp.eq.s32.totalorder %v43, %v35
  %vm180 = vcmp.eq.s32.totalorder %v47, %v35
  %vm181 = vcmp.eq.s32.totalorder %v51, %v35
  %vm182 = vcmp.eq.s32.totalorder %v55, %v35
  %vm183 = vcmp.eq.s32.totalorder %v59, %v35
  %vm184 = vcmp.eq.s32.totalorder %v63, %v35
  %vm185 = vcmp.eq.s32.totalorder %v67, %v35
  %vm186 = vcmp.eq.s32.totalorder %v71, %v35
  %vm187 = vcmp.eq.s32.totalorder %v78, %v35
  %vm188 = vcmp.eq.s32.totalorder %v82, %v35
  %vm189 = vcmp.eq.s32.totalorder %v86, %v35
  %vm190 = vcmp.eq.s32.totalorder %v90, %v35
  %vm191 = vcmp.eq.s32.totalorder %v94, %v35
  %vm192 = vcmp.eq.s32.totalorder %v98, %v35
  %vm193 = vcmp.eq.s32.totalorder %v102, %v35
  %vm194 = vcmp.eq.s32.totalorder %v106, %v35
  %v195 = vsel %vm179, 1, 0
  %v196 = vsel %vm180, 1, 0
  %v197 = vsel %vm181, 1, 0
  %v198 = vsel %vm182, 1, 0
  %v199 = vsel %vm183, 1, 0
  %v200 = vsel %vm184, 1, 0
  %v201 = vsel %vm185, 1, 0
  %v202 = vsel %vm186, 1, 0
  %v203 = vsel %vm187, 1, 0
  %v204 = vsel %vm188, 1, 0
  %v205 = vsel %vm189, 1, 0
  %v206 = vsel %vm190, 1, 0
  %v207 = vsel %vm191, 1, 0
  %v208 = vsel %vm192, 1, 0
  %v209 = vsel %vm193, 1, 0
  %v210 = vsel %vm194, 1, 0
  %v211 = vcvt.s32.f32 %v195
  %v212 = vcvt.s32.f32 %v196
  %v213 = vcvt.s32.f32 %v197
  %v214 = vcvt.s32.f32 %v198
  %v215 = vcvt.s32.f32 %v199
  %v216 = vcvt.s32.f32 %v200
  %v217 = vcvt.s32.f32 %v201
  %v218 = vcvt.s32.f32 %v202
  %v219 = vcvt.s32.f32 %v203
  %v220 = vcvt.s32.f32 %v204
  %v221 = vcvt.s32.f32 %v205
  %v222 = vcvt.s32.f32 %v206
  %v223 = vcvt.s32.f32 %v207
  %v224 = vcvt.s32.f32 %v208
  %v225 = vcvt.s32.f32 %v209
  %v226 = vcvt.s32.f32 %v210
  %vm227 = vcmp.eq.s32.totalorder %v115, %v35
  %vm228 = vcmp.eq.s32.totalorder %v119, %v35
  %vm229 = vcmp.eq.s32.totalorder %v123, %v35
  %vm230 = vcmp.eq.s32.totalorder %v127, %v35
  %vm231 = vcmp.eq.s32.totalorder %v131, %v35
  %vm232 = vcmp.eq.s32.totalorder %v135, %v35
  %vm233 = vcmp.eq.s32.totalorder %v139, %v35
  %vm234 = vcmp.eq.s32.totalorder %v143, %v35
  %vm235 = vcmp.eq.s32.totalorder %v150, %v35
  %vm236 = vcmp.eq.s32.totalorder %v154, %v35
  %vm237 = vcmp.eq.s32.totalorder %v158, %v35
  %vm238 = vcmp.eq.s32.totalorder %v162, %v35
  %vm239 = vcmp.eq.s32.totalorder %v166, %v35
  %vm240 = vcmp.eq.s32.totalorder %v170, %v35
  %vm241 = vcmp.eq.s32.totalorder %v174, %v35
  %vm242 = vcmp.eq.s32.totalorder %v178, %v35
  %v243 = vsel %vm227, 1, 0
  %v244 = vsel %vm228, 1, 0
  %v245 = vsel %vm229, 1, 0
  %v246 = vsel %vm230, 1, 0
  %v247 = vsel %vm231, 1, 0
  %v248 = vsel %vm232, 1, 0
  %v249 = vsel %vm233, 1, 0
  %v250 = vsel %vm234, 1, 0
  %v251 = vsel %vm235, 1, 0
  %v252 = vsel %vm236, 1, 0
  %v253 = vsel %vm237, 1, 0
  %v254 = vsel %vm238, 1, 0
  %v255 = vsel %vm239, 1, 0
  %v256 = vsel %vm240, 1, 0
  %v257 = vsel %vm241, 1, 0
  %v258 = vsel %vm242, 1, 0
  %v259 = vcvt.s32.f32 %v243
  %v260 = vcvt.s32.f32 %v244
  %v261 = vcvt.s32.f32 %v245
  %v262 = vcvt.s32.f32 %v246
  %v263 = vcvt.s32.f32 %v247
  %v264 = vcvt.s32.f32 %v248
  %v265 = vcvt.s32.f32 %v249
  %v266 = vcvt.s32.f32 %v250
  %v267 = vcvt.s32.f32 %v251
  %v268 = vcvt.s32.f32 %v252
  %v269 = vcvt.s32.f32 %v253
  %v270 = vcvt.s32.f32 %v254
  %v271 = vcvt.s32.f32 %v255
  %v272 = vcvt.s32.f32 %v256
  %v273 = vcvt.s32.f32 %v257
  %v274 = vcvt.s32.f32 %v258
  %v275 = vsub.f32 %v211, %v259
  %v276 = vsub.f32 %v212, %v260
  %v277 = vsub.f32 %v213, %v261
  %v278 = vsub.f32 %v214, %v262
  %v279 = vsub.f32 %v215, %v263
  %v280 = vsub.f32 %v216, %v264
  %v281 = vsub.f32 %v217, %v265
  %v282 = vsub.f32 %v218, %v266
  %v283 = vsub.f32 %v219, %v267
  %v284 = vsub.f32 %v220, %v268
  %v285 = vsub.f32 %v221, %v269
  %v286 = vsub.f32 %v222, %v270
  %v287 = vsub.f32 %v223, %v271
  %v288 = vsub.f32 %v224, %v272
  %v289 = vsub.f32 %v225, %v273
  %v290 = vsub.f32 %v226, %v274
  %v291 = vpack.c.bf16 %v276, %v275
  %v292 = vpack.c.bf16 %v278, %v277
  %v293 = vpack.c.bf16 %v280, %v279
  %v294 = vpack.c.bf16 %v282, %v281
  %v295 = vpack.c.bf16 %v284, %v283
  %v296 = vpack.c.bf16 %v286, %v285
  %v297 = vpack.c.bf16 %v288, %v287
  %v298 = vpack.c.bf16 %v290, %v289
  %v307 = vunpack.c.l.b16 %v18
  %v308 = vunpack.c.l.b16 %v19
  %v309 = vunpack.c.l.b16 %v20
  %v310 = vunpack.c.l.b16 %v21
  %v311 = vunpack.c.l.b16 %v22
  %v312 = vunpack.c.l.b16 %v23
  %v313 = vunpack.c.l.b16 %v24
  %v314 = vunpack.c.l.b16 %v25
  %v315 = vpack.c.b16 %v308, %v307
  %v316 = vpack.c.b16 %v310, %v309
  %v317 = vpack.c.b16 %v312, %v311
  %v318 = vpack.c.b16 %v314, %v313
  %vm323 = vcmask 523264
  %v325 = vsel %vm323, %v291, 0
  %v328 = vsel %vm323, %v292, 0
  %v331 = vsel %vm323, %v293, 0
  %v334 = vsel %vm323, %v294, 0
  %336 = vmatprep.subr.bf16.mxu0 0
  %337 = vmatpush1.bf16.msra.mxu0 0
  %338 = vmatprep.subr.bf16.mxu0 0
  %339 = vmatpush1.bf16.msra.mxu0 0
  %340 = vmatprep.subr.bf16.mxu0 0
  %341 = vmatpush1.bf16.msra.mxu0 0
  %342 = vmatprep.subr.bf16.mxu0 0
  %343 = vmatpush1.bf16.msra.mxu0 0
  %344 = vmatprep.subr.bf16.mxu0 0
  %345 = vmatpush1.bf16.msra.mxu0 %v318
  %346 = vmatprep.subr.bf16.mxu0 0
  %347 = vmatpush1.bf16.msra.mxu0 %v317
  %348 = vmatprep.subr.bf16.mxu0 0
  %349 = vmatpush1.bf16.msra.mxu0 %v316
  %350 = vmatprep.subr.bf16.mxu0 0
  %351 = vmatpush1.bf16.msra.mxu0 %v315
  %352 = vmatprep.subr.bf16.mxu0 0
  %353 = vmatpush2.bf16.msra.mxu0 0
  %354 = vmatprep.subr.bf16.mxu0 0
  %355 = vmatpush2.bf16.msra.mxu0 0
  %356 = vmatprep.subr.bf16.mxu0 0
  %357 = vmatpush2.bf16.msra.mxu0 0
  %358 = vmatprep.subr.bf16.mxu0 0
  %359 = vmatpush2.bf16.msra.mxu0 0
  %360 = vmatprep.subr.bf16.mxu0 0
  %361 = vmatpush2.bf16.msra.mxu0 0
  %362 = vmatprep.subr.bf16.mxu0 0
  %363 = vmatpush2.bf16.msra.mxu0 0
  %364 = vmatprep.subr.bf16.mxu0 0
  %365 = vmatpush2.bf16.msra.mxu0 0
  %366 = vmatprep.subr.bf16.mxu0 0
  %367 = vmatpush2.bf16.msra.mxu0 0
  %368 = vmatprep.mubr.bf16.mxu0 0
  %369 = vmatmul.mubr.bf16.gmra.mxu0 %v325
  %v370 = vpop.f32.mrf.mxu0
  %v371 = vadd.f32 0.0, %v370
  %v372 = vpop.f32.mrf.mxu0
  %v373 = vpop.f32.mrf.mxu0
  %v374 = vadd.f32 0.0, %v373
  %v375 = vpop.f32.mrf.mxu0
  %376 = vmatprep.mubr.bf16.mxu0 0
  %377 = vmatmul.mubr.bf16.gmra.mxu0 %v328
  %v378 = vpop.f32.mrf.mxu0
  %v379 = vadd.f32 0.0, %v378
  %v380 = vpop.f32.mrf.mxu0
  %v381 = vpop.f32.mrf.mxu0
  %v382 = vadd.f32 0.0, %v381
  %v383 = vpop.f32.mrf.mxu0
  %384 = vmatprep.mubr.bf16.mxu0 0
  %385 = vmatmul.mubr.bf16.gmra.mxu0 %v331
  %v386 = vpop.f32.mrf.mxu0
  %v387 = vadd.f32 0.0, %v386
  %v388 = vpop.f32.mrf.mxu0
  %v389 = vpop.f32.mrf.mxu0
  %v390 = vadd.f32 0.0, %v389
  %v391 = vpop.f32.mrf.mxu0
  %392 = vmatprep.mubr.bf16.mxu0 0
  %393 = vmatmul.mubr.bf16.gmra.mxu0 %v334
  %v394 = vpop.f32.mrf.mxu0
  %v395 = vadd.f32 0.0, %v394
  %v396 = vpop.f32.mrf.mxu0
  %v397 = vpop.f32.mrf.mxu0
  %v398 = vadd.f32 0.0, %v397
  %v399 = vpop.f32.mrf.mxu0
  %400 = vdwg.mxu0
  %v409 = vunpack.c.l.b16 %v26
  %v410 = vunpack.c.l.b16 %v27
  %v411 = vunpack.c.l.b16 %v28
  %v412 = vunpack.c.l.b16 %v29
  %v413 = vunpack.c.l.b16 %v30
  %v414 = vunpack.c.l.b16 %v31
  %v415 = vunpack.c.l.b16 %v32
  %v416 = vunpack.c.l.b16 %v33
  %v417 = vpack.c.b16 %v410, %v409
  %v418 = vpack.c.b16 %v412, %v411
  %v419 = vpack.c.b16 %v414, %v413
  %v420 = vpack.c.b16 %v416, %v415
  %v426 = vsel %vm323, %v295, 0
  %v429 = vsel %vm323, %v296, 0
  %v432 = vsel %vm323, %v297, 0
  %v435 = vsel %vm323, %v298, 0
  %437 = vmatprep.subr.bf16.mxu0 0
  %438 = vmatpush1.bf16.msra.mxu0 0
  %439 = vmatprep.subr.bf16.mxu0 0
  %440 = vmatpush1.bf16.msra.mxu0 0
  %441 = vmatprep.subr.bf16.mxu0 0
  %442 = vmatpush1.bf16.msra.mxu0 0
  %443 = vmatprep.subr.bf16.mxu0 0
  %444 = vmatpush1.bf16.msra.mxu0 0
  %445 = vmatprep.subr.bf16.mxu0 0
  %446 = vmatpush1.bf16.msra.mxu0 %v420
  %447 = vmatprep.subr.bf16.mxu0 0
  %448 = vmatpush1.bf16.msra.mxu0 %v419
  %449 = vmatprep.subr.bf16.mxu0 0
  %450 = vmatpush1.bf16.msra.mxu0 %v418
  %451 = vmatprep.subr.bf16.mxu0 0
  %452 = vmatpush1.bf16.msra.mxu0 %v417
  %453 = vmatprep.subr.bf16.mxu0 0
  %454 = vmatpush2.bf16.msra.mxu0 0
  %455 = vmatprep.subr.bf16.mxu0 0
  %456 = vmatpush2.bf16.msra.mxu0 0
  %457 = vmatprep.subr.bf16.mxu0 0
  %458 = vmatpush2.bf16.msra.mxu0 0
  %459 = vmatprep.subr.bf16.mxu0 0
  %460 = vmatpush2.bf16.msra.mxu0 0
  %461 = vmatprep.subr.bf16.mxu0 0
  %462 = vmatpush2.bf16.msra.mxu0 0
  %463 = vmatprep.subr.bf16.mxu0 0
  %464 = vmatpush2.bf16.msra.mxu0 0
  %465 = vmatprep.subr.bf16.mxu0 0
  %466 = vmatpush2.bf16.msra.mxu0 0
  %467 = vmatprep.subr.bf16.mxu0 0
  %468 = vmatpush2.bf16.msra.mxu0 0
  %469 = vmatprep.mubr.bf16.mxu0 0
  %470 = vmatmul.mubr.bf16.gmra.mxu0 %v426
  %v471 = vpop.f32.mrf.mxu0
  %v472 = vadd.f32 0.0, %v471
  %v473 = vpop.f32.mrf.mxu0
  %v474 = vpop.f32.mrf.mxu0
  %v475 = vadd.f32 0.0, %v474
  %v476 = vpop.f32.mrf.mxu0
  %477 = vmatprep.mubr.bf16.mxu0 0
  %478 = vmatmul.mubr.bf16.gmra.mxu0 %v429
  %v479 = vpop.f32.mrf.mxu0
  %v480 = vadd.f32 0.0, %v479
  %v481 = vpop.f32.mrf.mxu0
  %v482 = vpop.f32.mrf.mxu0
  %v483 = vadd.f32 0.0, %v482
  %v484 = vpop.f32.mrf.mxu0
  %485 = vmatprep.mubr.bf16.mxu0 0
  %486 = vmatmul.mubr.bf16.gmra.mxu0 %v432
  %v487 = vpop.f32.mrf.mxu0
  %v488 = vadd.f32 0.0, %v487
  %v489 = vpop.f32.mrf.mxu0
  %v490 = vpop.f32.mrf.mxu0
  %v491 = vadd.f32 0.0, %v490
  %v492 = vpop.f32.mrf.mxu0
  %493 = vmatprep.mubr.bf16.mxu0 0
  %494 = vmatmul.mubr.bf16.gmra.mxu0 %v435
  %v495 = vpop.f32.mrf.mxu0
  %v496 = vadd.f32 0.0, %v495
  %v497 = vpop.f32.mrf.mxu0
  %v498 = vpop.f32.mrf.mxu0
  %v499 = vadd.f32 0.0, %v498
  %v500 = vpop.f32.mrf.mxu0
  %501 = vdwg.mxu0
  %s502 = scalar_lea.vmem %s1, 4
  %v503 = vld [vmem:[%s502] sm:$0x3]
  %v504 = vlaneseq
  %v505 = vshrl.u32 %v504, 7
  %v506 = vsub.s32 0, %v505
  %v507 = vrot.slane %v503, %v506
  %509 = vbcast.lane.b32.xlu0 %v507, 256
  %v510 = vpop.permute.xlu0 %509
  %s512 = sor.u32 256, 8
  %513 = vbcast.lane.b32.xlu0 %v507, %s512
  %v514 = vpop.permute.xlu0 %513
  %s516 = sor.u32 256, 16
  %517 = vbcast.lane.b32.xlu0 %v507, %s516
  %v518 = vpop.permute.xlu0 %517
  %s520 = sor.u32 256, 24
  %521 = vbcast.lane.b32.xlu0 %v507, %s520
  %v522 = vpop.permute.xlu0 %521
  %s524 = sor.u32 256, 32
  %525 = vbcast.lane.b32.xlu0 %v507, %s524
  %v526 = vpop.permute.xlu0 %525
  %s528 = sor.u32 256, 40
  %529 = vbcast.lane.b32.xlu0 %v507, %s528
  %v530 = vpop.permute.xlu0 %529
  %s532 = sor.u32 256, 48
  %533 = vbcast.lane.b32.xlu0 %v507, %s532
  %v534 = vpop.permute.xlu0 %533
  %s536 = sor.u32 256, 56
  %537 = vbcast.lane.b32.xlu0 %v507, %s536
  %v538 = vpop.permute.xlu0 %537
  %v539 = vlaneseq
  %v540 = vshrl.u32 %v539, 7
  %v541 = vsub.s32 1, %v540
  %v542 = vrot.slane %v503, %v541
  %544 = vbcast.lane.b32.xlu0 %v542, 256
  %v545 = vpop.permute.xlu0 %544
  %s547 = sor.u32 256, 8
  %548 = vbcast.lane.b32.xlu0 %v542, %s547
  %v549 = vpop.permute.xlu0 %548
  %s551 = sor.u32 256, 16
  %552 = vbcast.lane.b32.xlu0 %v542, %s551
  %v553 = vpop.permute.xlu0 %552
  %s555 = sor.u32 256, 24
  %556 = vbcast.lane.b32.xlu0 %v542, %s555
  %v557 = vpop.permute.xlu0 %556
  %s559 = sor.u32 256, 32
  %560 = vbcast.lane.b32.xlu0 %v542, %s559
  %v561 = vpop.permute.xlu0 %560
  %s563 = sor.u32 256, 40
  %564 = vbcast.lane.b32.xlu0 %v542, %s563
  %v565 = vpop.permute.xlu0 %564
  %s567 = sor.u32 256, 48
  %568 = vbcast.lane.b32.xlu0 %v542, %s567
  %v569 = vpop.permute.xlu0 %568
  %s571 = sor.u32 256, 56
  %572 = vbcast.lane.b32.xlu0 %v542, %s571
  %v573 = vpop.permute.xlu0 %572
  %s574 = scalar_lea.vmem %s1, 6
  %v575 = vld [vmem:[%s574] sm:$0x3]
  %v576 = vlaneseq
  %v577 = vshrl.u32 %v576, 7
  %v578 = vsub.s32 0, %v577
  %v579 = vrot.slane %v575, %v578
  %581 = vbcast.lane.b32.xlu0 %v579, 256
  %v582 = vpop.permute.xlu0 %581
  %s584 = sor.u32 256, 8
  %585 = vbcast.lane.b32.xlu0 %v579, %s584
  %v586 = vpop.permute.xlu0 %585
  %s588 = sor.u32 256, 16
  %589 = vbcast.lane.b32.xlu0 %v579, %s588
  %v590 = vpop.permute.xlu0 %589
  %s592 = sor.u32 256, 24
  %593 = vbcast.lane.b32.xlu0 %v579, %s592
  %v594 = vpop.permute.xlu0 %593
  %s596 = sor.u32 256, 32
  %597 = vbcast.lane.b32.xlu0 %v579, %s596
  %v598 = vpop.permute.xlu0 %597
  %s600 = sor.u32 256, 40
  %601 = vbcast.lane.b32.xlu0 %v579, %s600
  %v602 = vpop.permute.xlu0 %601
  %s604 = sor.u32 256, 48
  %605 = vbcast.lane.b32.xlu0 %v579, %s604
  %v606 = vpop.permute.xlu0 %605
  %s608 = sor.u32 256, 56
  %609 = vbcast.lane.b32.xlu0 %v579, %s608
  %v610 = vpop.permute.xlu0 %609
  %v611 = vlaneseq
  %v612 = vshrl.u32 %v611, 7
  %v613 = vsub.s32 1, %v612
  %v614 = vrot.slane %v575, %v613
  %616 = vbcast.lane.b32.xlu0 %v614, 256
  %v617 = vpop.permute.xlu0 %616
  %s619 = sor.u32 256, 8
  %620 = vbcast.lane.b32.xlu0 %v614, %s619
  %v621 = vpop.permute.xlu0 %620
  %s623 = sor.u32 256, 16
  %624 = vbcast.lane.b32.xlu0 %v614, %s623
  %v625 = vpop.permute.xlu0 %624
  %s627 = sor.u32 256, 24
  %628 = vbcast.lane.b32.xlu0 %v614, %s627
  %v629 = vpop.permute.xlu0 %628
  %s631 = sor.u32 256, 32
  %632 = vbcast.lane.b32.xlu0 %v614, %s631
  %v633 = vpop.permute.xlu0 %632
  %s635 = sor.u32 256, 40
  %636 = vbcast.lane.b32.xlu0 %v614, %s635
  %v637 = vpop.permute.xlu0 %636
  %s639 = sor.u32 256, 48
  %640 = vbcast.lane.b32.xlu0 %v614, %s639
  %v641 = vpop.permute.xlu0 %640
  %s643 = sor.u32 256, 56
  %644 = vbcast.lane.b32.xlu0 %v614, %s643
  %v645 = vpop.permute.xlu0 %644
  %vm646 = vcmp.eq.s32.totalorder %v510, %v35
  %vm647 = vcmp.eq.s32.totalorder %v514, %v35
  %vm648 = vcmp.eq.s32.totalorder %v518, %v35
  %vm649 = vcmp.eq.s32.totalorder %v522, %v35
  %vm650 = vcmp.eq.s32.totalorder %v526, %v35
  %vm651 = vcmp.eq.s32.totalorder %v530, %v35
  %vm652 = vcmp.eq.s32.totalorder %v534, %v35
  %vm653 = vcmp.eq.s32.totalorder %v538, %v35
  %vm654 = vcmp.eq.s32.totalorder %v545, %v35
  %vm655 = vcmp.eq.s32.totalorder %v549, %v35
  %vm656 = vcmp.eq.s32.totalorder %v553, %v35
  %vm657 = vcmp.eq.s32.totalorder %v557, %v35
  %vm658 = vcmp.eq.s32.totalorder %v561, %v35
  %vm659 = vcmp.eq.s32.totalorder %v565, %v35
  %vm660 = vcmp.eq.s32.totalorder %v569, %v35
  %vm661 = vcmp.eq.s32.totalorder %v573, %v35
  %v662 = vsel %vm646, 1, 0
  %v663 = vsel %vm647, 1, 0
  %v664 = vsel %vm648, 1, 0
  %v665 = vsel %vm649, 1, 0
  %v666 = vsel %vm650, 1, 0
  %v667 = vsel %vm651, 1, 0
  %v668 = vsel %vm652, 1, 0
  %v669 = vsel %vm653, 1, 0
  %v670 = vsel %vm654, 1, 0
  %v671 = vsel %vm655, 1, 0
  %v672 = vsel %vm656, 1, 0
  %v673 = vsel %vm657, 1, 0
  %v674 = vsel %vm658, 1, 0
  %v675 = vsel %vm659, 1, 0
  %v676 = vsel %vm660, 1, 0
  %v677 = vsel %vm661, 1, 0
  %v678 = vcvt.s32.f32 %v662
  %v679 = vcvt.s32.f32 %v663
  %v680 = vcvt.s32.f32 %v664
  %v681 = vcvt.s32.f32 %v665
  %v682 = vcvt.s32.f32 %v666
  %v683 = vcvt.s32.f32 %v667
  %v684 = vcvt.s32.f32 %v668
  %v685 = vcvt.s32.f32 %v669
  %v686 = vcvt.s32.f32 %v670
  %v687 = vcvt.s32.f32 %v671
  %v688 = vcvt.s32.f32 %v672
  %v689 = vcvt.s32.f32 %v673
  %v690 = vcvt.s32.f32 %v674
  %v691 = vcvt.s32.f32 %v675
  %v692 = vcvt.s32.f32 %v676
  %v693 = vcvt.s32.f32 %v677
  %vm694 = vcmp.eq.s32.totalorder %v582, %v35
  %vm695 = vcmp.eq.s32.totalorder %v586, %v35
  %vm696 = vcmp.eq.s32.totalorder %v590, %v35
  %vm697 = vcmp.eq.s32.totalorder %v594, %v35
  %vm698 = vcmp.eq.s32.totalorder %v598, %v35
  %vm699 = vcmp.eq.s32.totalorder %v602, %v35
  %vm700 = vcmp.eq.s32.totalorder %v606, %v35
  %vm701 = vcmp.eq.s32.totalorder %v610, %v35
  %vm702 = vcmp.eq.s32.totalorder %v617, %v35
  %vm703 = vcmp.eq.s32.totalorder %v621, %v35
  %vm704 = vcmp.eq.s32.totalorder %v625, %v35
  %vm705 = vcmp.eq.s32.totalorder %v629, %v35
  %vm706 = vcmp.eq.s32.totalorder %v633, %v35
  %vm707 = vcmp.eq.s32.totalorder %v637, %v35
  %vm708 = vcmp.eq.s32.totalorder %v641, %v35
  %vm709 = vcmp.eq.s32.totalorder %v645, %v35
  %v710 = vsel %vm694, 1, 0
  %v711 = vsel %vm695, 1, 0
  %v712 = vsel %vm696, 1, 0
  %v713 = vsel %vm697, 1, 0
  %v714 = vsel %vm698, 1, 0
  %v715 = vsel %vm699, 1, 0
  %v716 = vsel %vm700, 1, 0
  %v717 = vsel %vm701, 1, 0
  %v718 = vsel %vm702, 1, 0
  %v719 = vsel %vm703, 1, 0
  %v720 = vsel %vm704, 1, 0
  %v721 = vsel %vm705, 1, 0
  %v722 = vsel %vm706, 1, 0
  %v723 = vsel %vm707, 1, 0
  %v724 = vsel %vm708, 1, 0
  %v725 = vsel %vm709, 1, 0
  %v726 = vcvt.s32.f32 %v710
  %v727 = vcvt.s32.f32 %v711
  %v728 = vcvt.s32.f32 %v712
  %v729 = vcvt.s32.f32 %v713
  %v730 = vcvt.s32.f32 %v714
  %v731 = vcvt.s32.f32 %v715
  %v732 = vcvt.s32.f32 %v716
  %v733 = vcvt.s32.f32 %v717
  %v734 = vcvt.s32.f32 %v718
  %v735 = vcvt.s32.f32 %v719
  %v736 = vcvt.s32.f32 %v720
  %v737 = vcvt.s32.f32 %v721
  %v738 = vcvt.s32.f32 %v722
  %v739 = vcvt.s32.f32 %v723
  %v740 = vcvt.s32.f32 %v724
  %v741 = vcvt.s32.f32 %v725
  %v742 = vsub.f32 %v678, %v726
  %v743 = vsub.f32 %v679, %v727
  %v744 = vsub.f32 %v680, %v728
  %v745 = vsub.f32 %v681, %v729
  %v746 = vsub.f32 %v682, %v730
  %v747 = vsub.f32 %v683, %v731
  %v748 = vsub.f32 %v684, %v732
  %v749 = vsub.f32 %v685, %v733
  %v750 = vsub.f32 %v686, %v734
  %v751 = vsub.f32 %v687, %v735
  %v752 = vsub.f32 %v688, %v736
  %v753 = vsub.f32 %v689, %v737
  %v754 = vsub.f32 %v690, %v738
  %v755 = vsub.f32 %v691, %v739
  %v756 = vsub.f32 %v692, %v740
  %v757 = vsub.f32 %v693, %v741
  %v758 = vpack.c.bf16 %v743, %v742
  %v759 = vpack.c.bf16 %v745, %v744
  %v760 = vpack.c.bf16 %v747, %v746
  %v761 = vpack.c.bf16 %v749, %v748
  %v762 = vpack.c.bf16 %v751, %v750
  %v763 = vpack.c.bf16 %v753, %v752
  %v764 = vpack.c.bf16 %v755, %v754
  %v765 = vpack.c.bf16 %v757, %v756
  %v767 = vsel %vm323, %v758, 0
  %v770 = vsel %vm323, %v759, 0
  %v773 = vsel %vm323, %v760, 0
  %v776 = vsel %vm323, %v761, 0
  %778 = vmatprep.subr.bf16.mxu0 0
  %779 = vmatpush1.bf16.msra.mxu0 0
  %780 = vmatprep.subr.bf16.mxu0 0
  %781 = vmatpush1.bf16.msra.mxu0 0
  %782 = vmatprep.subr.bf16.mxu0 0
  %783 = vmatpush1.bf16.msra.mxu0 0
  %784 = vmatprep.subr.bf16.mxu0 0
  %785 = vmatpush1.bf16.msra.mxu0 0
  %786 = vmatprep.subr.bf16.mxu0 0
  %787 = vmatpush1.bf16.msra.mxu0 %v318
  %788 = vmatprep.subr.bf16.mxu0 0
  %789 = vmatpush1.bf16.msra.mxu0 %v317
  %790 = vmatprep.subr.bf16.mxu0 0
  %791 = vmatpush1.bf16.msra.mxu0 %v316
  %792 = vmatprep.subr.bf16.mxu0 0
  %793 = vmatpush1.bf16.msra.mxu0 %v315
  %794 = vmatprep.subr.bf16.mxu0 0
  %795 = vmatpush2.bf16.msra.mxu0 0
  %796 = vmatprep.subr.bf16.mxu0 0
  %797 = vmatpush2.bf16.msra.mxu0 0
  %798 = vmatprep.subr.bf16.mxu0 0
  %799 = vmatpush2.bf16.msra.mxu0 0
  %800 = vmatprep.subr.bf16.mxu0 0
  %801 = vmatpush2.bf16.msra.mxu0 0
  %802 = vmatprep.subr.bf16.mxu0 0
  %803 = vmatpush2.bf16.msra.mxu0 0
  %804 = vmatprep.subr.bf16.mxu0 0
  %805 = vmatpush2.bf16.msra.mxu0 0
  %806 = vmatprep.subr.bf16.mxu0 0
  %807 = vmatpush2.bf16.msra.mxu0 0
  %808 = vmatprep.subr.bf16.mxu0 0
  %809 = vmatpush2.bf16.msra.mxu0 0
  %810 = vmatprep.mubr.bf16.mxu0 0
  %811 = vmatmul.mubr.bf16.gmra.mxu0 %v767
  %v812 = vpop.f32.mrf.mxu0
  %v813 = vadd.f32 0.0, %v812
  %v814 = vpop.f32.mrf.mxu0
  %v815 = vpop.f32.mrf.mxu0
  %v816 = vadd.f32 0.0, %v815
  %v817 = vpop.f32.mrf.mxu0
  %818 = vmatprep.mubr.bf16.mxu0 0
  %819 = vmatmul.mubr.bf16.gmra.mxu0 %v770
  %v820 = vpop.f32.mrf.mxu0
  %v821 = vadd.f32 0.0, %v820
  %v822 = vpop.f32.mrf.mxu0
  %v823 = vpop.f32.mrf.mxu0
  %v824 = vadd.f32 0.0, %v823
  %v825 = vpop.f32.mrf.mxu0
  %826 = vmatprep.mubr.bf16.mxu0 0
  %827 = vmatmul.mubr.bf16.gmra.mxu0 %v773
  %v828 = vpop.f32.mrf.mxu0
  %v829 = vadd.f32 0.0, %v828
  %v830 = vpop.f32.mrf.mxu0
  %v831 = vpop.f32.mrf.mxu0
  %v832 = vadd.f32 0.0, %v831
  %v833 = vpop.f32.mrf.mxu0
  %834 = vmatprep.mubr.bf16.mxu0 0
  %835 = vmatmul.mubr.bf16.gmra.mxu0 %v776
  %v836 = vpop.f32.mrf.mxu0
  %v837 = vadd.f32 0.0, %v836
  %v838 = vpop.f32.mrf.mxu0
  %v839 = vpop.f32.mrf.mxu0
  %v840 = vadd.f32 0.0, %v839
  %v841 = vpop.f32.mrf.mxu0
  %842 = vdwg.mxu0
  %v844 = vsel %vm323, %v762, 0
  %v847 = vsel %vm323, %v763, 0
  %v850 = vsel %vm323, %v764, 0
  %v853 = vsel %vm323, %v765, 0
  %855 = vmatprep.subr.bf16.mxu0 0
  %856 = vmatpush1.bf16.msra.mxu0 0
  %857 = vmatprep.subr.bf16.mxu0 0
  %858 = vmatpush1.bf16.msra.mxu0 0
  %859 = vmatprep.subr.bf16.mxu0 0
  %860 = vmatpush1.bf16.msra.mxu0 0
  %861 = vmatprep.subr.bf16.mxu0 0
  %862 = vmatpush1.bf16.msra.mxu0 0
  %863 = vmatprep.subr.bf16.mxu0 0
  %864 = vmatpush1.bf16.msra.mxu0 %v420
  %865 = vmatprep.subr.bf16.mxu0 0
  %866 = vmatpush1.bf16.msra.mxu0 %v419
  %867 = vmatprep.subr.bf16.mxu0 0
  %868 = vmatpush1.bf16.msra.mxu0 %v418
  %869 = vmatprep.subr.bf16.mxu0 0
  %870 = vmatpush1.bf16.msra.mxu0 %v417
  %871 = vmatprep.subr.bf16.mxu0 0
  %872 = vmatpush2.bf16.msra.mxu0 0
  %873 = vmatprep.subr.bf16.mxu0 0
  %874 = vmatpush2.bf16.msra.mxu0 0
  %875 = vmatprep.subr.bf16.mxu0 0
  %876 = vmatpush2.bf16.msra.mxu0 0
  %877 = vmatprep.subr.bf16.mxu0 0
  %878 = vmatpush2.bf16.msra.mxu0 0
  %879 = vmatprep.subr.bf16.mxu0 0
  %880 = vmatpush2.bf16.msra.mxu0 0
  %881 = vmatprep.subr.bf16.mxu0 0
  %882 = vmatpush2.bf16.msra.mxu0 0
  %883 = vmatprep.subr.bf16.mxu0 0
  %884 = vmatpush2.bf16.msra.mxu0 0
  %885 = vmatprep.subr.bf16.mxu0 0
  %886 = vmatpush2.bf16.msra.mxu0 0
  %887 = vmatprep.mubr.bf16.mxu0 0
  %888 = vmatmul.mubr.bf16.gmra.mxu0 %v844
  %v889 = vpop.f32.mrf.mxu0
  %v890 = vadd.f32 0.0, %v889
  %v891 = vpop.f32.mrf.mxu0
  %v892 = vpop.f32.mrf.mxu0
  %v893 = vadd.f32 0.0, %v892
  %v894 = vpop.f32.mrf.mxu0
  %895 = vmatprep.mubr.bf16.mxu0 0
  %896 = vmatmul.mubr.bf16.gmra.mxu0 %v847
  %v897 = vpop.f32.mrf.mxu0
  %v898 = vadd.f32 0.0, %v897
  %v899 = vpop.f32.mrf.mxu0
  %v900 = vpop.f32.mrf.mxu0
  %v901 = vadd.f32 0.0, %v900
  %v902 = vpop.f32.mrf.mxu0
  %903 = vmatprep.mubr.bf16.mxu0 0
  %904 = vmatmul.mubr.bf16.gmra.mxu0 %v850
  %v905 = vpop.f32.mrf.mxu0
  %v906 = vadd.f32 0.0, %v905
  %v907 = vpop.f32.mrf.mxu0
  %v908 = vpop.f32.mrf.mxu0
  %v909 = vadd.f32 0.0, %v908
  %v910 = vpop.f32.mrf.mxu0
  %911 = vmatprep.mubr.bf16.mxu0 0
  %912 = vmatmul.mubr.bf16.gmra.mxu0 %v853
  %v913 = vpop.f32.mrf.mxu0
  %v914 = vadd.f32 0.0, %v913
  %v915 = vpop.f32.mrf.mxu0
  %v916 = vpop.f32.mrf.mxu0
  %v917 = vadd.f32 0.0, %v916
  %v918 = vpop.f32.mrf.mxu0
  %919 = vdwg.mxu0
  %v920 = vmax.f32 %v371, %v813
  %v921 = vmax.f32 %v374, %v816
  %v922 = vmax.f32 %v379, %v821
  %v923 = vmax.f32 %v382, %v824
  %v924 = vmax.f32 %v387, %v829
  %v925 = vmax.f32 %v390, %v832
  %v926 = vmax.f32 %v395, %v837
  %v927 = vmax.f32 %v398, %v840
  %v928 = vmax.f32 %v472, %v890
  %v929 = vmax.f32 %v475, %v893
  %v930 = vmax.f32 %v480, %v898
  %v931 = vmax.f32 %v483, %v901
  %v932 = vmax.f32 %v488, %v906
  %v933 = vmax.f32 %v491, %v909
  %v934 = vmax.f32 %v496, %v914
  %v935 = vmax.f32 %v499, %v917
  %s936 = scalar_lea.vmem %s1, 8
  %v937 = vld [vmem:[%s936] sm:$0x3]
  %v938 = vlaneseq
  %v939 = vshrl.u32 %v938, 7
  %v940 = vsub.s32 0, %v939
  %v941 = vrot.slane %v937, %v940
  %943 = vbcast.lane.b32.xlu0 %v941, 256
  %v944 = vpop.permute.xlu0 %943
  %s946 = sor.u32 256, 8
  %947 = vbcast.lane.b32.xlu0 %v941, %s946
  %v948 = vpop.permute.xlu0 %947
  %s950 = sor.u32 256, 16
  %951 = vbcast.lane.b32.xlu0 %v941, %s950
  %v952 = vpop.permute.xlu0 %951
  %s954 = sor.u32 256, 24
  %955 = vbcast.lane.b32.xlu0 %v941, %s954
  %v956 = vpop.permute.xlu0 %955
  %s958 = sor.u32 256, 32
  %959 = vbcast.lane.b32.xlu0 %v941, %s958
  %v960 = vpop.permute.xlu0 %959
  %s962 = sor.u32 256, 40
  %963 = vbcast.lane.b32.xlu0 %v941, %s962
  %v964 = vpop.permute.xlu0 %963
  %s966 = sor.u32 256, 48
  %967 = vbcast.lane.b32.xlu0 %v941, %s966
  %v968 = vpop.permute.xlu0 %967
  %s970 = sor.u32 256, 56
  %971 = vbcast.lane.b32.xlu0 %v941, %s970
  %v972 = vpop.permute.xlu0 %971
  %v973 = vlaneseq
  %v974 = vshrl.u32 %v973, 7
  %v975 = vsub.s32 1, %v974
  %v976 = vrot.slane %v937, %v975
  %978 = vbcast.lane.b32.xlu0 %v976, 256
  %v979 = vpop.permute.xlu0 %978
  %s981 = sor.u32 256, 8
  %982 = vbcast.lane.b32.xlu0 %v976, %s981
  %v983 = vpop.permute.xlu0 %982
  %s985 = sor.u32 256, 16
  %986 = vbcast.lane.b32.xlu0 %v976, %s985
  %v987 = vpop.permute.xlu0 %986
  %s989 = sor.u32 256, 24
  %990 = vbcast.lane.b32.xlu0 %v976, %s989
  %v991 = vpop.permute.xlu0 %990
  %s993 = sor.u32 256, 32
  %994 = vbcast.lane.b32.xlu0 %v976, %s993
  %v995 = vpop.permute.xlu0 %994
  %s997 = sor.u32 256, 40
  %998 = vbcast.lane.b32.xlu0 %v976, %s997
  %v999 = vpop.permute.xlu0 %998
  %s1001 = sor.u32 256, 48
  %1002 = vbcast.lane.b32.xlu0 %v976, %s1001
  %v1003 = vpop.permute.xlu0 %1002
  %s1005 = sor.u32 256, 56
  %1006 = vbcast.lane.b32.xlu0 %v976, %s1005
  %v1007 = vpop.permute.xlu0 %1006
  %s1008 = scalar_lea.vmem %s1, 10
  %v1009 = vld [vmem:[%s1008] sm:$0x3]
  %v1010 = vlaneseq
  %v1011 = vshrl.u32 %v1010, 7
  %v1012 = vsub.s32 0, %v1011
  %v1013 = vrot.slane %v1009, %v1012
  %1015 = vbcast.lane.b32.xlu0 %v1013, 256
  %v1016 = vpop.permute.xlu0 %1015
  %s1018 = sor.u32 256, 8
  %1019 = vbcast.lane.b32.xlu0 %v1013, %s1018
  %v1020 = vpop.permute.xlu0 %1019
  %s1022 = sor.u32 256, 16
  %1023 = vbcast.lane.b32.xlu0 %v1013, %s1022
  %v1024 = vpop.permute.xlu0 %1023
  %s1026 = sor.u32 256, 24
  %1027 = vbcast.lane.b32.xlu0 %v1013, %s1026
  %v1028 = vpop.permute.xlu0 %1027
  %s1030 = sor.u32 256, 32
  %1031 = vbcast.lane.b32.xlu0 %v1013, %s1030
  %v1032 = vpop.permute.xlu0 %1031
  %s1034 = sor.u32 256, 40
  %1035 = vbcast.lane.b32.xlu0 %v1013, %s1034
  %v1036 = vpop.permute.xlu0 %1035
  %s1038 = sor.u32 256, 48
  %1039 = vbcast.lane.b32.xlu0 %v1013, %s1038
  %v1040 = vpop.permute.xlu0 %1039
  %s1042 = sor.u32 256, 56
  %1043 = vbcast.lane.b32.xlu0 %v1013, %s1042
  %v1044 = vpop.permute.xlu0 %1043
  %v1045 = vlaneseq
  %v1046 = vshrl.u32 %v1045, 7
  %v1047 = vsub.s32 1, %v1046
  %v1048 = vrot.slane %v1009, %v1047
  %1050 = vbcast.lane.b32.xlu0 %v1048, 256
  %v1051 = vpop.permute.xlu0 %1050
  %s1053 = sor.u32 256, 8
  %1054 = vbcast.lane.b32.xlu0 %v1048, %s1053
  %v1055 = vpop.permute.xlu0 %1054
  %s1057 = sor.u32 256, 16
  %1058 = vbcast.lane.b32.xlu0 %v1048, %s1057
  %v1059 = vpop.permute.xlu0 %1058
  %s1061 = sor.u32 256, 24
  %1062 = vbcast.lane.b32.xlu0 %v1048, %s1061
  %v1063 = vpop.permute.xlu0 %1062
  %s1065 = sor.u32 256, 32
  %1066 = vbcast.lane.b32.xlu0 %v1048, %s1065
  %v1067 = vpop.permute.xlu0 %1066
  %s1069 = sor.u32 256, 40
  %1070 = vbcast.lane.b32.xlu0 %v1048, %s1069
  %v1071 = vpop.permute.xlu0 %1070
  %s1073 = sor.u32 256, 48
  %1074 = vbcast.lane.b32.xlu0 %v1048, %s1073
  %v1075 = vpop.permute.xlu0 %1074
  %s1077 = sor.u32 256, 56
  %1078 = vbcast.lane.b32.xlu0 %v1048, %s1077
  %v1079 = vpop.permute.xlu0 %1078
  %vm1080 = vcmp.eq.s32.totalorder %v944, %v35
  %vm1081 = vcmp.eq.s32.totalorder %v948, %v35
  %vm1082 = vcmp.eq.s32.totalorder %v952, %v35
  %vm1083 = vcmp.eq.s32.totalorder %v956, %v35
  %vm1084 = vcmp.eq.s32.totalorder %v960, %v35
  %vm1085 = vcmp.eq.s32.totalorder %v964, %v35
  %vm1086 = vcmp.eq.s32.totalorder %v968, %v35
  %vm1087 = vcmp.eq.s32.totalorder %v972, %v35
  %vm1088 = vcmp.eq.s32.totalorder %v979, %v35
  %vm1089 = vcmp.eq.s32.totalorder %v983, %v35
  %vm1090 = vcmp.eq.s32.totalorder %v987, %v35
  %vm1091 = vcmp.eq.s32.totalorder %v991, %v35
  %vm1092 = vcmp.eq.s32.totalorder %v995, %v35
  %vm1093 = vcmp.eq.s32.totalorder %v999, %v35
  %vm1094 = vcmp.eq.s32.totalorder %v1003, %v35
  %vm1095 = vcmp.eq.s32.totalorder %v1007, %v35
  %v1096 = vsel %vm1080, 1, 0
  %v1097 = vsel %vm1081, 1, 0
  %v1098 = vsel %vm1082, 1, 0
  %v1099 = vsel %vm1083, 1, 0
  %v1100 = vsel %vm1084, 1, 0
  %v1101 = vsel %vm1085, 1, 0
  %v1102 = vsel %vm1086, 1, 0
  %v1103 = vsel %vm1087, 1, 0
  %v1104 = vsel %vm1088, 1, 0
  %v1105 = vsel %vm1089, 1, 0
  %v1106 = vsel %vm1090, 1, 0
  %v1107 = vsel %vm1091, 1, 0
  %v1108 = vsel %vm1092, 1, 0
  %v1109 = vsel %vm1093, 1, 0
  %v1110 = vsel %vm1094, 1, 0
  %v1111 = vsel %vm1095, 1, 0
  %v1112 = vcvt.s32.f32 %v1096
  %v1113 = vcvt.s32.f32 %v1097
  %v1114 = vcvt.s32.f32 %v1098
  %v1115 = vcvt.s32.f32 %v1099
  %v1116 = vcvt.s32.f32 %v1100
  %v1117 = vcvt.s32.f32 %v1101
  %v1118 = vcvt.s32.f32 %v1102
  %v1119 = vcvt.s32.f32 %v1103
  %v1120 = vcvt.s32.f32 %v1104
  %v1121 = vcvt.s32.f32 %v1105
  %v1122 = vcvt.s32.f32 %v1106
  %v1123 = vcvt.s32.f32 %v1107
  %v1124 = vcvt.s32.f32 %v1108
  %v1125 = vcvt.s32.f32 %v1109
  %v1126 = vcvt.s32.f32 %v1110
  %v1127 = vcvt.s32.f32 %v1111
  %vm1128 = vcmp.eq.s32.totalorder %v1016, %v35
  %vm1129 = vcmp.eq.s32.totalorder %v1020, %v35
  %vm1130 = vcmp.eq.s32.totalorder %v1024, %v35
  %vm1131 = vcmp.eq.s32.totalorder %v1028, %v35
  %vm1132 = vcmp.eq.s32.totalorder %v1032, %v35
  %vm1133 = vcmp.eq.s32.totalorder %v1036, %v35
  %vm1134 = vcmp.eq.s32.totalorder %v1040, %v35
  %vm1135 = vcmp.eq.s32.totalorder %v1044, %v35
  %vm1136 = vcmp.eq.s32.totalorder %v1051, %v35
  %vm1137 = vcmp.eq.s32.totalorder %v1055, %v35
  %vm1138 = vcmp.eq.s32.totalorder %v1059, %v35
  %vm1139 = vcmp.eq.s32.totalorder %v1063, %v35
  %vm1140 = vcmp.eq.s32.totalorder %v1067, %v35
  %vm1141 = vcmp.eq.s32.totalorder %v1071, %v35
  %vm1142 = vcmp.eq.s32.totalorder %v1075, %v35
  %vm1143 = vcmp.eq.s32.totalorder %v1079, %v35
  %v1144 = vsel %vm1128, 1, 0
  %v1145 = vsel %vm1129, 1, 0
  %v1146 = vsel %vm1130, 1, 0
  %v1147 = vsel %vm1131, 1, 0
  %v1148 = vsel %vm1132, 1, 0
  %v1149 = vsel %vm1133, 1, 0
  %v1150 = vsel %vm1134, 1, 0
  %v1151 = vsel %vm1135, 1, 0
  %v1152 = vsel %vm1136, 1, 0
  %v1153 = vsel %vm1137, 1, 0
  %v1154 = vsel %vm1138, 1, 0
  %v1155 = vsel %vm1139, 1, 0
  %v1156 = vsel %vm1140, 1, 0
  %v1157 = vsel %vm1141, 1, 0
  %v1158 = vsel %vm1142, 1, 0
  %v1159 = vsel %vm1143, 1, 0
  %v1160 = vcvt.s32.f32 %v1144
  %v1161 = vcvt.s32.f32 %v1145
  %v1162 = vcvt.s32.f32 %v1146
  %v1163 = vcvt.s32.f32 %v1147
  %v1164 = vcvt.s32.f32 %v1148
  %v1165 = vcvt.s32.f32 %v1149
  %v1166 = vcvt.s32.f32 %v1150
  %v1167 = vcvt.s32.f32 %v1151
  %v1168 = vcvt.s32.f32 %v1152
  %v1169 = vcvt.s32.f32 %v1153
  %v1170 = vcvt.s32.f32 %v1154
  %v1171 = vcvt.s32.f32 %v1155
  %v1172 = vcvt.s32.f32 %v1156
  %v1173 = vcvt.s32.f32 %v1157
  %v1174 = vcvt.s32.f32 %v1158
  %v1175 = vcvt.s32.f32 %v1159
  %v1176 = vsub.f32 %v1112, %v1160
  %v1177 = vsub.f32 %v1113, %v1161
  %v1178 = vsub.f32 %v1114, %v1162
  %v1179 = vsub.f32 %v1115, %v1163
  %v1180 = vsub.f32 %v1116, %v1164
  %v1181 = vsub.f32 %v1117, %v1165
  %v1182 = vsub.f32 %v1118, %v1166
  %v1183 = vsub.f32 %v1119, %v1167
  %v1184 = vsub.f32 %v1120, %v1168
  %v1185 = vsub.f32 %v1121, %v1169
  %v1186 = vsub.f32 %v1122, %v1170
  %v1187 = vsub.f32 %v1123, %v1171
  %v1188 = vsub.f32 %v1124, %v1172
  %v1189 = vsub.f32 %v1125, %v1173
  %v1190 = vsub.f32 %v1126, %v1174
  %v1191 = vsub.f32 %v1127, %v1175
  %v1192 = vpack.c.bf16 %v1177, %v1176
  %v1193 = vpack.c.bf16 %v1179, %v1178
  %v1194 = vpack.c.bf16 %v1181, %v1180
  %v1195 = vpack.c.bf16 %v1183, %v1182
  %v1196 = vpack.c.bf16 %v1185, %v1184
  %v1197 = vpack.c.bf16 %v1187, %v1186
  %v1198 = vpack.c.bf16 %v1189, %v1188
  %v1199 = vpack.c.bf16 %v1191, %v1190
  %v1201 = vsel %vm323, %v1192, 0
  %v1204 = vsel %vm323, %v1193, 0
  %v1207 = vsel %vm323, %v1194, 0
  %v1210 = vsel %vm323, %v1195, 0
  %1212 = vmatprep.subr.bf16.mxu0 0
  %1213 = vmatpush1.bf16.msra.mxu0 0
  %1214 = vmatprep.subr.bf16.mxu0 0
  %1215 = vmatpush1.bf16.msra.mxu0 0
  %1216 = vmatprep.subr.bf16.mxu0 0
  %1217 = vmatpush1.bf16.msra.mxu0 0
  %1218 = vmatprep.subr.bf16.mxu0 0
  %1219 = vmatpush1.bf16.msra.mxu0 0
  %1220 = vmatprep.subr.bf16.mxu0 0
  %1221 = vmatpush1.bf16.msra.mxu0 %v318
  %1222 = vmatprep.subr.bf16.mxu0 0
  %1223 = vmatpush1.bf16.msra.mxu0 %v317
  %1224 = vmatprep.subr.bf16.mxu0 0
  %1225 = vmatpush1.bf16.msra.mxu0 %v316
  %1226 = vmatprep.subr.bf16.mxu0 0
  %1227 = vmatpush1.bf16.msra.mxu0 %v315
  %1228 = vmatprep.subr.bf16.mxu0 0
  %1229 = vmatpush2.bf16.msra.mxu0 0
  %1230 = vmatprep.subr.bf16.mxu0 0
  %1231 = vmatpush2.bf16.msra.mxu0 0
  %1232 = vmatprep.subr.bf16.mxu0 0
  %1233 = vmatpush2.bf16.msra.mxu0 0
  %1234 = vmatprep.subr.bf16.mxu0 0
  %1235 = vmatpush2.bf16.msra.mxu0 0
  %1236 = vmatprep.subr.bf16.mxu0 0
  %1237 = vmatpush2.bf16.msra.mxu0 0
  %1238 = vmatprep.subr.bf16.mxu0 0
  %1239 = vmatpush2.bf16.msra.mxu0 0
  %1240 = vmatprep.subr.bf16.mxu0 0
  %1241 = vmatpush2.bf16.msra.mxu0 0
  %1242 = vmatprep.subr.bf16.mxu0 0
  %1243 = vmatpush2.bf16.msra.mxu0 0
  %1244 = vmatprep.mubr.bf16.mxu0 0
  %1245 = vmatmul.mubr.bf16.gmra.mxu0 %v1201
  %v1246 = vpop.f32.mrf.mxu0
  %v1247 = vadd.f32 0.0, %v1246
  %v1248 = vpop.f32.mrf.mxu0
  %v1249 = vpop.f32.mrf.mxu0
  %v1250 = vadd.f32 0.0, %v1249
  %v1251 = vpop.f32.mrf.mxu0
  %1252 = vmatprep.mubr.bf16.mxu0 0
  %1253 = vmatmul.mubr.bf16.gmra.mxu0 %v1204
  %v1254 = vpop.f32.mrf.mxu0
  %v1255 = vadd.f32 0.0, %v1254
  %v1256 = vpop.f32.mrf.mxu0
  %v1257 = vpop.f32.mrf.mxu0
  %v1258 = vadd.f32 0.0, %v1257
  %v1259 = vpop.f32.mrf.mxu0
  %1260 = vmatprep.mubr.bf16.mxu0 0
  %1261 = vmatmul.mubr.bf16.gmra.mxu0 %v1207
  %v1262 = vpop.f32.mrf.mxu0
  %v1263 = vadd.f32 0.0, %v1262
  %v1264 = vpop.f32.mrf.mxu0
  %v1265 = vpop.f32.mrf.mxu0
  %v1266 = vadd.f32 0.0, %v1265
  %v1267 = vpop.f32.mrf.mxu0
  %1268 = vmatprep.mubr.bf16.mxu0 0
  %1269 = vmatmul.mubr.bf16.gmra.mxu0 %v1210
  %v1270 = vpop.f32.mrf.mxu0
  %v1271 = vadd.f32 0.0, %v1270
  %v1272 = vpop.f32.mrf.mxu0
  %v1273 = vpop.f32.mrf.mxu0
  %v1274 = vadd.f32 0.0, %v1273
  %v1275 = vpop.f32.mrf.mxu0
  %1276 = vdwg.mxu0
  %v1278 = vsel %vm323, %v1196, 0
  %v1281 = vsel %vm323, %v1197, 0
  %v1284 = vsel %vm323, %v1198, 0
  %v1287 = vsel %vm323, %v1199, 0
  %1289 = vmatprep.subr.bf16.mxu0 0
  %1290 = vmatpush1.bf16.msra.mxu0 0
  %1291 = vmatprep.subr.bf16.mxu0 0
  %1292 = vmatpush1.bf16.msra.mxu0 0
  %1293 = vmatprep.subr.bf16.mxu0 0
  %1294 = vmatpush1.bf16.msra.mxu0 0
  %1295 = vmatprep.subr.bf16.mxu0 0
  %1296 = vmatpush1.bf16.msra.mxu0 0
  %1297 = vmatprep.subr.bf16.mxu0 0
  %1298 = vmatpush1.bf16.msra.mxu0 %v420
  %1299 = vmatprep.subr.bf16.mxu0 0
  %1300 = vmatpush1.bf16.msra.mxu0 %v419
  %1301 = vmatprep.subr.bf16.mxu0 0
  %1302 = vmatpush1.bf16.msra.mxu0 %v418
  %1303 = vmatprep.subr.bf16.mxu0 0
  %1304 = vmatpush1.bf16.msra.mxu0 %v417
  %1305 = vmatprep.subr.bf16.mxu0 0
  %1306 = vmatpush2.bf16.msra.mxu0 0
  %1307 = vmatprep.subr.bf16.mxu0 0
  %1308 = vmatpush2.bf16.msra.mxu0 0
  %1309 = vmatprep.subr.bf16.mxu0 0
  %1310 = vmatpush2.bf16.msra.mxu0 0
  %1311 = vmatprep.subr.bf16.mxu0 0
  %1312 = vmatpush2.bf16.msra.mxu0 0
  %1313 = vmatprep.subr.bf16.mxu0 0
  %1314 = vmatpush2.bf16.msra.mxu0 0
  %1315 = vmatprep.subr.bf16.mxu0 0
  %1316 = vmatpush2.bf16.msra.mxu0 0
  %1317 = vmatprep.subr.bf16.mxu0 0
  %1318 = vmatpush2.bf16.msra.mxu0 0
  %1319 = vmatprep.subr.bf16.mxu0 0
  %1320 = vmatpush2.bf16.msra.mxu0 0
  %1321 = vmatprep.mubr.bf16.mxu0 0
  %1322 = vmatmul.mubr.bf16.gmra.mxu0 %v1278
  %v1323 = vpop.f32.mrf.mxu0
  %v1324 = vadd.f32 0.0, %v1323
  %v1325 = vpop.f32.mrf.mxu0
  %v1326 = vpop.f32.mrf.mxu0
  %v1327 = vadd.f32 0.0, %v1326
  %v1328 = vpop.f32.mrf.mxu0
  %1329 = vmatprep.mubr.bf16.mxu0 0
  %1330 = vmatmul.mubr.bf16.gmra.mxu0 %v1281
  %v1331 = vpop.f32.mrf.mxu0
  %v1332 = vadd.f32 0.0, %v1331
  %v1333 = vpop.f32.mrf.mxu0
  %v1334 = vpop.f32.mrf.mxu0
  %v1335 = vadd.f32 0.0, %v1334
  %v1336 = vpop.f32.mrf.mxu0
  %1337 = vmatprep.mubr.bf16.mxu0 0
  %1338 = vmatmul.mubr.bf16.gmra.mxu0 %v1284
  %v1339 = vpop.f32.mrf.mxu0
  %v1340 = vadd.f32 0.0, %v1339
  %v1341 = vpop.f32.mrf.mxu0
  %v1342 = vpop.f32.mrf.mxu0
  %v1343 = vadd.f32 0.0, %v1342
  %v1344 = vpop.f32.mrf.mxu0
  %1345 = vmatprep.mubr.bf16.mxu0 0
  %1346 = vmatmul.mubr.bf16.gmra.mxu0 %v1287
  %v1347 = vpop.f32.mrf.mxu0
  %v1348 = vadd.f32 0.0, %v1347
  %v1349 = vpop.f32.mrf.mxu0
  %v1350 = vpop.f32.mrf.mxu0
  %v1351 = vadd.f32 0.0, %v1350
  %v1352 = vpop.f32.mrf.mxu0
  %1353 = vdwg.mxu0
  %v1354 = vmax.f32 %v920, %v1247
  %v1355 = vmax.f32 %v921, %v1250
  %v1356 = vmax.f32 %v922, %v1255
  %v1357 = vmax.f32 %v923, %v1258
  %v1358 = vmax.f32 %v924, %v1263
  %v1359 = vmax.f32 %v925, %v1266
  %v1360 = vmax.f32 %v926, %v1271
  %v1361 = vmax.f32 %v927, %v1274
  %v1362 = vmax.f32 %v928, %v1324
  %v1363 = vmax.f32 %v929, %v1327
  %v1364 = vmax.f32 %v930, %v1332
  %v1365 = vmax.f32 %v931, %v1335
  %v1366 = vmax.f32 %v932, %v1340
  %v1367 = vmax.f32 %v933, %v1343
  %v1368 = vmax.f32 %v934, %v1348
  %v1369 = vmax.f32 %v935, %v1351
  %s1370 = scalar_lea.vmem %s1, 12
  %v1371 = vld [vmem:[%s1370] sm:$0x3]
  %v1372 = vlaneseq
  %v1373 = vshrl.u32 %v1372, 7
  %v1374 = vsub.s32 0, %v1373
  %v1375 = vrot.slane %v1371, %v1374
  %1377 = vbcast.lane.b32.xlu0 %v1375, 256
  %v1378 = vpop.permute.xlu0 %1377
  %s1380 = sor.u32 256, 8
  %1381 = vbcast.lane.b32.xlu0 %v1375, %s1380
  %v1382 = vpop.permute.xlu0 %1381
  %s1384 = sor.u32 256, 16
  %1385 = vbcast.lane.b32.xlu0 %v1375, %s1384
  %v1386 = vpop.permute.xlu0 %1385
  %s1388 = sor.u32 256, 24
  %1389 = vbcast.lane.b32.xlu0 %v1375, %s1388
  %v1390 = vpop.permute.xlu0 %1389
  %s1392 = sor.u32 256, 32
  %1393 = vbcast.lane.b32.xlu0 %v1375, %s1392
  %v1394 = vpop.permute.xlu0 %1393
  %s1396 = sor.u32 256, 40
  %1397 = vbcast.lane.b32.xlu0 %v1375, %s1396
  %v1398 = vpop.permute.xlu0 %1397
  %s1400 = sor.u32 256, 48
  %1401 = vbcast.lane.b32.xlu0 %v1375, %s1400
  %v1402 = vpop.permute.xlu0 %1401
  %s1404 = sor.u32 256, 56
  %1405 = vbcast.lane.b32.xlu0 %v1375, %s1404
  %v1406 = vpop.permute.xlu0 %1405
  %v1407 = vlaneseq
  %v1408 = vshrl.u32 %v1407, 7
  %v1409 = vsub.s32 1, %v1408
  %v1410 = vrot.slane %v1371, %v1409
  %1412 = vbcast.lane.b32.xlu0 %v1410, 256
  %v1413 = vpop.permute.xlu0 %1412
  %s1415 = sor.u32 256, 8
  %1416 = vbcast.lane.b32.xlu0 %v1410, %s1415
  %v1417 = vpop.permute.xlu0 %1416
  %s1419 = sor.u32 256, 16
  %1420 = vbcast.lane.b32.xlu0 %v1410, %s1419
  %v1421 = vpop.permute.xlu0 %1420
  %s1423 = sor.u32 256, 24
  %1424 = vbcast.lane.b32.xlu0 %v1410, %s1423
  %v1425 = vpop.permute.xlu0 %1424
  %s1427 = sor.u32 256, 32
  %1428 = vbcast.lane.b32.xlu0 %v1410, %s1427
  %v1429 = vpop.permute.xlu0 %1428
  %s1431 = sor.u32 256, 40
  %1432 = vbcast.lane.b32.xlu0 %v1410, %s1431
  %v1433 = vpop.permute.xlu0 %1432
  %s1435 = sor.u32 256, 48
  %1436 = vbcast.lane.b32.xlu0 %v1410, %s1435
  %v1437 = vpop.permute.xlu0 %1436
  %s1439 = sor.u32 256, 56
  %1440 = vbcast.lane.b32.xlu0 %v1410, %s1439
  %v1441 = vpop.permute.xlu0 %1440
  %s1442 = scalar_lea.vmem %s1, 14
  %v1443 = vld [vmem:[%s1442] sm:$0x3]
  %v1444 = vlaneseq
  %v1445 = vshrl.u32 %v1444, 7
  %v1446 = vsub.s32 0, %v1445
  %v1447 = vrot.slane %v1443, %v1446
  %1449 = vbcast.lane.b32.xlu0 %v1447, 256
  %v1450 = vpop.permute.xlu0 %1449
  %s1452 = sor.u32 256, 8
  %1453 = vbcast.lane.b32.xlu0 %v1447, %s1452
  %v1454 = vpop.permute.xlu0 %1453
  %s1456 = sor.u32 256, 16
  %1457 = vbcast.lane.b32.xlu0 %v1447, %s1456
  %v1458 = vpop.permute.xlu0 %1457
  %s1460 = sor.u32 256, 24
  %1461 = vbcast.lane.b32.xlu0 %v1447, %s1460
  %v1462 = vpop.permute.xlu0 %1461
  %s1464 = sor.u32 256, 32
  %1465 = vbcast.lane.b32.xlu0 %v1447, %s1464
  %v1466 = vpop.permute.xlu0 %1465
  %s1468 = sor.u32 256, 40
  %1469 = vbcast.lane.b32.xlu0 %v1447, %s1468
  %v1470 = vpop.permute.xlu0 %1469
  %s1472 = sor.u32 256, 48
  %1473 = vbcast.lane.b32.xlu0 %v1447, %s1472
  %v1474 = vpop.permute.xlu0 %1473
  %s1476 = sor.u32 256, 56
  %1477 = vbcast.lane.b32.xlu0 %v1447, %s1476
  %v1478 = vpop.permute.xlu0 %1477
  %v1479 = vlaneseq
  %v1480 = vshrl.u32 %v1479, 7
  %v1481 = vsub.s32 1, %v1480
  %v1482 = vrot.slane %v1443, %v1481
  %1484 = vbcast.lane.b32.xlu0 %v1482, 256
  %v1485 = vpop.permute.xlu0 %1484
  %s1487 = sor.u32 256, 8
  %1488 = vbcast.lane.b32.xlu0 %v1482, %s1487
  %v1489 = vpop.permute.xlu0 %1488
  %s1491 = sor.u32 256, 16
  %1492 = vbcast.lane.b32.xlu0 %v1482, %s1491
  %v1493 = vpop.permute.xlu0 %1492
  %s1495 = sor.u32 256, 24
  %1496 = vbcast.lane.b32.xlu0 %v1482, %s1495
  %v1497 = vpop.permute.xlu0 %1496
  %s1499 = sor.u32 256, 32
  %1500 = vbcast.lane.b32.xlu0 %v1482, %s1499
  %v1501 = vpop.permute.xlu0 %1500
  %s1503 = sor.u32 256, 40
  %1504 = vbcast.lane.b32.xlu0 %v1482, %s1503
  %v1505 = vpop.permute.xlu0 %1504
  %s1507 = sor.u32 256, 48
  %1508 = vbcast.lane.b32.xlu0 %v1482, %s1507
  %v1509 = vpop.permute.xlu0 %1508
  %s1511 = sor.u32 256, 56
  %1512 = vbcast.lane.b32.xlu0 %v1482, %s1511
  %v1513 = vpop.permute.xlu0 %1512
  %vm1514 = vcmp.eq.s32.totalorder %v1378, %v35
  %vm1515 = vcmp.eq.s32.totalorder %v1382, %v35
  %vm1516 = vcmp.eq.s32.totalorder %v1386, %v35
  %vm1517 = vcmp.eq.s32.totalorder %v1390, %v35
  %vm1518 = vcmp.eq.s32.totalorder %v1394, %v35
  %vm1519 = vcmp.eq.s32.totalorder %v1398, %v35
  %vm1520 = vcmp.eq.s32.totalorder %v1402, %v35
  %vm1521 = vcmp.eq.s32.totalorder %v1406, %v35
  %vm1522 = vcmp.eq.s32.totalorder %v1413, %v35
  %vm1523 = vcmp.eq.s32.totalorder %v1417, %v35
  %vm1524 = vcmp.eq.s32.totalorder %v1421, %v35
  %vm1525 = vcmp.eq.s32.totalorder %v1425, %v35
  %vm1526 = vcmp.eq.s32.totalorder %v1429, %v35
  %vm1527 = vcmp.eq.s32.totalorder %v1433, %v35
  %vm1528 = vcmp.eq.s32.totalorder %v1437, %v35
  %vm1529 = vcmp.eq.s32.totalorder %v1441, %v35
  %v1530 = vsel %vm1514, 1, 0
  %v1531 = vsel %vm1515, 1, 0
  %v1532 = vsel %vm1516, 1, 0
  %v1533 = vsel %vm1517, 1, 0
  %v1534 = vsel %vm1518, 1, 0
  %v1535 = vsel %vm1519, 1, 0
  %v1536 = vsel %vm1520, 1, 0
  %v1537 = vsel %vm1521, 1, 0
  %v1538 = vsel %vm1522, 1, 0
  %v1539 = vsel %vm1523, 1, 0
  %v1540 = vsel %vm1524, 1, 0
  %v1541 = vsel %vm1525, 1, 0
  %v1542 = vsel %vm1526, 1, 0
  %v1543 = vsel %vm1527, 1, 0
  %v1544 = vsel %vm1528, 1, 0
  %v1545 = vsel %vm1529, 1, 0
  %v1546 = vcvt.s32.f32 %v1530
  %v1547 = vcvt.s32.f32 %v1531
  %v1548 = vcvt.s32.f32 %v1532
  %v1549 = vcvt.s32.f32 %v1533
  %v1550 = vcvt.s32.f32 %v1534
  %v1551 = vcvt.s32.f32 %v1535
  %v1552 = vcvt.s32.f32 %v1536
  %v1553 = vcvt.s32.f32 %v1537
  %v1554 = vcvt.s32.f32 %v1538
  %v1555 = vcvt.s32.f32 %v1539
  %v1556 = vcvt.s32.f32 %v1540
  %v1557 = vcvt.s32.f32 %v1541
  %v1558 = vcvt.s32.f32 %v1542
  %v1559 = vcvt.s32.f32 %v1543
  %v1560 = vcvt.s32.f32 %v1544
  %v1561 = vcvt.s32.f32 %v1545
  %vm1562 = vcmp.eq.s32.totalorder %v1450, %v35
  %vm1563 = vcmp.eq.s32.totalorder %v1454, %v35
  %vm1564 = vcmp.eq.s32.totalorder %v1458, %v35
  %vm1565 = vcmp.eq.s32.totalorder %v1462, %v35
  %vm1566 = vcmp.eq.s32.totalorder %v1466, %v35
  %vm1567 = vcmp.eq.s32.totalorder %v1470, %v35
  %vm1568 = vcmp.eq.s32.totalorder %v1474, %v35
  %vm1569 = vcmp.eq.s32.totalorder %v1478, %v35
  %vm1570 = vcmp.eq.s32.totalorder %v1485, %v35
  %vm1571 = vcmp.eq.s32.totalorder %v1489, %v35
  %vm1572 = vcmp.eq.s32.totalorder %v1493, %v35
  %vm1573 = vcmp.eq.s32.totalorder %v1497, %v35
  %vm1574 = vcmp.eq.s32.totalorder %v1501, %v35
  %vm1575 = vcmp.eq.s32.totalorder %v1505, %v35
  %vm1576 = vcmp.eq.s32.totalorder %v1509, %v35
  %vm1577 = vcmp.eq.s32.totalorder %v1513, %v35
  %v1578 = vsel %vm1562, 1, 0
  %v1579 = vsel %vm1563, 1, 0
  %v1580 = vsel %vm1564, 1, 0
  %v1581 = vsel %vm1565, 1, 0
  %v1582 = vsel %vm1566, 1, 0
  %v1583 = vsel %vm1567, 1, 0
  %v1584 = vsel %vm1568, 1, 0
  %v1585 = vsel %vm1569, 1, 0
  %v1586 = vsel %vm1570, 1, 0
  %v1587 = vsel %vm1571, 1, 0
  %v1588 = vsel %vm1572, 1, 0
  %v1589 = vsel %vm1573, 1, 0
  %v1590 = vsel %vm1574, 1, 0
  %v1591 = vsel %vm1575, 1, 0
  %v1592 = vsel %vm1576, 1, 0
  %v1593 = vsel %vm1577, 1, 0
  %v1594 = vcvt.s32.f32 %v1578
  %v1595 = vcvt.s32.f32 %v1579
  %v1596 = vcvt.s32.f32 %v1580
  %v1597 = vcvt.s32.f32 %v1581
  %v1598 = vcvt.s32.f32 %v1582
  %v1599 = vcvt.s32.f32 %v1583
  %v1600 = vcvt.s32.f32 %v1584
  %v1601 = vcvt.s32.f32 %v1585
  %v1602 = vcvt.s32.f32 %v1586
  %v1603 = vcvt.s32.f32 %v1587
  %v1604 = vcvt.s32.f32 %v1588
  %v1605 = vcvt.s32.f32 %v1589
  %v1606 = vcvt.s32.f32 %v1590
  %v1607 = vcvt.s32.f32 %v1591
  %v1608 = vcvt.s32.f32 %v1592
  %v1609 = vcvt.s32.f32 %v1593
  %v1610 = vsub.f32 %v1546, %v1594
  %v1611 = vsub.f32 %v1547, %v1595
  %v1612 = vsub.f32 %v1548, %v1596
  %v1613 = vsub.f32 %v1549, %v1597
  %v1614 = vsub.f32 %v1550, %v1598
  %v1615 = vsub.f32 %v1551, %v1599
  %v1616 = vsub.f32 %v1552, %v1600
  %v1617 = vsub.f32 %v1553, %v1601
  %v1618 = vsub.f32 %v1554, %v1602
  %v1619 = vsub.f32 %v1555, %v1603
  %v1620 = vsub.f32 %v1556, %v1604
  %v1621 = vsub.f32 %v1557, %v1605
  %v1622 = vsub.f32 %v1558, %v1606
  %v1623 = vsub.f32 %v1559, %v1607
  %v1624 = vsub.f32 %v1560, %v1608
  %v1625 = vsub.f32 %v1561, %v1609
  %v1626 = vpack.c.bf16 %v1611, %v1610
  %v1627 = vpack.c.bf16 %v1613, %v1612
  %v1628 = vpack.c.bf16 %v1615, %v1614
  %v1629 = vpack.c.bf16 %v1617, %v1616
  %v1630 = vpack.c.bf16 %v1619, %v1618
  %v1631 = vpack.c.bf16 %v1621, %v1620
  %v1632 = vpack.c.bf16 %v1623, %v1622
  %v1633 = vpack.c.bf16 %v1625, %v1624
  %v1635 = vsel %vm323, %v1626, 0
  %v1638 = vsel %vm323, %v1627, 0
  %v1641 = vsel %vm323, %v1628, 0
  %v1644 = vsel %vm323, %v1629, 0
  %1646 = vmatprep.subr.bf16.mxu0 0
  %1647 = vmatpush1.bf16.msra.mxu0 0
  %1648 = vmatprep.subr.bf16.mxu0 0
  %1649 = vmatpush1.bf16.msra.mxu0 0
  %1650 = vmatprep.subr.bf16.mxu0 0
  %1651 = vmatpush1.bf16.msra.mxu0 0
  %1652 = vmatprep.subr.bf16.mxu0 0
  %1653 = vmatpush1.bf16.msra.mxu0 0
  %1654 = vmatprep.subr.bf16.mxu0 0
  %1655 = vmatpush1.bf16.msra.mxu0 %v318
  %1656 = vmatprep.subr.bf16.mxu0 0
  %1657 = vmatpush1.bf16.msra.mxu0 %v317
  %1658 = vmatprep.subr.bf16.mxu0 0
  %1659 = vmatpush1.bf16.msra.mxu0 %v316
  %1660 = vmatprep.subr.bf16.mxu0 0
  %1661 = vmatpush1.bf16.msra.mxu0 %v315
  %1662 = vmatprep.subr.bf16.mxu0 0
  %1663 = vmatpush2.bf16.msra.mxu0 0
  %1664 = vmatprep.subr.bf16.mxu0 0
  %1665 = vmatpush2.bf16.msra.mxu0 0
  %1666 = vmatprep.subr.bf16.mxu0 0
  %1667 = vmatpush2.bf16.msra.mxu0 0
  %1668 = vmatprep.subr.bf16.mxu0 0
  %1669 = vmatpush2.bf16.msra.mxu0 0
  %1670 = vmatprep.subr.bf16.mxu0 0
  %1671 = vmatpush2.bf16.msra.mxu0 0
  %1672 = vmatprep.subr.bf16.mxu0 0
  %1673 = vmatpush2.bf16.msra.mxu0 0
  %1674 = vmatprep.subr.bf16.mxu0 0
  %1675 = vmatpush2.bf16.msra.mxu0 0
  %1676 = vmatprep.subr.bf16.mxu0 0
  %1677 = vmatpush2.bf16.msra.mxu0 0
  %1678 = vmatprep.mubr.bf16.mxu0 0
  %1679 = vmatmul.mubr.bf16.gmra.mxu0 %v1635
  %v1680 = vpop.f32.mrf.mxu0
  %v1681 = vadd.f32 0.0, %v1680
  %v1682 = vpop.f32.mrf.mxu0
  %v1683 = vpop.f32.mrf.mxu0
  %v1684 = vadd.f32 0.0, %v1683
  %v1685 = vpop.f32.mrf.mxu0
  %1686 = vmatprep.mubr.bf16.mxu0 0
  %1687 = vmatmul.mubr.bf16.gmra.mxu0 %v1638
  %v1688 = vpop.f32.mrf.mxu0
  %v1689 = vadd.f32 0.0, %v1688
  %v1690 = vpop.f32.mrf.mxu0
  %v1691 = vpop.f32.mrf.mxu0
  %v1692 = vadd.f32 0.0, %v1691
  %v1693 = vpop.f32.mrf.mxu0
  %1694 = vmatprep.mubr.bf16.mxu0 0
  %1695 = vmatmul.mubr.bf16.gmra.mxu0 %v1641
  %v1696 = vpop.f32.mrf.mxu0
  %v1697 = vadd.f32 0.0, %v1696
  %v1698 = vpop.f32.mrf.mxu0
  %v1699 = vpop.f32.mrf.mxu0
  %v1700 = vadd.f32 0.0, %v1699
  %v1701 = vpop.f32.mrf.mxu0
  %1702 = vmatprep.mubr.bf16.mxu0 0
  %1703 = vmatmul.mubr.bf16.gmra.mxu0 %v1644
  %v1704 = vpop.f32.mrf.mxu0
  %v1705 = vadd.f32 0.0, %v1704
  %v1706 = vpop.f32.mrf.mxu0
  %v1707 = vpop.f32.mrf.mxu0
  %v1708 = vadd.f32 0.0, %v1707
  %v1709 = vpop.f32.mrf.mxu0
  %1710 = vdwg.mxu0
  %v1712 = vsel %vm323, %v1630, 0
  %v1715 = vsel %vm323, %v1631, 0
  %v1718 = vsel %vm323, %v1632, 0
  %v1721 = vsel %vm323, %v1633, 0
  %1723 = vmatprep.subr.bf16.mxu0 0
  %1724 = vmatpush1.bf16.msra.mxu0 0
  %1725 = vmatprep.subr.bf16.mxu0 0
  %1726 = vmatpush1.bf16.msra.mxu0 0
  %1727 = vmatprep.subr.bf16.mxu0 0
  %1728 = vmatpush1.bf16.msra.mxu0 0
  %1729 = vmatprep.subr.bf16.mxu0 0
  %1730 = vmatpush1.bf16.msra.mxu0 0
  %1731 = vmatprep.subr.bf16.mxu0 0
  %1732 = vmatpush1.bf16.msra.mxu0 %v420
  %1733 = vmatprep.subr.bf16.mxu0 0
  %1734 = vmatpush1.bf16.msra.mxu0 %v419
  %1735 = vmatprep.subr.bf16.mxu0 0
  %1736 = vmatpush1.bf16.msra.mxu0 %v418
  %1737 = vmatprep.subr.bf16.mxu0 0
  %1738 = vmatpush1.bf16.msra.mxu0 %v417
  %1739 = vmatprep.subr.bf16.mxu0 0
  %1740 = vmatpush2.bf16.msra.mxu0 0
  %1741 = vmatprep.subr.bf16.mxu0 0
  %1742 = vmatpush2.bf16.msra.mxu0 0
  %1743 = vmatprep.subr.bf16.mxu0 0
  %1744 = vmatpush2.bf16.msra.mxu0 0
  %1745 = vmatprep.subr.bf16.mxu0 0
  %1746 = vmatpush2.bf16.msra.mxu0 0
  %1747 = vmatprep.subr.bf16.mxu0 0
  %1748 = vmatpush2.bf16.msra.mxu0 0
  %1749 = vmatprep.subr.bf16.mxu0 0
  %1750 = vmatpush2.bf16.msra.mxu0 0
  %1751 = vmatprep.subr.bf16.mxu0 0
  %1752 = vmatpush2.bf16.msra.mxu0 0
  %1753 = vmatprep.subr.bf16.mxu0 0
  %1754 = vmatpush2.bf16.msra.mxu0 0
  %1755 = vmatprep.mubr.bf16.mxu0 0
  %1756 = vmatmul.mubr.bf16.gmra.mxu0 %v1712
  %v1757 = vpop.f32.mrf.mxu0
  %v1758 = vadd.f32 0.0, %v1757
  %v1759 = vpop.f32.mrf.mxu0
  %v1760 = vpop.f32.mrf.mxu0
  %v1761 = vadd.f32 0.0, %v1760
  %v1762 = vpop.f32.mrf.mxu0
  %1763 = vmatprep.mubr.bf16.mxu0 0
  %1764 = vmatmul.mubr.bf16.gmra.mxu0 %v1715
  %v1765 = vpop.f32.mrf.mxu0
  %v1766 = vadd.f32 0.0, %v1765
  %v1767 = vpop.f32.mrf.mxu0
  %v1768 = vpop.f32.mrf.mxu0
  %v1769 = vadd.f32 0.0, %v1768
  %v1770 = vpop.f32.mrf.mxu0
  %1771 = vmatprep.mubr.bf16.mxu0 0
  %1772 = vmatmul.mubr.bf16.gmra.mxu0 %v1718
  %v1773 = vpop.f32.mrf.mxu0
  %v1774 = vadd.f32 0.0, %v1773
  %v1775 = vpop.f32.mrf.mxu0
  %v1776 = vpop.f32.mrf.mxu0
  %v1777 = vadd.f32 0.0, %v1776
  %v1778 = vpop.f32.mrf.mxu0
  %1779 = vmatprep.mubr.bf16.mxu0 0
  %1780 = vmatmul.mubr.bf16.gmra.mxu0 %v1721
  %v1781 = vpop.f32.mrf.mxu0
  %v1782 = vadd.f32 0.0, %v1781
  %v1783 = vpop.f32.mrf.mxu0
  %v1784 = vpop.f32.mrf.mxu0
  %v1785 = vadd.f32 0.0, %v1784
  %v1786 = vpop.f32.mrf.mxu0
  %1787 = vdwg.mxu0
  %v1788 = vmax.f32 %v1354, %v1681
  %v1789 = vmax.f32 %v1355, %v1684
  %v1790 = vmax.f32 %v1356, %v1689
  %v1791 = vmax.f32 %v1357, %v1692
  %v1792 = vmax.f32 %v1358, %v1697
  %v1793 = vmax.f32 %v1359, %v1700
  %v1794 = vmax.f32 %v1360, %v1705
  %v1795 = vmax.f32 %v1361, %v1708
  %v1796 = vmax.f32 %v1362, %v1758
  %v1797 = vmax.f32 %v1363, %v1761
  %v1798 = vmax.f32 %v1364, %v1766
  %v1799 = vmax.f32 %v1365, %v1769
  %v1800 = vmax.f32 %v1366, %v1774
  %v1801 = vmax.f32 %v1367, %v1777
  %v1802 = vmax.f32 %v1368, %v1782
  %v1803 = vmax.f32 %v1369, %v1785
  %s1804 = scalar_lea.vmem %s1, 16
  %v1805 = vld [vmem:[%s1804] sm:$0x3]
  %v1806 = vlaneseq
  %v1807 = vshrl.u32 %v1806, 7
  %v1808 = vsub.s32 0, %v1807
  %v1809 = vrot.slane %v1805, %v1808
  %1811 = vbcast.lane.b32.xlu0 %v1809, 256
  %v1812 = vpop.permute.xlu0 %1811
  %s1814 = sor.u32 256, 8
  %1815 = vbcast.lane.b32.xlu0 %v1809, %s1814
  %v1816 = vpop.permute.xlu0 %1815
  %s1818 = sor.u32 256, 16
  %1819 = vbcast.lane.b32.xlu0 %v1809, %s1818
  %v1820 = vpop.permute.xlu0 %1819
  %s1822 = sor.u32 256, 24
  %1823 = vbcast.lane.b32.xlu0 %v1809, %s1822
  %v1824 = vpop.permute.xlu0 %1823
  %s1826 = sor.u32 256, 32
  %1827 = vbcast.lane.b32.xlu0 %v1809, %s1826
  %v1828 = vpop.permute.xlu0 %1827
  %s1830 = sor.u32 256, 40
  %1831 = vbcast.lane.b32.xlu0 %v1809, %s1830
  %v1832 = vpop.permute.xlu0 %1831
  %s1834 = sor.u32 256, 48
  %1835 = vbcast.lane.b32.xlu0 %v1809, %s1834
  %v1836 = vpop.permute.xlu0 %1835
  %s1838 = sor.u32 256, 56
  %1839 = vbcast.lane.b32.xlu0 %v1809, %s1838
  %v1840 = vpop.permute.xlu0 %1839
  %v1841 = vlaneseq
  %v1842 = vshrl.u32 %v1841, 7
  %v1843 = vsub.s32 1, %v1842
  %v1844 = vrot.slane %v1805, %v1843
  %1846 = vbcast.lane.b32.xlu0 %v1844, 256
  %v1847 = vpop.permute.xlu0 %1846
  %s1849 = sor.u32 256, 8
  %1850 = vbcast.lane.b32.xlu0 %v1844, %s1849
  %v1851 = vpop.permute.xlu0 %1850
  %s1853 = sor.u32 256, 16
  %1854 = vbcast.lane.b32.xlu0 %v1844, %s1853
  %v1855 = vpop.permute.xlu0 %1854
  %s1857 = sor.u32 256, 24
  %1858 = vbcast.lane.b32.xlu0 %v1844, %s1857
  %v1859 = vpop.permute.xlu0 %1858
  %s1861 = sor.u32 256, 32
  %1862 = vbcast.lane.b32.xlu0 %v1844, %s1861
  %v1863 = vpop.permute.xlu0 %1862
  %s1865 = sor.u32 256, 40
  %1866 = vbcast.lane.b32.xlu0 %v1844, %s1865
  %v1867 = vpop.permute.xlu0 %1866
  %s1869 = sor.u32 256, 48
  %1870 = vbcast.lane.b32.xlu0 %v1844, %s1869
  %v1871 = vpop.permute.xlu0 %1870
  %s1873 = sor.u32 256, 56
  %1874 = vbcast.lane.b32.xlu0 %v1844, %s1873
  %v1875 = vpop.permute.xlu0 %1874
  %s1876 = scalar_lea.vmem %s1, 18
  %v1877 = vld [vmem:[%s1876] sm:$0x3]
  %v1878 = vlaneseq
  %v1879 = vshrl.u32 %v1878, 7
  %v1880 = vsub.s32 0, %v1879
  %v1881 = vrot.slane %v1877, %v1880
  %1883 = vbcast.lane.b32.xlu0 %v1881, 256
  %v1884 = vpop.permute.xlu0 %1883
  %s1886 = sor.u32 256, 8
  %1887 = vbcast.lane.b32.xlu0 %v1881, %s1886
  %v1888 = vpop.permute.xlu0 %1887
  %s1890 = sor.u32 256, 16
  %1891 = vbcast.lane.b32.xlu0 %v1881, %s1890
  %v1892 = vpop.permute.xlu0 %1891
  %s1894 = sor.u32 256, 24
  %1895 = vbcast.lane.b32.xlu0 %v1881, %s1894
  %v1896 = vpop.permute.xlu0 %1895
  %s1898 = sor.u32 256, 32
  %1899 = vbcast.lane.b32.xlu0 %v1881, %s1898
  %v1900 = vpop.permute.xlu0 %1899
  %s1902 = sor.u32 256, 40
  %1903 = vbcast.lane.b32.xlu0 %v1881, %s1902
  %v1904 = vpop.permute.xlu0 %1903
  %s1906 = sor.u32 256, 48
  %1907 = vbcast.lane.b32.xlu0 %v1881, %s1906
  %v1908 = vpop.permute.xlu0 %1907
  %s1910 = sor.u32 256, 56
  %1911 = vbcast.lane.b32.xlu0 %v1881, %s1910
  %v1912 = vpop.permute.xlu0 %1911
  %v1913 = vlaneseq
  %v1914 = vshrl.u32 %v1913, 7
  %v1915 = vsub.s32 1, %v1914
  %v1916 = vrot.slane %v1877, %v1915
  %1918 = vbcast.lane.b32.xlu0 %v1916, 256
  %v1919 = vpop.permute.xlu0 %1918
  %s1921 = sor.u32 256, 8
  %1922 = vbcast.lane.b32.xlu0 %v1916, %s1921
  %v1923 = vpop.permute.xlu0 %1922
  %s1925 = sor.u32 256, 16
  %1926 = vbcast.lane.b32.xlu0 %v1916, %s1925
  %v1927 = vpop.permute.xlu0 %1926
  %s1929 = sor.u32 256, 24
  %1930 = vbcast.lane.b32.xlu0 %v1916, %s1929
  %v1931 = vpop.permute.xlu0 %1930
  %s1933 = sor.u32 256, 32
  %1934 = vbcast.lane.b32.xlu0 %v1916, %s1933
  %v1935 = vpop.permute.xlu0 %1934
  %s1937 = sor.u32 256, 40
  %1938 = vbcast.lane.b32.xlu0 %v1916, %s1937
  %v1939 = vpop.permute.xlu0 %1938
  %s1941 = sor.u32 256, 48
  %1942 = vbcast.lane.b32.xlu0 %v1916, %s1941
  %v1943 = vpop.permute.xlu0 %1942
  %s1945 = sor.u32 256, 56
  %1946 = vbcast.lane.b32.xlu0 %v1916, %s1945
  %v1947 = vpop.permute.xlu0 %1946
  %vm1948 = vcmp.eq.s32.totalorder %v1812, %v35
  %vm1949 = vcmp.eq.s32.totalorder %v1816, %v35
  %vm1950 = vcmp.eq.s32.totalorder %v1820, %v35
  %vm1951 = vcmp.eq.s32.totalorder %v1824, %v35
  %vm1952 = vcmp.eq.s32.totalorder %v1828, %v35
  %vm1953 = vcmp.eq.s32.totalorder %v1832, %v35
  %vm1954 = vcmp.eq.s32.totalorder %v1836, %v35
  %vm1955 = vcmp.eq.s32.totalorder %v1840, %v35
  %vm1956 = vcmp.eq.s32.totalorder %v1847, %v35
  %vm1957 = vcmp.eq.s32.totalorder %v1851, %v35
  %vm1958 = vcmp.eq.s32.totalorder %v1855, %v35
  %vm1959 = vcmp.eq.s32.totalorder %v1859, %v35
  %vm1960 = vcmp.eq.s32.totalorder %v1863, %v35
  %vm1961 = vcmp.eq.s32.totalorder %v1867, %v35
  %vm1962 = vcmp.eq.s32.totalorder %v1871, %v35
  %vm1963 = vcmp.eq.s32.totalorder %v1875, %v35
  %v1964 = vsel %vm1948, 1, 0
  %v1965 = vsel %vm1949, 1, 0
  %v1966 = vsel %vm1950, 1, 0
  %v1967 = vsel %vm1951, 1, 0
  %v1968 = vsel %vm1952, 1, 0
  %v1969 = vsel %vm1953, 1, 0
  %v1970 = vsel %vm1954, 1, 0
  %v1971 = vsel %vm1955, 1, 0
  %v1972 = vsel %vm1956, 1, 0
  %v1973 = vsel %vm1957, 1, 0
  %v1974 = vsel %vm1958, 1, 0
  %v1975 = vsel %vm1959, 1, 0
  %v1976 = vsel %vm1960, 1, 0
  %v1977 = vsel %vm1961, 1, 0
  %v1978 = vsel %vm1962, 1, 0
  %v1979 = vsel %vm1963, 1, 0
  %v1980 = vcvt.s32.f32 %v1964
  %v1981 = vcvt.s32.f32 %v1965
  %v1982 = vcvt.s32.f32 %v1966
  %v1983 = vcvt.s32.f32 %v1967
  %v1984 = vcvt.s32.f32 %v1968
  %v1985 = vcvt.s32.f32 %v1969
  %v1986 = vcvt.s32.f32 %v1970
  %v1987 = vcvt.s32.f32 %v1971
  %v1988 = vcvt.s32.f32 %v1972
  %v1989 = vcvt.s32.f32 %v1973
  %v1990 = vcvt.s32.f32 %v1974
  %v1991 = vcvt.s32.f32 %v1975
  %v1992 = vcvt.s32.f32 %v1976
  %v1993 = vcvt.s32.f32 %v1977
  %v1994 = vcvt.s32.f32 %v1978
  %v1995 = vcvt.s32.f32 %v1979
  %vm1996 = vcmp.eq.s32.totalorder %v1884, %v35
  %vm1997 = vcmp.eq.s32.totalorder %v1888, %v35
  %vm1998 = vcmp.eq.s32.totalorder %v1892, %v35
  %vm1999 = vcmp.eq.s32.totalorder %v1896, %v35
  %vm2000 = vcmp.eq.s32.totalorder %v1900, %v35
  %vm2001 = vcmp.eq.s32.totalorder %v1904, %v35
  %vm2002 = vcmp.eq.s32.totalorder %v1908, %v35
  %vm2003 = vcmp.eq.s32.totalorder %v1912, %v35
  %vm2004 = vcmp.eq.s32.totalorder %v1919, %v35
  %vm2005 = vcmp.eq.s32.totalorder %v1923, %v35
  %vm2006 = vcmp.eq.s32.totalorder %v1927, %v35
  %vm2007 = vcmp.eq.s32.totalorder %v1931, %v35
  %vm2008 = vcmp.eq.s32.totalorder %v1935, %v35
  %vm2009 = vcmp.eq.s32.totalorder %v1939, %v35
  %vm2010 = vcmp.eq.s32.totalorder %v1943, %v35
  %vm2011 = vcmp.eq.s32.totalorder %v1947, %v35
  %v2012 = vsel %vm1996, 1, 0
  %v2013 = vsel %vm1997, 1, 0
  %v2014 = vsel %vm1998, 1, 0
  %v2015 = vsel %vm1999, 1, 0
  %v2016 = vsel %vm2000, 1, 0
  %v2017 = vsel %vm2001, 1, 0
  %v2018 = vsel %vm2002, 1, 0
  %v2019 = vsel %vm2003, 1, 0
  %v2020 = vsel %vm2004, 1, 0
  %v2021 = vsel %vm2005, 1, 0
  %v2022 = vsel %vm2006, 1, 0
  %v2023 = vsel %vm2007, 1, 0
  %v2024 = vsel %vm2008, 1, 0
  %v2025 = vsel %vm2009, 1, 0
  %v2026 = vsel %vm2010, 1, 0
  %v2027 = vsel %vm2011, 1, 0
  %v2028 = vcvt.s32.f32 %v2012
  %v2029 = vcvt.s32.f32 %v2013
  %v2030 = vcvt.s32.f32 %v2014
  %v2031 = vcvt.s32.f32 %v2015
  %v2032 = vcvt.s32.f32 %v2016
  %v2033 = vcvt.s32.f32 %v2017
  %v2034 = vcvt.s32.f32 %v2018
  %v2035 = vcvt.s32.f32 %v2019
  %v2036 = vcvt.s32.f32 %v2020
  %v2037 = vcvt.s32.f32 %v2021
  %v2038 = vcvt.s32.f32 %v2022
  %v2039 = vcvt.s32.f32 %v2023
  %v2040 = vcvt.s32.f32 %v2024
  %v2041 = vcvt.s32.f32 %v2025
  %v2042 = vcvt.s32.f32 %v2026
  %v2043 = vcvt.s32.f32 %v2027
  %v2044 = vsub.f32 %v1980, %v2028
  %v2045 = vsub.f32 %v1981, %v2029
  %v2046 = vsub.f32 %v1982, %v2030
  %v2047 = vsub.f32 %v1983, %v2031
  %v2048 = vsub.f32 %v1984, %v2032
  %v2049 = vsub.f32 %v1985, %v2033
  %v2050 = vsub.f32 %v1986, %v2034
  %v2051 = vsub.f32 %v1987, %v2035
  %v2052 = vsub.f32 %v1988, %v2036
  %v2053 = vsub.f32 %v1989, %v2037
  %v2054 = vsub.f32 %v1990, %v2038
  %v2055 = vsub.f32 %v1991, %v2039
  %v2056 = vsub.f32 %v1992, %v2040
  %v2057 = vsub.f32 %v1993, %v2041
  %v2058 = vsub.f32 %v1994, %v2042
  %v2059 = vsub.f32 %v1995, %v2043
  %v2060 = vpack.c.bf16 %v2045, %v2044
  %v2061 = vpack.c.bf16 %v2047, %v2046
  %v2062 = vpack.c.bf16 %v2049, %v2048
  %v2063 = vpack.c.bf16 %v2051, %v2050
  %v2064 = vpack.c.bf16 %v2053, %v2052
  %v2065 = vpack.c.bf16 %v2055, %v2054
  %v2066 = vpack.c.bf16 %v2057, %v2056
  %v2067 = vpack.c.bf16 %v2059, %v2058
  %v2069 = vsel %vm323, %v2060, 0
  %v2072 = vsel %vm323, %v2061, 0
  %v2075 = vsel %vm323, %v2062, 0
  %v2078 = vsel %vm323, %v2063, 0
  %2080 = vmatprep.subr.bf16.mxu0 0
  %2081 = vmatpush1.bf16.msra.mxu0 0
  %2082 = vmatprep.subr.bf16.mxu0 0
  %2083 = vmatpush1.bf16.msra.mxu0 0
  %2084 = vmatprep.subr.bf16.mxu0 0
  %2085 = vmatpush1.bf16.msra.mxu0 0
  %2086 = vmatprep.subr.bf16.mxu0 0
  %2087 = vmatpush1.bf16.msra.mxu0 0
  %2088 = vmatprep.subr.bf16.mxu0 0
  %2089 = vmatpush1.bf16.msra.mxu0 %v318
  %2090 = vmatprep.subr.bf16.mxu0 0
  %2091 = vmatpush1.bf16.msra.mxu0 %v317
  %2092 = vmatprep.subr.bf16.mxu0 0
  %2093 = vmatpush1.bf16.msra.mxu0 %v316
  %2094 = vmatprep.subr.bf16.mxu0 0
  %2095 = vmatpush1.bf16.msra.mxu0 %v315
  %2096 = vmatprep.subr.bf16.mxu0 0
  %2097 = vmatpush2.bf16.msra.mxu0 0
  %2098 = vmatprep.subr.bf16.mxu0 0
  %2099 = vmatpush2.bf16.msra.mxu0 0
  %2100 = vmatprep.subr.bf16.mxu0 0
  %2101 = vmatpush2.bf16.msra.mxu0 0
  %2102 = vmatprep.subr.bf16.mxu0 0
  %2103 = vmatpush2.bf16.msra.mxu0 0
  %2104 = vmatprep.subr.bf16.mxu0 0
  %2105 = vmatpush2.bf16.msra.mxu0 0
  %2106 = vmatprep.subr.bf16.mxu0 0
  %2107 = vmatpush2.bf16.msra.mxu0 0
  %2108 = vmatprep.subr.bf16.mxu0 0
  %2109 = vmatpush2.bf16.msra.mxu0 0
  %2110 = vmatprep.subr.bf16.mxu0 0
  %2111 = vmatpush2.bf16.msra.mxu0 0
  %2112 = vmatprep.mubr.bf16.mxu0 0
  %2113 = vmatmul.mubr.bf16.gmra.mxu0 %v2069
  %v2114 = vpop.f32.mrf.mxu0
  %v2115 = vadd.f32 0.0, %v2114
  %v2116 = vpop.f32.mrf.mxu0
  %v2117 = vpop.f32.mrf.mxu0
  %v2118 = vadd.f32 0.0, %v2117
  %v2119 = vpop.f32.mrf.mxu0
  %2120 = vmatprep.mubr.bf16.mxu0 0
  %2121 = vmatmul.mubr.bf16.gmra.mxu0 %v2072
  %v2122 = vpop.f32.mrf.mxu0
  %v2123 = vadd.f32 0.0, %v2122
  %v2124 = vpop.f32.mrf.mxu0
  %v2125 = vpop.f32.mrf.mxu0
  %v2126 = vadd.f32 0.0, %v2125
  %v2127 = vpop.f32.mrf.mxu0
  %2128 = vmatprep.mubr.bf16.mxu0 0
  %2129 = vmatmul.mubr.bf16.gmra.mxu0 %v2075
  %v2130 = vpop.f32.mrf.mxu0
  %v2131 = vadd.f32 0.0, %v2130
  %v2132 = vpop.f32.mrf.mxu0
  %v2133 = vpop.f32.mrf.mxu0
  %v2134 = vadd.f32 0.0, %v2133
  %v2135 = vpop.f32.mrf.mxu0
  %2136 = vmatprep.mubr.bf16.mxu0 0
  %2137 = vmatmul.mubr.bf16.gmra.mxu0 %v2078
  %v2138 = vpop.f32.mrf.mxu0
  %v2139 = vadd.f32 0.0, %v2138
  %v2140 = vpop.f32.mrf.mxu0
  %v2141 = vpop.f32.mrf.mxu0
  %v2142 = vadd.f32 0.0, %v2141
  %v2143 = vpop.f32.mrf.mxu0
  %2144 = vdwg.mxu0
  %v2146 = vsel %vm323, %v2064, 0
  %v2149 = vsel %vm323, %v2065, 0
  %v2152 = vsel %vm323, %v2066, 0
  %v2155 = vsel %vm323, %v2067, 0
  %2157 = vmatprep.subr.bf16.mxu0 0
  %2158 = vmatpush1.bf16.msra.mxu0 0
  %2159 = vmatprep.subr.bf16.mxu0 0
  %2160 = vmatpush1.bf16.msra.mxu0 0
  %2161 = vmatprep.subr.bf16.mxu0 0
  %2162 = vmatpush1.bf16.msra.mxu0 0
  %2163 = vmatprep.subr.bf16.mxu0 0
  %2164 = vmatpush1.bf16.msra.mxu0 0
  %2165 = vmatprep.subr.bf16.mxu0 0
  %2166 = vmatpush1.bf16.msra.mxu0 %v420
  %2167 = vmatprep.subr.bf16.mxu0 0
  %2168 = vmatpush1.bf16.msra.mxu0 %v419
  %2169 = vmatprep.subr.bf16.mxu0 0
  %2170 = vmatpush1.bf16.msra.mxu0 %v418
  %2171 = vmatprep.subr.bf16.mxu0 0
  %2172 = vmatpush1.bf16.msra.mxu0 %v417
  %2173 = vmatprep.subr.bf16.mxu0 0
  %2174 = vmatpush2.bf16.msra.mxu0 0
  %2175 = vmatprep.subr.bf16.mxu0 0
  %2176 = vmatpush2.bf16.msra.mxu0 0
  %2177 = vmatprep.subr.bf16.mxu0 0
  %2178 = vmatpush2.bf16.msra.mxu0 0
  %2179 = vmatprep.subr.bf16.mxu0 0
  %2180 = vmatpush2.bf16.msra.mxu0 0
  %2181 = vmatprep.subr.bf16.mxu0 0
  %2182 = vmatpush2.bf16.msra.mxu0 0
  %2183 = vmatprep.subr.bf16.mxu0 0
  %2184 = vmatpush2.bf16.msra.mxu0 0
  %2185 = vmatprep.subr.bf16.mxu0 0
  %2186 = vmatpush2.bf16.msra.mxu0 0
  %2187 = vmatprep.subr.bf16.mxu0 0
  %2188 = vmatpush2.bf16.msra.mxu0 0
  %2189 = vmatprep.mubr.bf16.mxu0 0
  %2190 = vmatmul.mubr.bf16.gmra.mxu0 %v2146
  %v2191 = vpop.f32.mrf.mxu0
  %v2192 = vadd.f32 0.0, %v2191
  %v2193 = vpop.f32.mrf.mxu0
  %v2194 = vpop.f32.mrf.mxu0
  %v2195 = vadd.f32 0.0, %v2194
  %v2196 = vpop.f32.mrf.mxu0
  %2197 = vmatprep.mubr.bf16.mxu0 0
  %2198 = vmatmul.mubr.bf16.gmra.mxu0 %v2149
  %v2199 = vpop.f32.mrf.mxu0
  %v2200 = vadd.f32 0.0, %v2199
  %v2201 = vpop.f32.mrf.mxu0
  %v2202 = vpop.f32.mrf.mxu0
  %v2203 = vadd.f32 0.0, %v2202
  %v2204 = vpop.f32.mrf.mxu0
  %2205 = vmatprep.mubr.bf16.mxu0 0
  %2206 = vmatmul.mubr.bf16.gmra.mxu0 %v2152
  %v2207 = vpop.f32.mrf.mxu0
  %v2208 = vadd.f32 0.0, %v2207
  %v2209 = vpop.f32.mrf.mxu0
  %v2210 = vpop.f32.mrf.mxu0
  %v2211 = vadd.f32 0.0, %v2210
  %v2212 = vpop.f32.mrf.mxu0
  %2213 = vmatprep.mubr.bf16.mxu0 0
  %2214 = vmatmul.mubr.bf16.gmra.mxu0 %v2155
  %v2215 = vpop.f32.mrf.mxu0
  %v2216 = vadd.f32 0.0, %v2215
  %v2217 = vpop.f32.mrf.mxu0
  %v2218 = vpop.f32.mrf.mxu0
  %v2219 = vadd.f32 0.0, %v2218
  %v2220 = vpop.f32.mrf.mxu0
  %2221 = vdwg.mxu0
  %v2222 = vmax.f32 %v1788, %v2115
  %v2223 = vmax.f32 %v1789, %v2118
  %v2224 = vmax.f32 %v1790, %v2123
  %v2225 = vmax.f32 %v1791, %v2126
  %v2226 = vmax.f32 %v1792, %v2131
  %v2227 = vmax.f32 %v1793, %v2134
  %v2228 = vmax.f32 %v1794, %v2139
  %v2229 = vmax.f32 %v1795, %v2142
  %v2230 = vmax.f32 %v1796, %v2192
  %v2231 = vmax.f32 %v1797, %v2195
  %v2232 = vmax.f32 %v1798, %v2200
  %v2233 = vmax.f32 %v1799, %v2203
  %v2234 = vmax.f32 %v1800, %v2208
  %v2235 = vmax.f32 %v1801, %v2211
  %v2236 = vmax.f32 %v1802, %v2216
  %v2237 = vmax.f32 %v1803, %v2219
  %s2238 = scalar_lea.vmem %s1, 20
  %v2239 = vld [vmem:[%s2238] sm:$0x3]
  %v2240 = vlaneseq
  %v2241 = vshrl.u32 %v2240, 7
  %v2242 = vsub.s32 0, %v2241
  %v2243 = vrot.slane %v2239, %v2242
  %2245 = vbcast.lane.b32.xlu0 %v2243, 256
  %v2246 = vpop.permute.xlu0 %2245
  %s2248 = sor.u32 256, 8
  %2249 = vbcast.lane.b32.xlu0 %v2243, %s2248
  %v2250 = vpop.permute.xlu0 %2249
  %s2252 = sor.u32 256, 16
  %2253 = vbcast.lane.b32.xlu0 %v2243, %s2252
  %v2254 = vpop.permute.xlu0 %2253
  %s2256 = sor.u32 256, 24
  %2257 = vbcast.lane.b32.xlu0 %v2243, %s2256
  %v2258 = vpop.permute.xlu0 %2257
  %s2260 = sor.u32 256, 32
  %2261 = vbcast.lane.b32.xlu0 %v2243, %s2260
  %v2262 = vpop.permute.xlu0 %2261
  %s2264 = sor.u32 256, 40
  %2265 = vbcast.lane.b32.xlu0 %v2243, %s2264
  %v2266 = vpop.permute.xlu0 %2265
  %s2268 = sor.u32 256, 48
  %2269 = vbcast.lane.b32.xlu0 %v2243, %s2268
  %v2270 = vpop.permute.xlu0 %2269
  %s2272 = sor.u32 256, 56
  %2273 = vbcast.lane.b32.xlu0 %v2243, %s2272
  %v2274 = vpop.permute.xlu0 %2273
  %v2275 = vlaneseq
  %v2276 = vshrl.u32 %v2275, 7
  %v2277 = vsub.s32 1, %v2276
  %v2278 = vrot.slane %v2239, %v2277
  %2280 = vbcast.lane.b32.xlu0 %v2278, 256
  %v2281 = vpop.permute.xlu0 %2280
  %s2283 = sor.u32 256, 8
  %2284 = vbcast.lane.b32.xlu0 %v2278, %s2283
  %v2285 = vpop.permute.xlu0 %2284
  %s2287 = sor.u32 256, 16
  %2288 = vbcast.lane.b32.xlu0 %v2278, %s2287
  %v2289 = vpop.permute.xlu0 %2288
  %s2291 = sor.u32 256, 24
  %2292 = vbcast.lane.b32.xlu0 %v2278, %s2291
  %v2293 = vpop.permute.xlu0 %2292
  %s2295 = sor.u32 256, 32
  %2296 = vbcast.lane.b32.xlu0 %v2278, %s2295
  %v2297 = vpop.permute.xlu0 %2296
  %s2299 = sor.u32 256, 40
  %2300 = vbcast.lane.b32.xlu0 %v2278, %s2299
  %v2301 = vpop.permute.xlu0 %2300
  %s2303 = sor.u32 256, 48
  %2304 = vbcast.lane.b32.xlu0 %v2278, %s2303
  %v2305 = vpop.permute.xlu0 %2304
  %s2307 = sor.u32 256, 56
  %2308 = vbcast.lane.b32.xlu0 %v2278, %s2307
  %v2309 = vpop.permute.xlu0 %2308
  %s2310 = scalar_lea.vmem %s1, 22
  %v2311 = vld [vmem:[%s2310] sm:$0x3]
  %v2312 = vlaneseq
  %v2313 = vshrl.u32 %v2312, 7
  %v2314 = vsub.s32 0, %v2313
  %v2315 = vrot.slane %v2311, %v2314
  %2317 = vbcast.lane.b32.xlu0 %v2315, 256
  %v2318 = vpop.permute.xlu0 %2317
  %s2320 = sor.u32 256, 8
  %2321 = vbcast.lane.b32.xlu0 %v2315, %s2320
  %v2322 = vpop.permute.xlu0 %2321
  %s2324 = sor.u32 256, 16
  %2325 = vbcast.lane.b32.xlu0 %v2315, %s2324
  %v2326 = vpop.permute.xlu0 %2325
  %s2328 = sor.u32 256, 24
  %2329 = vbcast.lane.b32.xlu0 %v2315, %s2328
  %v2330 = vpop.permute.xlu0 %2329
  %s2332 = sor.u32 256, 32
  %2333 = vbcast.lane.b32.xlu0 %v2315, %s2332
  %v2334 = vpop.permute.xlu0 %2333
  %s2336 = sor.u32 256, 40
  %2337 = vbcast.lane.b32.xlu0 %v2315, %s2336
  %v2338 = vpop.permute.xlu0 %2337
  %s2340 = sor.u32 256, 48
  %2341 = vbcast.lane.b32.xlu0 %v2315, %s2340
  %v2342 = vpop.permute.xlu0 %2341
  %s2344 = sor.u32 256, 56
  %2345 = vbcast.lane.b32.xlu0 %v2315, %s2344
  %v2346 = vpop.permute.xlu0 %2345
  %v2347 = vlaneseq
  %v2348 = vshrl.u32 %v2347, 7
  %v2349 = vsub.s32 1, %v2348
  %v2350 = vrot.slane %v2311, %v2349
  %2352 = vbcast.lane.b32.xlu0 %v2350, 256
  %v2353 = vpop.permute.xlu0 %2352
  %s2355 = sor.u32 256, 8
  %2356 = vbcast.lane.b32.xlu0 %v2350, %s2355
  %v2357 = vpop.permute.xlu0 %2356
  %s2359 = sor.u32 256, 16
  %2360 = vbcast.lane.b32.xlu0 %v2350, %s2359
  %v2361 = vpop.permute.xlu0 %2360
  %s2363 = sor.u32 256, 24
  %2364 = vbcast.lane.b32.xlu0 %v2350, %s2363
  %v2365 = vpop.permute.xlu0 %2364
  %s2367 = sor.u32 256, 32
  %2368 = vbcast.lane.b32.xlu0 %v2350, %s2367
  %v2369 = vpop.permute.xlu0 %2368
  %s2371 = sor.u32 256, 40
  %2372 = vbcast.lane.b32.xlu0 %v2350, %s2371
  %v2373 = vpop.permute.xlu0 %2372
  %s2375 = sor.u32 256, 48
  %2376 = vbcast.lane.b32.xlu0 %v2350, %s2375
  %v2377 = vpop.permute.xlu0 %2376
  %s2379 = sor.u32 256, 56
  %2380 = vbcast.lane.b32.xlu0 %v2350, %s2379
  %v2381 = vpop.permute.xlu0 %2380
  %vm2382 = vcmp.eq.s32.totalorder %v2246, %v35
  %vm2383 = vcmp.eq.s32.totalorder %v2250, %v35
  %vm2384 = vcmp.eq.s32.totalorder %v2254, %v35
  %vm2385 = vcmp.eq.s32.totalorder %v2258, %v35
  %vm2386 = vcmp.eq.s32.totalorder %v2262, %v35
  %vm2387 = vcmp.eq.s32.totalorder %v2266, %v35
  %vm2388 = vcmp.eq.s32.totalorder %v2270, %v35
  %vm2389 = vcmp.eq.s32.totalorder %v2274, %v35
  %vm2390 = vcmp.eq.s32.totalorder %v2281, %v35
  %vm2391 = vcmp.eq.s32.totalorder %v2285, %v35
  %vm2392 = vcmp.eq.s32.totalorder %v2289, %v35
  %vm2393 = vcmp.eq.s32.totalorder %v2293, %v35
  %vm2394 = vcmp.eq.s32.totalorder %v2297, %v35
  %vm2395 = vcmp.eq.s32.totalorder %v2301, %v35
  %vm2396 = vcmp.eq.s32.totalorder %v2305, %v35
  %vm2397 = vcmp.eq.s32.totalorder %v2309, %v35
  %v2398 = vsel %vm2382, 1, 0
  %v2399 = vsel %vm2383, 1, 0
  %v2400 = vsel %vm2384, 1, 0
  %v2401 = vsel %vm2385, 1, 0
  %v2402 = vsel %vm2386, 1, 0
  %v2403 = vsel %vm2387, 1, 0
  %v2404 = vsel %vm2388, 1, 0
  %v2405 = vsel %vm2389, 1, 0
  %v2406 = vsel %vm2390, 1, 0
  %v2407 = vsel %vm2391, 1, 0
  %v2408 = vsel %vm2392, 1, 0
  %v2409 = vsel %vm2393, 1, 0
  %v2410 = vsel %vm2394, 1, 0
  %v2411 = vsel %vm2395, 1, 0
  %v2412 = vsel %vm2396, 1, 0
  %v2413 = vsel %vm2397, 1, 0
  %v2414 = vcvt.s32.f32 %v2398
  %v2415 = vcvt.s32.f32 %v2399
  %v2416 = vcvt.s32.f32 %v2400
  %v2417 = vcvt.s32.f32 %v2401
  %v2418 = vcvt.s32.f32 %v2402
  %v2419 = vcvt.s32.f32 %v2403
  %v2420 = vcvt.s32.f32 %v2404
  %v2421 = vcvt.s32.f32 %v2405
  %v2422 = vcvt.s32.f32 %v2406
  %v2423 = vcvt.s32.f32 %v2407
  %v2424 = vcvt.s32.f32 %v2408
  %v2425 = vcvt.s32.f32 %v2409
  %v2426 = vcvt.s32.f32 %v2410
  %v2427 = vcvt.s32.f32 %v2411
  %v2428 = vcvt.s32.f32 %v2412
  %v2429 = vcvt.s32.f32 %v2413
  %vm2430 = vcmp.eq.s32.totalorder %v2318, %v35
  %vm2431 = vcmp.eq.s32.totalorder %v2322, %v35
  %vm2432 = vcmp.eq.s32.totalorder %v2326, %v35
  %vm2433 = vcmp.eq.s32.totalorder %v2330, %v35
  %vm2434 = vcmp.eq.s32.totalorder %v2334, %v35
  %vm2435 = vcmp.eq.s32.totalorder %v2338, %v35
  %vm2436 = vcmp.eq.s32.totalorder %v2342, %v35
  %vm2437 = vcmp.eq.s32.totalorder %v2346, %v35
  %vm2438 = vcmp.eq.s32.totalorder %v2353, %v35
  %vm2439 = vcmp.eq.s32.totalorder %v2357, %v35
  %vm2440 = vcmp.eq.s32.totalorder %v2361, %v35
  %vm2441 = vcmp.eq.s32.totalorder %v2365, %v35
  %vm2442 = vcmp.eq.s32.totalorder %v2369, %v35
  %vm2443 = vcmp.eq.s32.totalorder %v2373, %v35
  %vm2444 = vcmp.eq.s32.totalorder %v2377, %v35
  %vm2445 = vcmp.eq.s32.totalorder %v2381, %v35
  %v2446 = vsel %vm2430, 1, 0
  %v2447 = vsel %vm2431, 1, 0
  %v2448 = vsel %vm2432, 1, 0
  %v2449 = vsel %vm2433, 1, 0
  %v2450 = vsel %vm2434, 1, 0
  %v2451 = vsel %vm2435, 1, 0
  %v2452 = vsel %vm2436, 1, 0
  %v2453 = vsel %vm2437, 1, 0
  %v2454 = vsel %vm2438, 1, 0
  %v2455 = vsel %vm2439, 1, 0
  %v2456 = vsel %vm2440, 1, 0
  %v2457 = vsel %vm2441, 1, 0
  %v2458 = vsel %vm2442, 1, 0
  %v2459 = vsel %vm2443, 1, 0
  %v2460 = vsel %vm2444, 1, 0
  %v2461 = vsel %vm2445, 1, 0
  %v2462 = vcvt.s32.f32 %v2446
  %v2463 = vcvt.s32.f32 %v2447
  %v2464 = vcvt.s32.f32 %v2448
  %v2465 = vcvt.s32.f32 %v2449
  %v2466 = vcvt.s32.f32 %v2450
  %v2467 = vcvt.s32.f32 %v2451
  %v2468 = vcvt.s32.f32 %v2452
  %v2469 = vcvt.s32.f32 %v2453
  %v2470 = vcvt.s32.f32 %v2454
  %v2471 = vcvt.s32.f32 %v2455
  %v2472 = vcvt.s32.f32 %v2456
  %v2473 = vcvt.s32.f32 %v2457
  %v2474 = vcvt.s32.f32 %v2458
  %v2475 = vcvt.s32.f32 %v2459
  %v2476 = vcvt.s32.f32 %v2460
  %v2477 = vcvt.s32.f32 %v2461
  %v2478 = vsub.f32 %v2414, %v2462
  %v2479 = vsub.f32 %v2415, %v2463
  %v2480 = vsub.f32 %v2416, %v2464
  %v2481 = vsub.f32 %v2417, %v2465
  %v2482 = vsub.f32 %v2418, %v2466
  %v2483 = vsub.f32 %v2419, %v2467
  %v2484 = vsub.f32 %v2420, %v2468
  %v2485 = vsub.f32 %v2421, %v2469
  %v2486 = vsub.f32 %v2422, %v2470
  %v2487 = vsub.f32 %v2423, %v2471
  %v2488 = vsub.f32 %v2424, %v2472
  %v2489 = vsub.f32 %v2425, %v2473
  %v2490 = vsub.f32 %v2426, %v2474
  %v2491 = vsub.f32 %v2427, %v2475
  %v2492 = vsub.f32 %v2428, %v2476
  %v2493 = vsub.f32 %v2429, %v2477
  %v2494 = vpack.c.bf16 %v2479, %v2478
  %v2495 = vpack.c.bf16 %v2481, %v2480
  %v2496 = vpack.c.bf16 %v2483, %v2482
  %v2497 = vpack.c.bf16 %v2485, %v2484
  %v2498 = vpack.c.bf16 %v2487, %v2486
  %v2499 = vpack.c.bf16 %v2489, %v2488
  %v2500 = vpack.c.bf16 %v2491, %v2490
  %v2501 = vpack.c.bf16 %v2493, %v2492
  %v2503 = vsel %vm323, %v2494, 0
  %v2506 = vsel %vm323, %v2495, 0
  %v2509 = vsel %vm323, %v2496, 0
  %v2512 = vsel %vm323, %v2497, 0
  %2514 = vmatprep.subr.bf16.mxu0 0
  %2515 = vmatpush1.bf16.msra.mxu0 0
  %2516 = vmatprep.subr.bf16.mxu0 0
  %2517 = vmatpush1.bf16.msra.mxu0 0
  %2518 = vmatprep.subr.bf16.mxu0 0
  %2519 = vmatpush1.bf16.msra.mxu0 0
  %2520 = vmatprep.subr.bf16.mxu0 0
  %2521 = vmatpush1.bf16.msra.mxu0 0
  %2522 = vmatprep.subr.bf16.mxu0 0
  %2523 = vmatpush1.bf16.msra.mxu0 %v318
  %2524 = vmatprep.subr.bf16.mxu0 0
  %2525 = vmatpush1.bf16.msra.mxu0 %v317
  %2526 = vmatprep.subr.bf16.mxu0 0
  %2527 = vmatpush1.bf16.msra.mxu0 %v316
  %2528 = vmatprep.subr.bf16.mxu0 0
  %2529 = vmatpush1.bf16.msra.mxu0 %v315
  %2530 = vmatprep.subr.bf16.mxu0 0
  %2531 = vmatpush2.bf16.msra.mxu0 0
  %2532 = vmatprep.subr.bf16.mxu0 0
  %2533 = vmatpush2.bf16.msra.mxu0 0
  %2534 = vmatprep.subr.bf16.mxu0 0
  %2535 = vmatpush2.bf16.msra.mxu0 0
  %2536 = vmatprep.subr.bf16.mxu0 0
  %2537 = vmatpush2.bf16.msra.mxu0 0
  %2538 = vmatprep.subr.bf16.mxu0 0
  %2539 = vmatpush2.bf16.msra.mxu0 0
  %2540 = vmatprep.subr.bf16.mxu0 0
  %2541 = vmatpush2.bf16.msra.mxu0 0
  %2542 = vmatprep.subr.bf16.mxu0 0
  %2543 = vmatpush2.bf16.msra.mxu0 0
  %2544 = vmatprep.subr.bf16.mxu0 0
  %2545 = vmatpush2.bf16.msra.mxu0 0
  %2546 = vmatprep.mubr.bf16.mxu0 0
  %2547 = vmatmul.mubr.bf16.gmra.mxu0 %v2503
  %v2548 = vpop.f32.mrf.mxu0
  %v2549 = vadd.f32 0.0, %v2548
  %v2550 = vpop.f32.mrf.mxu0
  %v2551 = vpop.f32.mrf.mxu0
  %v2552 = vadd.f32 0.0, %v2551
  %v2553 = vpop.f32.mrf.mxu0
  %2554 = vmatprep.mubr.bf16.mxu0 0
  %2555 = vmatmul.mubr.bf16.gmra.mxu0 %v2506
  %v2556 = vpop.f32.mrf.mxu0
  %v2557 = vadd.f32 0.0, %v2556
  %v2558 = vpop.f32.mrf.mxu0
  %v2559 = vpop.f32.mrf.mxu0
  %v2560 = vadd.f32 0.0, %v2559
  %v2561 = vpop.f32.mrf.mxu0
  %2562 = vmatprep.mubr.bf16.mxu0 0
  %2563 = vmatmul.mubr.bf16.gmra.mxu0 %v2509
  %v2564 = vpop.f32.mrf.mxu0
  %v2565 = vadd.f32 0.0, %v2564
  %v2566 = vpop.f32.mrf.mxu0
  %v2567 = vpop.f32.mrf.mxu0
  %v2568 = vadd.f32 0.0, %v2567
  %v2569 = vpop.f32.mrf.mxu0
  %2570 = vmatprep.mubr.bf16.mxu0 0
  %2571 = vmatmul.mubr.bf16.gmra.mxu0 %v2512
  %v2572 = vpop.f32.mrf.mxu0
  %v2573 = vadd.f32 0.0, %v2572
  %v2574 = vpop.f32.mrf.mxu0
  %v2575 = vpop.f32.mrf.mxu0
  %v2576 = vadd.f32 0.0, %v2575
  %v2577 = vpop.f32.mrf.mxu0
  %2578 = vdwg.mxu0
  %v2580 = vsel %vm323, %v2498, 0
  %v2583 = vsel %vm323, %v2499, 0
  %v2586 = vsel %vm323, %v2500, 0
  %v2589 = vsel %vm323, %v2501, 0
  %2591 = vmatprep.subr.bf16.mxu0 0
  %2592 = vmatpush1.bf16.msra.mxu0 0
  %2593 = vmatprep.subr.bf16.mxu0 0
  %2594 = vmatpush1.bf16.msra.mxu0 0
  %2595 = vmatprep.subr.bf16.mxu0 0
  %2596 = vmatpush1.bf16.msra.mxu0 0
  %2597 = vmatprep.subr.bf16.mxu0 0
  %2598 = vmatpush1.bf16.msra.mxu0 0
  %2599 = vmatprep.subr.bf16.mxu0 0
  %2600 = vmatpush1.bf16.msra.mxu0 %v420
  %2601 = vmatprep.subr.bf16.mxu0 0
  %2602 = vmatpush1.bf16.msra.mxu0 %v419
  %2603 = vmatprep.subr.bf16.mxu0 0
  %2604 = vmatpush1.bf16.msra.mxu0 %v418
  %2605 = vmatprep.subr.bf16.mxu0 0
  %2606 = vmatpush1.bf16.msra.mxu0 %v417
  %2607 = vmatprep.subr.bf16.mxu0 0
  %2608 = vmatpush2.bf16.msra.mxu0 0
  %2609 = vmatprep.subr.bf16.mxu0 0
  %2610 = vmatpush2.bf16.msra.mxu0 0
  %2611 = vmatprep.subr.bf16.mxu0 0
  %2612 = vmatpush2.bf16.msra.mxu0 0
  %2613 = vmatprep.subr.bf16.mxu0 0
  %2614 = vmatpush2.bf16.msra.mxu0 0
  %2615 = vmatprep.subr.bf16.mxu0 0
  %2616 = vmatpush2.bf16.msra.mxu0 0
  %2617 = vmatprep.subr.bf16.mxu0 0
  %2618 = vmatpush2.bf16.msra.mxu0 0
  %2619 = vmatprep.subr.bf16.mxu0 0
  %2620 = vmatpush2.bf16.msra.mxu0 0
  %2621 = vmatprep.subr.bf16.mxu0 0
  %2622 = vmatpush2.bf16.msra.mxu0 0
  %2623 = vmatprep.mubr.bf16.mxu0 0
  %2624 = vmatmul.mubr.bf16.gmra.mxu0 %v2580
  %v2625 = vpop.f32.mrf.mxu0
  %v2626 = vadd.f32 0.0, %v2625
  %v2627 = vpop.f32.mrf.mxu0
  %v2628 = vpop.f32.mrf.mxu0
  %v2629 = vadd.f32 0.0, %v2628
  %v2630 = vpop.f32.mrf.mxu0
  %2631 = vmatprep.mubr.bf16.mxu0 0
  %2632 = vmatmul.mubr.bf16.gmra.mxu0 %v2583
  %v2633 = vpop.f32.mrf.mxu0
  %v2634 = vadd.f32 0.0, %v2633
  %v2635 = vpop.f32.mrf.mxu0
  %v2636 = vpop.f32.mrf.mxu0
  %v2637 = vadd.f32 0.0, %v2636
  %v2638 = vpop.f32.mrf.mxu0
  %2639 = vmatprep.mubr.bf16.mxu0 0
  %2640 = vmatmul.mubr.bf16.gmra.mxu0 %v2586
  %v2641 = vpop.f32.mrf.mxu0
  %v2642 = vadd.f32 0.0, %v2641
  %v2643 = vpop.f32.mrf.mxu0
  %v2644 = vpop.f32.mrf.mxu0
  %v2645 = vadd.f32 0.0, %v2644
  %v2646 = vpop.f32.mrf.mxu0
  %2647 = vmatprep.mubr.bf16.mxu0 0
  %2648 = vmatmul.mubr.bf16.gmra.mxu0 %v2589
  %v2649 = vpop.f32.mrf.mxu0
  %v2650 = vadd.f32 0.0, %v2649
  %v2651 = vpop.f32.mrf.mxu0
  %v2652 = vpop.f32.mrf.mxu0
  %v2653 = vadd.f32 0.0, %v2652
  %v2654 = vpop.f32.mrf.mxu0
  %2655 = vdwg.mxu0
  %v2656 = vmax.f32 %v2222, %v2549
  %v2657 = vmax.f32 %v2223, %v2552
  %v2658 = vmax.f32 %v2224, %v2557
  %v2659 = vmax.f32 %v2225, %v2560
  %v2660 = vmax.f32 %v2226, %v2565
  %v2661 = vmax.f32 %v2227, %v2568
  %v2662 = vmax.f32 %v2228, %v2573
  %v2663 = vmax.f32 %v2229, %v2576
  %v2664 = vmax.f32 %v2230, %v2626
  %v2665 = vmax.f32 %v2231, %v2629
  %v2666 = vmax.f32 %v2232, %v2634
  %v2667 = vmax.f32 %v2233, %v2637
  %v2668 = vmax.f32 %v2234, %v2642
  %v2669 = vmax.f32 %v2235, %v2645
  %v2670 = vmax.f32 %v2236, %v2650
  %v2671 = vmax.f32 %v2237, %v2653
  %s2672 = scalar_lea.vmem %s1, 24
  %v2673 = vld [vmem:[%s2672] sm:$0x3]
  %v2674 = vlaneseq
  %v2675 = vshrl.u32 %v2674, 7
  %v2676 = vsub.s32 0, %v2675
  %v2677 = vrot.slane %v2673, %v2676
  %2679 = vbcast.lane.b32.xlu0 %v2677, 256
  %v2680 = vpop.permute.xlu0 %2679
  %s2682 = sor.u32 256, 8
  %2683 = vbcast.lane.b32.xlu0 %v2677, %s2682
  %v2684 = vpop.permute.xlu0 %2683
  %s2686 = sor.u32 256, 16
  %2687 = vbcast.lane.b32.xlu0 %v2677, %s2686
  %v2688 = vpop.permute.xlu0 %2687
  %s2690 = sor.u32 256, 24
  %2691 = vbcast.lane.b32.xlu0 %v2677, %s2690
  %v2692 = vpop.permute.xlu0 %2691
  %s2694 = sor.u32 256, 32
  %2695 = vbcast.lane.b32.xlu0 %v2677, %s2694
  %v2696 = vpop.permute.xlu0 %2695
  %s2698 = sor.u32 256, 40
  %2699 = vbcast.lane.b32.xlu0 %v2677, %s2698
  %v2700 = vpop.permute.xlu0 %2699
  %s2702 = sor.u32 256, 48
  %2703 = vbcast.lane.b32.xlu0 %v2677, %s2702
  %v2704 = vpop.permute.xlu0 %2703
  %s2706 = sor.u32 256, 56
  %2707 = vbcast.lane.b32.xlu0 %v2677, %s2706
  %v2708 = vpop.permute.xlu0 %2707
  %v2709 = vlaneseq
  %v2710 = vshrl.u32 %v2709, 7
  %v2711 = vsub.s32 1, %v2710
  %v2712 = vrot.slane %v2673, %v2711
  %2714 = vbcast.lane.b32.xlu0 %v2712, 256
  %v2715 = vpop.permute.xlu0 %2714
  %s2717 = sor.u32 256, 8
  %2718 = vbcast.lane.b32.xlu0 %v2712, %s2717
  %v2719 = vpop.permute.xlu0 %2718
  %s2721 = sor.u32 256, 16
  %2722 = vbcast.lane.b32.xlu0 %v2712, %s2721
  %v2723 = vpop.permute.xlu0 %2722
  %s2725 = sor.u32 256, 24
  %2726 = vbcast.lane.b32.xlu0 %v2712, %s2725
  %v2727 = vpop.permute.xlu0 %2726
  %s2729 = sor.u32 256, 32
  %2730 = vbcast.lane.b32.xlu0 %v2712, %s2729
  %v2731 = vpop.permute.xlu0 %2730
  %s2733 = sor.u32 256, 40
  %2734 = vbcast.lane.b32.xlu0 %v2712, %s2733
  %v2735 = vpop.permute.xlu0 %2734
  %s2737 = sor.u32 256, 48
  %2738 = vbcast.lane.b32.xlu0 %v2712, %s2737
  %v2739 = vpop.permute.xlu0 %2738
  %s2741 = sor.u32 256, 56
  %2742 = vbcast.lane.b32.xlu0 %v2712, %s2741
  %v2743 = vpop.permute.xlu0 %2742
  %s2744 = scalar_lea.vmem %s1, 26
  %v2745 = vld [vmem:[%s2744] sm:$0x3]
  %v2746 = vlaneseq
  %v2747 = vshrl.u32 %v2746, 7
  %v2748 = vsub.s32 0, %v2747
  %v2749 = vrot.slane %v2745, %v2748
  %2751 = vbcast.lane.b32.xlu0 %v2749, 256
  %v2752 = vpop.permute.xlu0 %2751
  %s2754 = sor.u32 256, 8
  %2755 = vbcast.lane.b32.xlu0 %v2749, %s2754
  %v2756 = vpop.permute.xlu0 %2755
  %s2758 = sor.u32 256, 16
  %2759 = vbcast.lane.b32.xlu0 %v2749, %s2758
  %v2760 = vpop.permute.xlu0 %2759
  %s2762 = sor.u32 256, 24
  %2763 = vbcast.lane.b32.xlu0 %v2749, %s2762
  %v2764 = vpop.permute.xlu0 %2763
  %s2766 = sor.u32 256, 32
  %2767 = vbcast.lane.b32.xlu0 %v2749, %s2766
  %v2768 = vpop.permute.xlu0 %2767
  %s2770 = sor.u32 256, 40
  %2771 = vbcast.lane.b32.xlu0 %v2749, %s2770
  %v2772 = vpop.permute.xlu0 %2771
  %s2774 = sor.u32 256, 48
  %2775 = vbcast.lane.b32.xlu0 %v2749, %s2774
  %v2776 = vpop.permute.xlu0 %2775
  %s2778 = sor.u32 256, 56
  %2779 = vbcast.lane.b32.xlu0 %v2749, %s2778
  %v2780 = vpop.permute.xlu0 %2779
  %v2781 = vlaneseq
  %v2782 = vshrl.u32 %v2781, 7
  %v2783 = vsub.s32 1, %v2782
  %v2784 = vrot.slane %v2745, %v2783
  %2786 = vbcast.lane.b32.xlu0 %v2784, 256
  %v2787 = vpop.permute.xlu0 %2786
  %s2789 = sor.u32 256, 8
  %2790 = vbcast.lane.b32.xlu0 %v2784, %s2789
  %v2791 = vpop.permute.xlu0 %2790
  %s2793 = sor.u32 256, 16
  %2794 = vbcast.lane.b32.xlu0 %v2784, %s2793
  %v2795 = vpop.permute.xlu0 %2794
  %s2797 = sor.u32 256, 24
  %2798 = vbcast.lane.b32.xlu0 %v2784, %s2797
  %v2799 = vpop.permute.xlu0 %2798
  %s2801 = sor.u32 256, 32
  %2802 = vbcast.lane.b32.xlu0 %v2784, %s2801
  %v2803 = vpop.permute.xlu0 %2802
  %s2805 = sor.u32 256, 40
  %2806 = vbcast.lane.b32.xlu0 %v2784, %s2805
  %v2807 = vpop.permute.xlu0 %2806
  %s2809 = sor.u32 256, 48
  %2810 = vbcast.lane.b32.xlu0 %v2784, %s2809
  %v2811 = vpop.permute.xlu0 %2810
  %s2813 = sor.u32 256, 56
  %2814 = vbcast.lane.b32.xlu0 %v2784, %s2813
  %v2815 = vpop.permute.xlu0 %2814
  %vm2816 = vcmp.eq.s32.totalorder %v2680, %v35
  %vm2817 = vcmp.eq.s32.totalorder %v2684, %v35
  %vm2818 = vcmp.eq.s32.totalorder %v2688, %v35
  %vm2819 = vcmp.eq.s32.totalorder %v2692, %v35
  %vm2820 = vcmp.eq.s32.totalorder %v2696, %v35
  %vm2821 = vcmp.eq.s32.totalorder %v2700, %v35
  %vm2822 = vcmp.eq.s32.totalorder %v2704, %v35
  %vm2823 = vcmp.eq.s32.totalorder %v2708, %v35
  %vm2824 = vcmp.eq.s32.totalorder %v2715, %v35
  %vm2825 = vcmp.eq.s32.totalorder %v2719, %v35
  %vm2826 = vcmp.eq.s32.totalorder %v2723, %v35
  %vm2827 = vcmp.eq.s32.totalorder %v2727, %v35
  %vm2828 = vcmp.eq.s32.totalorder %v2731, %v35
  %vm2829 = vcmp.eq.s32.totalorder %v2735, %v35
  %vm2830 = vcmp.eq.s32.totalorder %v2739, %v35
  %vm2831 = vcmp.eq.s32.totalorder %v2743, %v35
  %v2832 = vsel %vm2816, 1, 0
  %v2833 = vsel %vm2817, 1, 0
  %v2834 = vsel %vm2818, 1, 0
  %v2835 = vsel %vm2819, 1, 0
  %v2836 = vsel %vm2820, 1, 0
  %v2837 = vsel %vm2821, 1, 0
  %v2838 = vsel %vm2822, 1, 0
  %v2839 = vsel %vm2823, 1, 0
  %v2840 = vsel %vm2824, 1, 0
  %v2841 = vsel %vm2825, 1, 0
  %v2842 = vsel %vm2826, 1, 0
  %v2843 = vsel %vm2827, 1, 0
  %v2844 = vsel %vm2828, 1, 0
  %v2845 = vsel %vm2829, 1, 0
  %v2846 = vsel %vm2830, 1, 0
  %v2847 = vsel %vm2831, 1, 0
  %v2848 = vcvt.s32.f32 %v2832
  %v2849 = vcvt.s32.f32 %v2833
  %v2850 = vcvt.s32.f32 %v2834
  %v2851 = vcvt.s32.f32 %v2835
  %v2852 = vcvt.s32.f32 %v2836
  %v2853 = vcvt.s32.f32 %v2837
  %v2854 = vcvt.s32.f32 %v2838
  %v2855 = vcvt.s32.f32 %v2839
  %v2856 = vcvt.s32.f32 %v2840
  %v2857 = vcvt.s32.f32 %v2841
  %v2858 = vcvt.s32.f32 %v2842
  %v2859 = vcvt.s32.f32 %v2843
  %v2860 = vcvt.s32.f32 %v2844
  %v2861 = vcvt.s32.f32 %v2845
  %v2862 = vcvt.s32.f32 %v2846
  %v2863 = vcvt.s32.f32 %v2847
  %vm2864 = vcmp.eq.s32.totalorder %v2752, %v35
  %vm2865 = vcmp.eq.s32.totalorder %v2756, %v35
  %vm2866 = vcmp.eq.s32.totalorder %v2760, %v35
  %vm2867 = vcmp.eq.s32.totalorder %v2764, %v35
  %vm2868 = vcmp.eq.s32.totalorder %v2768, %v35
  %vm2869 = vcmp.eq.s32.totalorder %v2772, %v35
  %vm2870 = vcmp.eq.s32.totalorder %v2776, %v35
  %vm2871 = vcmp.eq.s32.totalorder %v2780, %v35
  %vm2872 = vcmp.eq.s32.totalorder %v2787, %v35
  %vm2873 = vcmp.eq.s32.totalorder %v2791, %v35
  %vm2874 = vcmp.eq.s32.totalorder %v2795, %v35
  %vm2875 = vcmp.eq.s32.totalorder %v2799, %v35
  %vm2876 = vcmp.eq.s32.totalorder %v2803, %v35
  %vm2877 = vcmp.eq.s32.totalorder %v2807, %v35
  %vm2878 = vcmp.eq.s32.totalorder %v2811, %v35
  %vm2879 = vcmp.eq.s32.totalorder %v2815, %v35
  %v2880 = vsel %vm2864, 1, 0
  %v2881 = vsel %vm2865, 1, 0
  %v2882 = vsel %vm2866, 1, 0
  %v2883 = vsel %vm2867, 1, 0
  %v2884 = vsel %vm2868, 1, 0
  %v2885 = vsel %vm2869, 1, 0
  %v2886 = vsel %vm2870, 1, 0
  %v2887 = vsel %vm2871, 1, 0
  %v2888 = vsel %vm2872, 1, 0
  %v2889 = vsel %vm2873, 1, 0
  %v2890 = vsel %vm2874, 1, 0
  %v2891 = vsel %vm2875, 1, 0
  %v2892 = vsel %vm2876, 1, 0
  %v2893 = vsel %vm2877, 1, 0
  %v2894 = vsel %vm2878, 1, 0
  %v2895 = vsel %vm2879, 1, 0
  %v2896 = vcvt.s32.f32 %v2880
  %v2897 = vcvt.s32.f32 %v2881
  %v2898 = vcvt.s32.f32 %v2882
  %v2899 = vcvt.s32.f32 %v2883
  %v2900 = vcvt.s32.f32 %v2884
  %v2901 = vcvt.s32.f32 %v2885
  %v2902 = vcvt.s32.f32 %v2886
  %v2903 = vcvt.s32.f32 %v2887
  %v2904 = vcvt.s32.f32 %v2888
  %v2905 = vcvt.s32.f32 %v2889
  %v2906 = vcvt.s32.f32 %v2890
  %v2907 = vcvt.s32.f32 %v2891
  %v2908 = vcvt.s32.f32 %v2892
  %v2909 = vcvt.s32.f32 %v2893
  %v2910 = vcvt.s32.f32 %v2894
  %v2911 = vcvt.s32.f32 %v2895
  %v2912 = vsub.f32 %v2848, %v2896
  %v2913 = vsub.f32 %v2849, %v2897
  %v2914 = vsub.f32 %v2850, %v2898
  %v2915 = vsub.f32 %v2851, %v2899
  %v2916 = vsub.f32 %v2852, %v2900
  %v2917 = vsub.f32 %v2853, %v2901
  %v2918 = vsub.f32 %v2854, %v2902
  %v2919 = vsub.f32 %v2855, %v2903
  %v2920 = vsub.f32 %v2856, %v2904
  %v2921 = vsub.f32 %v2857, %v2905
  %v2922 = vsub.f32 %v2858, %v2906
  %v2923 = vsub.f32 %v2859, %v2907
  %v2924 = vsub.f32 %v2860, %v2908
  %v2925 = vsub.f32 %v2861, %v2909
  %v2926 = vsub.f32 %v2862, %v2910
  %v2927 = vsub.f32 %v2863, %v2911
  %v2928 = vpack.c.bf16 %v2913, %v2912
  %v2929 = vpack.c.bf16 %v2915, %v2914
  %v2930 = vpack.c.bf16 %v2917, %v2916
  %v2931 = vpack.c.bf16 %v2919, %v2918
  %v2932 = vpack.c.bf16 %v2921, %v2920
  %v2933 = vpack.c.bf16 %v2923, %v2922
  %v2934 = vpack.c.bf16 %v2925, %v2924
  %v2935 = vpack.c.bf16 %v2927, %v2926
  %v2937 = vsel %vm323, %v2928, 0
  %v2940 = vsel %vm323, %v2929, 0
  %v2943 = vsel %vm323, %v2930, 0
  %v2946 = vsel %vm323, %v2931, 0
  %2948 = vmatprep.subr.bf16.mxu0 0
  %2949 = vmatpush1.bf16.msra.mxu0 0
  %2950 = vmatprep.subr.bf16.mxu0 0
  %2951 = vmatpush1.bf16.msra.mxu0 0
  %2952 = vmatprep.subr.bf16.mxu0 0
  %2953 = vmatpush1.bf16.msra.mxu0 0
  %2954 = vmatprep.subr.bf16.mxu0 0
  %2955 = vmatpush1.bf16.msra.mxu0 0
  %2956 = vmatprep.subr.bf16.mxu0 0
  %2957 = vmatpush1.bf16.msra.mxu0 %v318
  %2958 = vmatprep.subr.bf16.mxu0 0
  %2959 = vmatpush1.bf16.msra.mxu0 %v317
  %2960 = vmatprep.subr.bf16.mxu0 0
  %2961 = vmatpush1.bf16.msra.mxu0 %v316
  %2962 = vmatprep.subr.bf16.mxu0 0
  %2963 = vmatpush1.bf16.msra.mxu0 %v315
  %2964 = vmatprep.subr.bf16.mxu0 0
  %2965 = vmatpush2.bf16.msra.mxu0 0
  %2966 = vmatprep.subr.bf16.mxu0 0
  %2967 = vmatpush2.bf16.msra.mxu0 0
  %2968 = vmatprep.subr.bf16.mxu0 0
  %2969 = vmatpush2.bf16.msra.mxu0 0
  %2970 = vmatprep.subr.bf16.mxu0 0
  %2971 = vmatpush2.bf16.msra.mxu0 0
  %2972 = vmatprep.subr.bf16.mxu0 0
  %2973 = vmatpush2.bf16.msra.mxu0 0
  %2974 = vmatprep.subr.bf16.mxu0 0
  %2975 = vmatpush2.bf16.msra.mxu0 0
  %2976 = vmatprep.subr.bf16.mxu0 0
  %2977 = vmatpush2.bf16.msra.mxu0 0
  %2978 = vmatprep.subr.bf16.mxu0 0
  %2979 = vmatpush2.bf16.msra.mxu0 0
  %2980 = vmatprep.mubr.bf16.mxu0 0
  %2981 = vmatmul.mubr.bf16.gmra.mxu0 %v2937
  %v2982 = vpop.f32.mrf.mxu0
  %v2983 = vadd.f32 0.0, %v2982
  %v2984 = vpop.f32.mrf.mxu0
  %v2985 = vpop.f32.mrf.mxu0
  %v2986 = vadd.f32 0.0, %v2985
  %v2987 = vpop.f32.mrf.mxu0
  %2988 = vmatprep.mubr.bf16.mxu0 0
  %2989 = vmatmul.mubr.bf16.gmra.mxu0 %v2940
  %v2990 = vpop.f32.mrf.mxu0
  %v2991 = vadd.f32 0.0, %v2990
  %v2992 = vpop.f32.mrf.mxu0
  %v2993 = vpop.f32.mrf.mxu0
  %v2994 = vadd.f32 0.0, %v2993
  %v2995 = vpop.f32.mrf.mxu0
  %2996 = vmatprep.mubr.bf16.mxu0 0
  %2997 = vmatmul.mubr.bf16.gmra.mxu0 %v2943
  %v2998 = vpop.f32.mrf.mxu0
  %v2999 = vadd.f32 0.0, %v2998
  %v3000 = vpop.f32.mrf.mxu0
  %v3001 = vpop.f32.mrf.mxu0
  %v3002 = vadd.f32 0.0, %v3001
  %v3003 = vpop.f32.mrf.mxu0
  %3004 = vmatprep.mubr.bf16.mxu0 0
  %3005 = vmatmul.mubr.bf16.gmra.mxu0 %v2946
  %v3006 = vpop.f32.mrf.mxu0
  %v3007 = vadd.f32 0.0, %v3006
  %v3008 = vpop.f32.mrf.mxu0
  %v3009 = vpop.f32.mrf.mxu0
  %v3010 = vadd.f32 0.0, %v3009
  %v3011 = vpop.f32.mrf.mxu0
  %3012 = vdwg.mxu0
  %v3014 = vsel %vm323, %v2932, 0
  %v3017 = vsel %vm323, %v2933, 0
  %v3020 = vsel %vm323, %v2934, 0
  %v3023 = vsel %vm323, %v2935, 0
  %3025 = vmatprep.subr.bf16.mxu0 0
  %3026 = vmatpush1.bf16.msra.mxu0 0
  %3027 = vmatprep.subr.bf16.mxu0 0
  %3028 = vmatpush1.bf16.msra.mxu0 0
  %3029 = vmatprep.subr.bf16.mxu0 0
  %3030 = vmatpush1.bf16.msra.mxu0 0
  %3031 = vmatprep.subr.bf16.mxu0 0
  %3032 = vmatpush1.bf16.msra.mxu0 0
  %3033 = vmatprep.subr.bf16.mxu0 0
  %3034 = vmatpush1.bf16.msra.mxu0 %v420
  %3035 = vmatprep.subr.bf16.mxu0 0
  %3036 = vmatpush1.bf16.msra.mxu0 %v419
  %3037 = vmatprep.subr.bf16.mxu0 0
  %3038 = vmatpush1.bf16.msra.mxu0 %v418
  %3039 = vmatprep.subr.bf16.mxu0 0
  %3040 = vmatpush1.bf16.msra.mxu0 %v417
  %3041 = vmatprep.subr.bf16.mxu0 0
  %3042 = vmatpush2.bf16.msra.mxu0 0
  %3043 = vmatprep.subr.bf16.mxu0 0
  %3044 = vmatpush2.bf16.msra.mxu0 0
  %3045 = vmatprep.subr.bf16.mxu0 0
  %3046 = vmatpush2.bf16.msra.mxu0 0
  %3047 = vmatprep.subr.bf16.mxu0 0
  %3048 = vmatpush2.bf16.msra.mxu0 0
  %3049 = vmatprep.subr.bf16.mxu0 0
  %3050 = vmatpush2.bf16.msra.mxu0 0
  %3051 = vmatprep.subr.bf16.mxu0 0
  %3052 = vmatpush2.bf16.msra.mxu0 0
  %3053 = vmatprep.subr.bf16.mxu0 0
  %3054 = vmatpush2.bf16.msra.mxu0 0
  %3055 = vmatprep.subr.bf16.mxu0 0
  %3056 = vmatpush2.bf16.msra.mxu0 0
  %3057 = vmatprep.mubr.bf16.mxu0 0
  %3058 = vmatmul.mubr.bf16.gmra.mxu0 %v3014
  %v3059 = vpop.f32.mrf.mxu0
  %v3060 = vadd.f32 0.0, %v3059
  %v3061 = vpop.f32.mrf.mxu0
  %v3062 = vpop.f32.mrf.mxu0
  %v3063 = vadd.f32 0.0, %v3062
  %v3064 = vpop.f32.mrf.mxu0
  %3065 = vmatprep.mubr.bf16.mxu0 0
  %3066 = vmatmul.mubr.bf16.gmra.mxu0 %v3017
  %v3067 = vpop.f32.mrf.mxu0
  %v3068 = vadd.f32 0.0, %v3067
  %v3069 = vpop.f32.mrf.mxu0
  %v3070 = vpop.f32.mrf.mxu0
  %v3071 = vadd.f32 0.0, %v3070
  %v3072 = vpop.f32.mrf.mxu0
  %3073 = vmatprep.mubr.bf16.mxu0 0
  %3074 = vmatmul.mubr.bf16.gmra.mxu0 %v3020
  %v3075 = vpop.f32.mrf.mxu0
  %v3076 = vadd.f32 0.0, %v3075
  %v3077 = vpop.f32.mrf.mxu0
  %v3078 = vpop.f32.mrf.mxu0
  %v3079 = vadd.f32 0.0, %v3078
  %v3080 = vpop.f32.mrf.mxu0
  %3081 = vmatprep.mubr.bf16.mxu0 0
  %3082 = vmatmul.mubr.bf16.gmra.mxu0 %v3023
  %v3083 = vpop.f32.mrf.mxu0
  %v3084 = vadd.f32 0.0, %v3083
  %v3085 = vpop.f32.mrf.mxu0
  %v3086 = vpop.f32.mrf.mxu0
  %v3087 = vadd.f32 0.0, %v3086
  %v3088 = vpop.f32.mrf.mxu0
  %3089 = vdwg.mxu0
  %v3090 = vmax.f32 %v2656, %v2983
  %v3091 = vmax.f32 %v2657, %v2986
  %v3092 = vmax.f32 %v2658, %v2991
  %v3093 = vmax.f32 %v2659, %v2994
  %v3094 = vmax.f32 %v2660, %v2999
  %v3095 = vmax.f32 %v2661, %v3002
  %v3096 = vmax.f32 %v2662, %v3007
  %v3097 = vmax.f32 %v2663, %v3010
  %v3098 = vmax.f32 %v2664, %v3060
  %v3099 = vmax.f32 %v2665, %v3063
  %v3100 = vmax.f32 %v2666, %v3068
  %v3101 = vmax.f32 %v2667, %v3071
  %v3102 = vmax.f32 %v2668, %v3076
  %v3103 = vmax.f32 %v2669, %v3079
  %v3104 = vmax.f32 %v2670, %v3084
  %v3105 = vmax.f32 %v2671, %v3087
  %s3106 = scalar_lea.vmem %s1, 28
  %v3107 = vld [vmem:[%s3106] sm:$0x3]
  %v3108 = vlaneseq
  %v3109 = vshrl.u32 %v3108, 7
  %v3110 = vsub.s32 0, %v3109
  %v3111 = vrot.slane %v3107, %v3110
  %3113 = vbcast.lane.b32.xlu0 %v3111, 256
  %v3114 = vpop.permute.xlu0 %3113
  %s3116 = sor.u32 256, 8
  %3117 = vbcast.lane.b32.xlu0 %v3111, %s3116
  %v3118 = vpop.permute.xlu0 %3117
  %s3120 = sor.u32 256, 16
  %3121 = vbcast.lane.b32.xlu0 %v3111, %s3120
  %v3122 = vpop.permute.xlu0 %3121
  %s3124 = sor.u32 256, 24
  %3125 = vbcast.lane.b32.xlu0 %v3111, %s3124
  %v3126 = vpop.permute.xlu0 %3125
  %s3128 = sor.u32 256, 32
  %3129 = vbcast.lane.b32.xlu0 %v3111, %s3128
  %v3130 = vpop.permute.xlu0 %3129
  %s3132 = sor.u32 256, 40
  %3133 = vbcast.lane.b32.xlu0 %v3111, %s3132
  %v3134 = vpop.permute.xlu0 %3133
  %s3136 = sor.u32 256, 48
  %3137 = vbcast.lane.b32.xlu0 %v3111, %s3136
  %v3138 = vpop.permute.xlu0 %3137
  %s3140 = sor.u32 256, 56
  %3141 = vbcast.lane.b32.xlu0 %v3111, %s3140
  %v3142 = vpop.permute.xlu0 %3141
  %v3143 = vlaneseq
  %v3144 = vshrl.u32 %v3143, 7
  %v3145 = vsub.s32 1, %v3144
  %v3146 = vrot.slane %v3107, %v3145
  %3148 = vbcast.lane.b32.xlu0 %v3146, 256
  %v3149 = vpop.permute.xlu0 %3148
  %s3151 = sor.u32 256, 8
  %3152 = vbcast.lane.b32.xlu0 %v3146, %s3151
  %v3153 = vpop.permute.xlu0 %3152
  %s3155 = sor.u32 256, 16
  %3156 = vbcast.lane.b32.xlu0 %v3146, %s3155
  %v3157 = vpop.permute.xlu0 %3156
  %s3159 = sor.u32 256, 24
  %3160 = vbcast.lane.b32.xlu0 %v3146, %s3159
  %v3161 = vpop.permute.xlu0 %3160
  %s3163 = sor.u32 256, 32
  %3164 = vbcast.lane.b32.xlu0 %v3146, %s3163
  %v3165 = vpop.permute.xlu0 %3164
  %s3167 = sor.u32 256, 40
  %3168 = vbcast.lane.b32.xlu0 %v3146, %s3167
  %v3169 = vpop.permute.xlu0 %3168
  %s3171 = sor.u32 256, 48
  %3172 = vbcast.lane.b32.xlu0 %v3146, %s3171
  %v3173 = vpop.permute.xlu0 %3172
  %s3175 = sor.u32 256, 56
  %3176 = vbcast.lane.b32.xlu0 %v3146, %s3175
  %v3177 = vpop.permute.xlu0 %3176
  %s3178 = scalar_lea.vmem %s1, 30
  %v3179 = vld [vmem:[%s3178] sm:$0x3]
  %v3180 = vlaneseq
  %v3181 = vshrl.u32 %v3180, 7
  %v3182 = vsub.s32 0, %v3181
  %v3183 = vrot.slane %v3179, %v3182
  %3185 = vbcast.lane.b32.xlu0 %v3183, 256
  %v3186 = vpop.permute.xlu0 %3185
  %s3188 = sor.u32 256, 8
  %3189 = vbcast.lane.b32.xlu0 %v3183, %s3188
  %v3190 = vpop.permute.xlu0 %3189
  %s3192 = sor.u32 256, 16
  %3193 = vbcast.lane.b32.xlu0 %v3183, %s3192
  %v3194 = vpop.permute.xlu0 %3193
  %s3196 = sor.u32 256, 24
  %3197 = vbcast.lane.b32.xlu0 %v3183, %s3196
  %v3198 = vpop.permute.xlu0 %3197
  %s3200 = sor.u32 256, 32
  %3201 = vbcast.lane.b32.xlu0 %v3183, %s3200
  %v3202 = vpop.permute.xlu0 %3201
  %s3204 = sor.u32 256, 40
  %3205 = vbcast.lane.b32.xlu0 %v3183, %s3204
  %v3206 = vpop.permute.xlu0 %3205
  %s3208 = sor.u32 256, 48
  %3209 = vbcast.lane.b32.xlu0 %v3183, %s3208
  %v3210 = vpop.permute.xlu0 %3209
  %s3212 = sor.u32 256, 56
  %3213 = vbcast.lane.b32.xlu0 %v3183, %s3212
  %v3214 = vpop.permute.xlu0 %3213
  %v3215 = vlaneseq
  %v3216 = vshrl.u32 %v3215, 7
  %v3217 = vsub.s32 1, %v3216
  %v3218 = vrot.slane %v3179, %v3217
  %3220 = vbcast.lane.b32.xlu0 %v3218, 256
  %v3221 = vpop.permute.xlu0 %3220
  %s3223 = sor.u32 256, 8
  %3224 = vbcast.lane.b32.xlu0 %v3218, %s3223
  %v3225 = vpop.permute.xlu0 %3224
  %s3227 = sor.u32 256, 16
  %3228 = vbcast.lane.b32.xlu0 %v3218, %s3227
  %v3229 = vpop.permute.xlu0 %3228
  %s3231 = sor.u32 256, 24
  %3232 = vbcast.lane.b32.xlu0 %v3218, %s3231
  %v3233 = vpop.permute.xlu0 %3232
  %s3235 = sor.u32 256, 32
  %3236 = vbcast.lane.b32.xlu0 %v3218, %s3235
  %v3237 = vpop.permute.xlu0 %3236
  %s3239 = sor.u32 256, 40
  %3240 = vbcast.lane.b32.xlu0 %v3218, %s3239
  %v3241 = vpop.permute.xlu0 %3240
  %s3243 = sor.u32 256, 48
  %3244 = vbcast.lane.b32.xlu0 %v3218, %s3243
  %v3245 = vpop.permute.xlu0 %3244
  %s3247 = sor.u32 256, 56
  %3248 = vbcast.lane.b32.xlu0 %v3218, %s3247
  %v3249 = vpop.permute.xlu0 %3248
  %vm3250 = vcmp.eq.s32.totalorder %v3114, %v35
  %vm3251 = vcmp.eq.s32.totalorder %v3118, %v35
  %vm3252 = vcmp.eq.s32.totalorder %v3122, %v35
  %vm3253 = vcmp.eq.s32.totalorder %v3126, %v35
  %vm3254 = vcmp.eq.s32.totalorder %v3130, %v35
  %vm3255 = vcmp.eq.s32.totalorder %v3134, %v35
  %vm3256 = vcmp.eq.s32.totalorder %v3138, %v35
  %vm3257 = vcmp.eq.s32.totalorder %v3142, %v35
  %vm3258 = vcmp.eq.s32.totalorder %v3149, %v35
  %vm3259 = vcmp.eq.s32.totalorder %v3153, %v35
  %vm3260 = vcmp.eq.s32.totalorder %v3157, %v35
  %vm3261 = vcmp.eq.s32.totalorder %v3161, %v35
  %vm3262 = vcmp.eq.s32.totalorder %v3165, %v35
  %vm3263 = vcmp.eq.s32.totalorder %v3169, %v35
  %vm3264 = vcmp.eq.s32.totalorder %v3173, %v35
  %vm3265 = vcmp.eq.s32.totalorder %v3177, %v35
  %v3266 = vsel %vm3250, 1, 0
  %v3267 = vsel %vm3251, 1, 0
  %v3268 = vsel %vm3252, 1, 0
  %v3269 = vsel %vm3253, 1, 0
  %v3270 = vsel %vm3254, 1, 0
  %v3271 = vsel %vm3255, 1, 0
  %v3272 = vsel %vm3256, 1, 0
  %v3273 = vsel %vm3257, 1, 0
  %v3274 = vsel %vm3258, 1, 0
  %v3275 = vsel %vm3259, 1, 0
  %v3276 = vsel %vm3260, 1, 0
  %v3277 = vsel %vm3261, 1, 0
  %v3278 = vsel %vm3262, 1, 0
  %v3279 = vsel %vm3263, 1, 0
  %v3280 = vsel %vm3264, 1, 0
  %v3281 = vsel %vm3265, 1, 0
  %v3282 = vcvt.s32.f32 %v3266
  %v3283 = vcvt.s32.f32 %v3267
  %v3284 = vcvt.s32.f32 %v3268
  %v3285 = vcvt.s32.f32 %v3269
  %v3286 = vcvt.s32.f32 %v3270
  %v3287 = vcvt.s32.f32 %v3271
  %v3288 = vcvt.s32.f32 %v3272
  %v3289 = vcvt.s32.f32 %v3273
  %v3290 = vcvt.s32.f32 %v3274
  %v3291 = vcvt.s32.f32 %v3275
  %v3292 = vcvt.s32.f32 %v3276
  %v3293 = vcvt.s32.f32 %v3277
  %v3294 = vcvt.s32.f32 %v3278
  %v3295 = vcvt.s32.f32 %v3279
  %v3296 = vcvt.s32.f32 %v3280
  %v3297 = vcvt.s32.f32 %v3281
  %vm3298 = vcmp.eq.s32.totalorder %v3186, %v35
  %vm3299 = vcmp.eq.s32.totalorder %v3190, %v35
  %vm3300 = vcmp.eq.s32.totalorder %v3194, %v35
  %vm3301 = vcmp.eq.s32.totalorder %v3198, %v35
  %vm3302 = vcmp.eq.s32.totalorder %v3202, %v35
  %vm3303 = vcmp.eq.s32.totalorder %v3206, %v35
  %vm3304 = vcmp.eq.s32.totalorder %v3210, %v35
  %vm3305 = vcmp.eq.s32.totalorder %v3214, %v35
  %vm3306 = vcmp.eq.s32.totalorder %v3221, %v35
  %vm3307 = vcmp.eq.s32.totalorder %v3225, %v35
  %vm3308 = vcmp.eq.s32.totalorder %v3229, %v35
  %vm3309 = vcmp.eq.s32.totalorder %v3233, %v35
  %vm3310 = vcmp.eq.s32.totalorder %v3237, %v35
  %vm3311 = vcmp.eq.s32.totalorder %v3241, %v35
  %vm3312 = vcmp.eq.s32.totalorder %v3245, %v35
  %vm3313 = vcmp.eq.s32.totalorder %v3249, %v35
  %v3314 = vsel %vm3298, 1, 0
  %v3315 = vsel %vm3299, 1, 0
  %v3316 = vsel %vm3300, 1, 0
  %v3317 = vsel %vm3301, 1, 0
  %v3318 = vsel %vm3302, 1, 0
  %v3319 = vsel %vm3303, 1, 0
  %v3320 = vsel %vm3304, 1, 0
  %v3321 = vsel %vm3305, 1, 0
  %v3322 = vsel %vm3306, 1, 0
  %v3323 = vsel %vm3307, 1, 0
  %v3324 = vsel %vm3308, 1, 0
  %v3325 = vsel %vm3309, 1, 0
  %v3326 = vsel %vm3310, 1, 0
  %v3327 = vsel %vm3311, 1, 0
  %v3328 = vsel %vm3312, 1, 0
  %v3329 = vsel %vm3313, 1, 0
  %v3330 = vcvt.s32.f32 %v3314
  %v3331 = vcvt.s32.f32 %v3315
  %v3332 = vcvt.s32.f32 %v3316
  %v3333 = vcvt.s32.f32 %v3317
  %v3334 = vcvt.s32.f32 %v3318
  %v3335 = vcvt.s32.f32 %v3319
  %v3336 = vcvt.s32.f32 %v3320
  %v3337 = vcvt.s32.f32 %v3321
  %v3338 = vcvt.s32.f32 %v3322
  %v3339 = vcvt.s32.f32 %v3323
  %v3340 = vcvt.s32.f32 %v3324
  %v3341 = vcvt.s32.f32 %v3325
  %v3342 = vcvt.s32.f32 %v3326
  %v3343 = vcvt.s32.f32 %v3327
  %v3344 = vcvt.s32.f32 %v3328
  %v3345 = vcvt.s32.f32 %v3329
  %v3346 = vsub.f32 %v3282, %v3330
  %v3347 = vsub.f32 %v3283, %v3331
  %v3348 = vsub.f32 %v3284, %v3332
  %v3349 = vsub.f32 %v3285, %v3333
  %v3350 = vsub.f32 %v3286, %v3334
  %v3351 = vsub.f32 %v3287, %v3335
  %v3352 = vsub.f32 %v3288, %v3336
  %v3353 = vsub.f32 %v3289, %v3337
  %v3354 = vsub.f32 %v3290, %v3338
  %v3355 = vsub.f32 %v3291, %v3339
  %v3356 = vsub.f32 %v3292, %v3340
  %v3357 = vsub.f32 %v3293, %v3341
  %v3358 = vsub.f32 %v3294, %v3342
  %v3359 = vsub.f32 %v3295, %v3343
  %v3360 = vsub.f32 %v3296, %v3344
  %v3361 = vsub.f32 %v3297, %v3345
  %v3362 = vpack.c.bf16 %v3347, %v3346
  %v3363 = vpack.c.bf16 %v3349, %v3348
  %v3364 = vpack.c.bf16 %v3351, %v3350
  %v3365 = vpack.c.bf16 %v3353, %v3352
  %v3366 = vpack.c.bf16 %v3355, %v3354
  %v3367 = vpack.c.bf16 %v3357, %v3356
  %v3368 = vpack.c.bf16 %v3359, %v3358
  %v3369 = vpack.c.bf16 %v3361, %v3360
  %v3371 = vsel %vm323, %v3362, 0
  %v3374 = vsel %vm323, %v3363, 0
  %v3377 = vsel %vm323, %v3364, 0
  %v3380 = vsel %vm323, %v3365, 0
  %3382 = vmatprep.subr.bf16.mxu0 0
  %3383 = vmatpush1.bf16.msra.mxu0 0
  %3384 = vmatprep.subr.bf16.mxu0 0
  %3385 = vmatpush1.bf16.msra.mxu0 0
  %3386 = vmatprep.subr.bf16.mxu0 0
  %3387 = vmatpush1.bf16.msra.mxu0 0
  %3388 = vmatprep.subr.bf16.mxu0 0
  %3389 = vmatpush1.bf16.msra.mxu0 0
  %3390 = vmatprep.subr.bf16.mxu0 0
  %3391 = vmatpush1.bf16.msra.mxu0 %v318
  %3392 = vmatprep.subr.bf16.mxu0 0
  %3393 = vmatpush1.bf16.msra.mxu0 %v317
  %3394 = vmatprep.subr.bf16.mxu0 0
  %3395 = vmatpush1.bf16.msra.mxu0 %v316
  %3396 = vmatprep.subr.bf16.mxu0 0
  %3397 = vmatpush1.bf16.msra.mxu0 %v315
  %3398 = vmatprep.subr.bf16.mxu0 0
  %3399 = vmatpush2.bf16.msra.mxu0 0
  %3400 = vmatprep.subr.bf16.mxu0 0
  %3401 = vmatpush2.bf16.msra.mxu0 0
  %3402 = vmatprep.subr.bf16.mxu0 0
  %3403 = vmatpush2.bf16.msra.mxu0 0
  %3404 = vmatprep.subr.bf16.mxu0 0
  %3405 = vmatpush2.bf16.msra.mxu0 0
  %3406 = vmatprep.subr.bf16.mxu0 0
  %3407 = vmatpush2.bf16.msra.mxu0 0
  %3408 = vmatprep.subr.bf16.mxu0 0
  %3409 = vmatpush2.bf16.msra.mxu0 0
  %3410 = vmatprep.subr.bf16.mxu0 0
  %3411 = vmatpush2.bf16.msra.mxu0 0
  %3412 = vmatprep.subr.bf16.mxu0 0
  %3413 = vmatpush2.bf16.msra.mxu0 0
  %3414 = vmatprep.mubr.bf16.mxu0 0
  %3415 = vmatmul.mubr.bf16.gmra.mxu0 %v3371
  %v3416 = vpop.f32.mrf.mxu0
  %v3417 = vadd.f32 0.0, %v3416
  %v3418 = vpop.f32.mrf.mxu0
  %v3419 = vpop.f32.mrf.mxu0
  %v3420 = vadd.f32 0.0, %v3419
  %v3421 = vpop.f32.mrf.mxu0
  %3422 = vmatprep.mubr.bf16.mxu0 0
  %3423 = vmatmul.mubr.bf16.gmra.mxu0 %v3374
  %v3424 = vpop.f32.mrf.mxu0
  %v3425 = vadd.f32 0.0, %v3424
  %v3426 = vpop.f32.mrf.mxu0
  %v3427 = vpop.f32.mrf.mxu0
  %v3428 = vadd.f32 0.0, %v3427
  %v3429 = vpop.f32.mrf.mxu0
  %3430 = vmatprep.mubr.bf16.mxu0 0
  %3431 = vmatmul.mubr.bf16.gmra.mxu0 %v3377
  %v3432 = vpop.f32.mrf.mxu0
  %v3433 = vadd.f32 0.0, %v3432
  %v3434 = vpop.f32.mrf.mxu0
  %v3435 = vpop.f32.mrf.mxu0
  %v3436 = vadd.f32 0.0, %v3435
  %v3437 = vpop.f32.mrf.mxu0
  %3438 = vmatprep.mubr.bf16.mxu0 0
  %3439 = vmatmul.mubr.bf16.gmra.mxu0 %v3380
  %v3440 = vpop.f32.mrf.mxu0
  %v3441 = vadd.f32 0.0, %v3440
  %v3442 = vpop.f32.mrf.mxu0
  %v3443 = vpop.f32.mrf.mxu0
  %v3444 = vadd.f32 0.0, %v3443
  %v3445 = vpop.f32.mrf.mxu0
  %3446 = vdwg.mxu0
  %v3448 = vsel %vm323, %v3366, 0
  %v3451 = vsel %vm323, %v3367, 0
  %v3454 = vsel %vm323, %v3368, 0
  %v3457 = vsel %vm323, %v3369, 0
  %3459 = vmatprep.subr.bf16.mxu0 0
  %3460 = vmatpush1.bf16.msra.mxu0 0
  %3461 = vmatprep.subr.bf16.mxu0 0
  %3462 = vmatpush1.bf16.msra.mxu0 0
  %3463 = vmatprep.subr.bf16.mxu0 0
  %3464 = vmatpush1.bf16.msra.mxu0 0
  %3465 = vmatprep.subr.bf16.mxu0 0
  %3466 = vmatpush1.bf16.msra.mxu0 0
  %3467 = vmatprep.subr.bf16.mxu0 0
  %3468 = vmatpush1.bf16.msra.mxu0 %v420
  %3469 = vmatprep.subr.bf16.mxu0 0
  %3470 = vmatpush1.bf16.msra.mxu0 %v419
  %3471 = vmatprep.subr.bf16.mxu0 0
  %3472 = vmatpush1.bf16.msra.mxu0 %v418
  %3473 = vmatprep.subr.bf16.mxu0 0
  %3474 = vmatpush1.bf16.msra.mxu0 %v417
  %3475 = vmatprep.subr.bf16.mxu0 0
  %3476 = vmatpush2.bf16.msra.mxu0 0
  %3477 = vmatprep.subr.bf16.mxu0 0
  %3478 = vmatpush2.bf16.msra.mxu0 0
  %3479 = vmatprep.subr.bf16.mxu0 0
  %3480 = vmatpush2.bf16.msra.mxu0 0
  %3481 = vmatprep.subr.bf16.mxu0 0
  %3482 = vmatpush2.bf16.msra.mxu0 0
  %3483 = vmatprep.subr.bf16.mxu0 0
  %3484 = vmatpush2.bf16.msra.mxu0 0
  %3485 = vmatprep.subr.bf16.mxu0 0
  %3486 = vmatpush2.bf16.msra.mxu0 0
  %3487 = vmatprep.subr.bf16.mxu0 0
  %3488 = vmatpush2.bf16.msra.mxu0 0
  %3489 = vmatprep.subr.bf16.mxu0 0
  %3490 = vmatpush2.bf16.msra.mxu0 0
  %3491 = vmatprep.mubr.bf16.mxu0 0
  %3492 = vmatmul.mubr.bf16.gmra.mxu0 %v3448
  %v3493 = vpop.f32.mrf.mxu0
  %v3494 = vadd.f32 0.0, %v3493
  %v3495 = vpop.f32.mrf.mxu0
  %v3496 = vpop.f32.mrf.mxu0
  %v3497 = vadd.f32 0.0, %v3496
  %v3498 = vpop.f32.mrf.mxu0
  %3499 = vmatprep.mubr.bf16.mxu0 0
  %3500 = vmatmul.mubr.bf16.gmra.mxu0 %v3451
  %v3501 = vpop.f32.mrf.mxu0
  %v3502 = vadd.f32 0.0, %v3501
  %v3503 = vpop.f32.mrf.mxu0
  %v3504 = vpop.f32.mrf.mxu0
  %v3505 = vadd.f32 0.0, %v3504
  %v3506 = vpop.f32.mrf.mxu0
  %3507 = vmatprep.mubr.bf16.mxu0 0
  %3508 = vmatmul.mubr.bf16.gmra.mxu0 %v3454
  %v3509 = vpop.f32.mrf.mxu0
  %v3510 = vadd.f32 0.0, %v3509
  %v3511 = vpop.f32.mrf.mxu0
  %v3512 = vpop.f32.mrf.mxu0
  %v3513 = vadd.f32 0.0, %v3512
  %v3514 = vpop.f32.mrf.mxu0
  %3515 = vmatprep.mubr.bf16.mxu0 0
  %3516 = vmatmul.mubr.bf16.gmra.mxu0 %v3457
  %v3517 = vpop.f32.mrf.mxu0
  %v3518 = vadd.f32 0.0, %v3517
  %v3519 = vpop.f32.mrf.mxu0
  %v3520 = vpop.f32.mrf.mxu0
  %v3521 = vadd.f32 0.0, %v3520
  %v3522 = vpop.f32.mrf.mxu0
  %3523 = vdwg.mxu0
  %v3524 = vmax.f32 %v3090, %v3417
  %v3525 = vmax.f32 %v3091, %v3420
  %v3526 = vmax.f32 %v3092, %v3425
  %v3527 = vmax.f32 %v3093, %v3428
  %v3528 = vmax.f32 %v3094, %v3433
  %v3529 = vmax.f32 %v3095, %v3436
  %v3530 = vmax.f32 %v3096, %v3441
  %v3531 = vmax.f32 %v3097, %v3444
  %v3532 = vmax.f32 %v3098, %v3494
  %v3533 = vmax.f32 %v3099, %v3497
  %v3534 = vmax.f32 %v3100, %v3502
  %v3535 = vmax.f32 %v3101, %v3505
  %v3536 = vmax.f32 %v3102, %v3510
  %v3537 = vmax.f32 %v3103, %v3513
  %v3538 = vmax.f32 %v3104, %v3518
  %v3539 = vmax.f32 %v3105, %v3521
  %v3540 = vpack.c.bf16 %v3525, %v3524
  %v3541 = vpack.c.bf16 %v3527, %v3526
  %v3542 = vpack.c.bf16 %v3529, %v3528
  %v3543 = vpack.c.bf16 %v3531, %v3530
  %v3544 = vpack.c.bf16 %v3533, %v3532
  %v3545 = vpack.c.bf16 %v3535, %v3534
  %v3546 = vpack.c.bf16 %v3537, %v3536
  %v3547 = vpack.c.bf16 %v3539, %v3538
  %3556 = vrot.lane.b32.xlu0 %v3540, 16
  %v3557 = vpop.permute.xlu0 %3556
  %3558 = vrot.lane.b32.xlu0 %v3541, 16
  %v3559 = vpop.permute.xlu0 %3558
  %3560 = vrot.lane.b32.xlu0 %v3542, 16
  %v3561 = vpop.permute.xlu0 %3560
  %3562 = vrot.lane.b32.xlu0 %v3543, 16
  %v3563 = vpop.permute.xlu0 %3562
  %3564 = vrot.lane.b32.xlu0 %v3544, 16
  %v3565 = vpop.permute.xlu0 %3564
  %3566 = vrot.lane.b32.xlu0 %v3545, 16
  %v3567 = vpop.permute.xlu0 %3566
  %3568 = vrot.lane.b32.xlu0 %v3546, 16
  %v3569 = vpop.permute.xlu0 %3568
  %3570 = vrot.lane.b32.xlu0 %v3547, 16
  %v3571 = vpop.permute.xlu0 %3570
  %vm3572 = vcmask 130048
  %v3575 = vsel %vm3572, %v315, %v3557
  %v3578 = vsel %vm3572, %v316, %v3559
  %v3581 = vsel %vm3572, %v317, %v3561
  %v3584 = vsel %vm3572, %v318, %v3563
  %v3587 = vsel %vm3572, %v417, %v3565
  %v3590 = vsel %vm3572, %v418, %v3567
  %v3593 = vsel %vm3572, %v419, %v3569
  %v3596 = vsel %vm3572, %v420, %v3571
  %v3597 = vld [vmem:[%s2] sm:$0xf]
  %v3598 = vld [vmem:[%s2 + $0x4] sm:$0xf]
  %v3599 = vld [vmem:[%s2 + $0x8] sm:$0xf]
  %v3600 = vld [vmem:[%s2 + $0xc] sm:$0xf]
  %v3601 = vld [vmem:[%s3] sm:$0x1]
  %v3603 = vlaneseq
  %v3604 = vshrl.u32 %v3603, 7
  %v3605 = vsub.s32 0, %v3604
  %v3606 = vrot.slane %v3601, %v3605
  %v3612 = vunpack.c.l.b16 %v3597
  %v3613 = vunpack.c.l.b16 %v3598
  %v3614 = vunpack.c.l.b16 %v3599
  %v3615 = vunpack.c.l.b16 %v3600
  %v3616 = vpack.c.b16 %v3613, %v3612
  %v3617 = vpack.c.b16 %v3615, %v3614
  %vm3620 = vcmask 261120
  %v3621 = vsel %vm3620, %v3575, 0
  %v3623 = vsel %vm3620, %v3578, 0
  %v3625 = vsel %vm3620, %v3581, 0
  %v3627 = vsel %vm3620, %v3584, 0
  %v3629 = vsel %vm3620, %v3587, 0
  %v3631 = vsel %vm3620, %v3590, 0
  %v3633 = vsel %vm3620, %v3593, 0
  %v3635 = vsel %vm3620, %v3596, 0
  %3637 = vmatprep.subr.bf16.mxu0 0
  %3638 = vmatpush1.bf16.msra.mxu0 0
  %3639 = vmatprep.subr.bf16.mxu0 0
  %3640 = vmatpush1.bf16.msra.mxu0 0
  %3641 = vmatprep.subr.bf16.mxu0 0
  %3642 = vmatpush1.bf16.msra.mxu0 0
  %3643 = vmatprep.subr.bf16.mxu0 0
  %3644 = vmatpush1.bf16.msra.mxu0 0
  %3645 = vmatprep.subr.bf16.mxu0 0
  %3646 = vmatpush1.bf16.msra.mxu0 0
  %3647 = vmatprep.subr.bf16.mxu0 0
  %3648 = vmatpush1.bf16.msra.mxu0 0
  %3649 = vmatprep.subr.bf16.mxu0 0
  %3650 = vmatpush1.bf16.msra.mxu0 %v3617
  %3651 = vmatprep.subr.bf16.mxu0 0
  %3652 = vmatpush1.bf16.msra.mxu0 %v3616
  %3653 = vmatprep.subr.bf16.mxu0 0
  %3654 = vmatpush2.bf16.msra.mxu0 0
  %3655 = vmatprep.subr.bf16.mxu0 0
  %3656 = vmatpush2.bf16.msra.mxu0 0
  %3657 = vmatprep.subr.bf16.mxu0 0
  %3658 = vmatpush2.bf16.msra.mxu0 0
  %3659 = vmatprep.subr.bf16.mxu0 0
  %3660 = vmatpush2.bf16.msra.mxu0 0
  %3661 = vmatprep.subr.bf16.mxu0 0
  %3662 = vmatpush2.bf16.msra.mxu0 0
  %3663 = vmatprep.subr.bf16.mxu0 0
  %3664 = vmatpush2.bf16.msra.mxu0 0
  %3665 = vmatprep.subr.bf16.mxu0 0
  %3666 = vmatpush2.bf16.msra.mxu0 0
  %3667 = vmatprep.subr.bf16.mxu0 0
  %3668 = vmatpush2.bf16.msra.mxu0 0
  %3669 = vmatprep.mubr.bf16.mxu0 0
  %3670 = vmatmul.mubr.bf16.gmra.mxu0 %v3621
  %v3671 = vpop.f32.mrf.mxu0
  %v3672 = vadd.f32 %v3606, %v3671
  %v3673 = vpop.f32.mrf.mxu0
  %v3674 = vpop.f32.mrf.mxu0
  %v3675 = vadd.f32 %v3606, %v3674
  %v3676 = vpop.f32.mrf.mxu0
  %3677 = vmatprep.mubr.bf16.mxu0 0
  %3678 = vmatmul.mubr.bf16.gmra.mxu0 %v3623
  %v3679 = vpop.f32.mrf.mxu0
  %v3680 = vadd.f32 %v3606, %v3679
  %v3681 = vpop.f32.mrf.mxu0
  %v3682 = vpop.f32.mrf.mxu0
  %v3683 = vadd.f32 %v3606, %v3682
  %v3684 = vpop.f32.mrf.mxu0
  %3685 = vmatprep.mubr.bf16.mxu0 0
  %3686 = vmatmul.mubr.bf16.gmra.mxu0 %v3625
  %v3687 = vpop.f32.mrf.mxu0
  %v3688 = vadd.f32 %v3606, %v3687
  %v3689 = vpop.f32.mrf.mxu0
  %v3690 = vpop.f32.mrf.mxu0
  %v3691 = vadd.f32 %v3606, %v3690
  %v3692 = vpop.f32.mrf.mxu0
  %3693 = vmatprep.mubr.bf16.mxu0 0
  %3694 = vmatmul.mubr.bf16.gmra.mxu0 %v3627
  %v3695 = vpop.f32.mrf.mxu0
  %v3696 = vadd.f32 %v3606, %v3695
  %v3697 = vpop.f32.mrf.mxu0
  %v3698 = vpop.f32.mrf.mxu0
  %v3699 = vadd.f32 %v3606, %v3698
  %v3700 = vpop.f32.mrf.mxu0
  %3701 = vmatprep.mubr.bf16.mxu0 0
  %3702 = vmatmul.mubr.bf16.gmra.mxu0 %v3629
  %v3703 = vpop.f32.mrf.mxu0
  %v3704 = vadd.f32 %v3606, %v3703
  %v3705 = vpop.f32.mrf.mxu0
  %v3706 = vpop.f32.mrf.mxu0
  %v3707 = vadd.f32 %v3606, %v3706
  %v3708 = vpop.f32.mrf.mxu0
  %3709 = vmatprep.mubr.bf16.mxu0 0
  %3710 = vmatmul.mubr.bf16.gmra.mxu0 %v3631
  %v3711 = vpop.f32.mrf.mxu0
  %v3712 = vadd.f32 %v3606, %v3711
  %v3713 = vpop.f32.mrf.mxu0
  %v3714 = vpop.f32.mrf.mxu0
  %v3715 = vadd.f32 %v3606, %v3714
  %v3716 = vpop.f32.mrf.mxu0
  %3717 = vmatprep.mubr.bf16.mxu0 0
  %3718 = vmatmul.mubr.bf16.gmra.mxu0 %v3633
  %v3719 = vpop.f32.mrf.mxu0
  %v3720 = vadd.f32 %v3606, %v3719
  %v3721 = vpop.f32.mrf.mxu0
  %v3722 = vpop.f32.mrf.mxu0
  %v3723 = vadd.f32 %v3606, %v3722
  %v3724 = vpop.f32.mrf.mxu0
  %3725 = vmatprep.mubr.bf16.mxu0 0
  %3726 = vmatmul.mubr.bf16.gmra.mxu0 %v3635
  %v3727 = vpop.f32.mrf.mxu0
  %v3728 = vadd.f32 %v3606, %v3727
  %v3729 = vpop.f32.mrf.mxu0
  %v3730 = vpop.f32.mrf.mxu0
  %v3731 = vadd.f32 %v3606, %v3730
  %v3732 = vpop.f32.mrf.mxu0
  %3733 = vdwg.mxu0
  %v3734 = vmax.f32 %v3672, 0.0
  %v3735 = vmax.f32 %v3675, 0.0
  %v3736 = vmax.f32 %v3680, 0.0
  %v3737 = vmax.f32 %v3683, 0.0
  %v3738 = vmax.f32 %v3688, 0.0
  %v3739 = vmax.f32 %v3691, 0.0
  %v3740 = vmax.f32 %v3696, 0.0
  %v3741 = vmax.f32 %v3699, 0.0
  %v3742 = vmax.f32 %v3704, 0.0
  %v3743 = vmax.f32 %v3707, 0.0
  %v3744 = vmax.f32 %v3712, 0.0
  %v3745 = vmax.f32 %v3715, 0.0
  %v3746 = vmax.f32 %v3720, 0.0
  %v3747 = vmax.f32 %v3723, 0.0
  %v3748 = vmax.f32 %v3728, 0.0
  %v3749 = vmax.f32 %v3731, 0.0
  %3750 = vst.msk [vmem:[%s4] sm:$0xff] %vm3620, %v3734
  %3751 = vst.msk [vmem:[%s4 + $0x8] sm:$0xff] %vm3620, %v3735
  %3752 = vst.msk [vmem:[%s4 + $0x10] sm:$0xff] %vm3620, %v3736
  %3753 = vst.msk [vmem:[%s4 + $0x18] sm:$0xff] %vm3620, %v3737
  %3754 = vst.msk [vmem:[%s4 + $0x20] sm:$0xff] %vm3620, %v3738
  %3755 = vst.msk [vmem:[%s4 + $0x28] sm:$0xff] %vm3620, %v3739
  %3756 = vst.msk [vmem:[%s4 + $0x30] sm:$0xff] %vm3620, %v3740
  %3757 = vst.msk [vmem:[%s4 + $0x38] sm:$0xff] %vm3620, %v3741
  %3758 = vst.msk [vmem:[%s4 + $0x40] sm:$0xff] %vm3620, %v3742
  %3759 = vst.msk [vmem:[%s4 + $0x48] sm:$0xff] %vm3620, %v3743
  %3760 = vst.msk [vmem:[%s4 + $0x50] sm:$0xff] %vm3620, %v3744
  %3761 = vst.msk [vmem:[%s4 + $0x58] sm:$0xff] %vm3620, %v3745
  %3762 = vst.msk [vmem:[%s4 + $0x60] sm:$0xff] %vm3620, %v3746
  %3763 = vst.msk [vmem:[%s4 + $0x68] sm:$0xff] %vm3620, %v3747
  %3764 = vst.msk [vmem:[%s4 + $0x70] sm:$0xff] %vm3620, %v3748
  %3765 = vst.msk [vmem:[%s4 + $0x78] sm:$0xff] %vm3620, %v3749
  // Predicated region
  $region18: #{mrconv2d_forward.1} parent=0 // pred_check
    _
  $region19: #{mrconv2d_forward.1} parent=0 // pred_check_branch
    %3767 = sbr.rel (0) target = $region21
  $region20: #{mrconv2d_forward.1} parent=0 // pred_region
    _
  $region21: #{mrconv2d_forward.1} parent=0 // pred_fallthru
    _
  // Predicated region
  $region22: #{mrconv2d_forward.1} parent=0 // pred_check
    _
  $region23: #{mrconv2d_forward.1} parent=0 // pred_check_branch
    %3769 = sbr.rel (0) target = $region25
  $region24: #{mrconv2d_forward.1} parent=0 // pred_region
    _
  $region25: #{mrconv2d_forward.1} parent=0 // pred_fallthru
    _

</llo_original>
